<compile_context>
chip_gen: v7x
topology: tpu7x:2x2x1
jax: 0.10.0
libtpu: 0.0.40
codegen_flags: <defaults>
</compile_context>

<pallas_src>
import functools

import jax
import jax.numpy as jnp
from jax.experimental import pallas as pl
from jax.experimental.pallas import tpu as pltpu


VMEM_LIMIT = 32 * 1024 * 1024   # explicit scoped-VMEM budget (default on v6e/v7x)
FC_PAD = 128                    # lane-dense fc output width (sliced to 7 outside)


# ----------------------------- shared GRU cell ----------------------------- #

def _gru_cell(gi, h, whh, bhh, m):
    """gi: (B,3H) precomputed input gates, h: (B,H) f32, m: (B,1) validity."""
    H = h.shape[-1]
    gh = jnp.dot(h.astype(whh.dtype), whh,
                 preferred_element_type=jnp.float32) + bhh
    gi = gi.astype(jnp.float32)
    r = jax.nn.sigmoid(gi[:, 0:H] + gh[:, 0:H])
    z = jax.nn.sigmoid(gi[:, H:2 * H] + gh[:, H:2 * H])
    n = jnp.tanh(gi[:, 2 * H:3 * H] + r * gh[:, 2 * H:3 * H])
    h_new = (1.0 - z) * n + z * h
    # packed-sequence semantics: state frozen on padded steps
    return m * h_new + (1.0 - m) * h


# ------------------ layer-0: embedding folded into the proj ---------------- #

def embed_proj_kernel(e_ref, w_ref, b_ref, o_ref):
    # emb: (V+1, E), w: (E, G), b: (1, G) -> table: (V+1, G)
    o_ref[...] = (jnp.dot(e_ref[...], w_ref[...],
                          preferred_element_type=jnp.float32)
                  + b_ref[...]).astype(o_ref.dtype)


def embed_proj(emb, w, b, *, out_dtype):
    V1, _ = emb.shape
    G = w.shape[1]
    return pl.pallas_call(
        embed_proj_kernel,
        out_shape=jax.ShapeDtypeStruct((V1, G), out_dtype),
        compiler_params=pltpu.CompilerParams(vmem_limit_bytes=VMEM_LIMIT),
    )(emb, w, b)


# ---------------- layer>0 input projection (row-tiled, fused) -------------- #

def proj_kernel(yf_ref, yb_ref, wt_ref, wb_ref, b_ref, o_ref):
    # o = y_f @ W_top + y_b @ W_bot + b   (== concat(y_f,y_b) @ W_ih, no concat)
    o_ref[...] = (jnp.dot(yf_ref[...], wt_ref[...],
                          preferred_element_type=jnp.float32)
                  + jnp.dot(yb_ref[...], wb_ref[...],
                            preferred_element_type=jnp.float32)
                  + b_ref[...]).astype(o_ref.dtype)


def input_proj(y_f2d, y_b2d, w_top, w_bot, b, *, out_dtype, row_tile=512):
    """y_f2d/y_b2d: (N,H); w_top/w_bot: (H,G); b: (1,G) -> (N,G)."""
    N, H = y_f2d.shape
    G = w_top.shape[1]
    rt = min(row_tile, N)                     # N is a multiple of 8 (B padded)
    grid = (pl.cdiv(N, rt),)
    return pl.pallas_call(
        proj_kernel,
        out_shape=jax.ShapeDtypeStruct((N, G), out_dtype),
        grid_spec=pltpu.PrefetchScalarGridSpec(
            num_scalar_prefetch=0,
            grid=grid,
            in_specs=[
                pl.BlockSpec((rt, H), lambda i: (i, 0)),
                pl.BlockSpec((rt, H), lambda i: (i, 0)),
                pl.BlockSpec((H, G), lambda i: (0, 0)),
                pl.BlockSpec((H, G), lambda i: (0, 0)),
                pl.BlockSpec((1, G), lambda i: (0, 0)),
            ],
            out_specs=pl.BlockSpec((rt, G), lambda i: (i, 0)),
        ),
        compiler_params=pltpu.CompilerParams(
            dimension_semantics=("parallel",),
            vmem_limit_bytes=VMEM_LIMIT),
    )(y_f2d, y_b2d, w_top, w_bot, b)


# ------------- fused bidirectional GRU scan (one program, 2 chains) -------- #

def bigru_scan_kernel(gi_ref, len_ref, whh_f_ref, whh_b_ref,
                      bhh_f_ref, bhh_b_ref, yf_ref, yb_ref):
    """gi: (T,B,6H) with fwd gates in [:,:3H], bwd gates in [:,3H:].
    Both direction chains advance in the same time step (latency hiding)."""
    T, B, _ = gi_ref.shape
    H = whh_f_ref.shape[0]
    G = 3 * H

    whh_f = whh_f_ref[...]
    whh_b = whh_b_ref[...]
    bhh_f = bhh_f_ref[...].astype(jnp.float32)
    bhh_b = bhh_b_ref[...].astype(jnp.float32)
    lens = len_ref[...]                              # (B,1) int32, resident

    def step(t, carry):
        h_f, h_b = carry
        tb = T - 1 - t                               # backward walks reversed time
        gi_f = gi_ref[t, :, 0:G]
        gi_b = gi_ref[tb, :, G:2 * G]
        m_f = (lens > t).astype(jnp.float32)
        m_b = (lens > tb).astype(jnp.float32)
        h_f = _gru_cell(gi_f, h_f, whh_f, bhh_f, m_f)
        h_b = _gru_cell(gi_b, h_b, whh_b, bhh_b, m_b)
        yf_ref[t] = h_f.astype(yf_ref.dtype)
        yb_ref[tb] = h_b.astype(yb_ref.dtype)
        return (h_f, h_b)

    h0 = jnp.zeros((B, H), jnp.float32)
    if T <= 64:
        # static Python loop -> every time index is a compile-time constant
        carry = (h0, h0)
        for t in range(T):
            carry = step(t, carry)
    else:
        # bounded unroll: keeps LLO visibility without vreg-pressure cliff
        jax.lax.fori_loop(0, T, step, (h0, h0), unroll=8)


def bigru_layer(gi, lengths_col, w_hh_f, w_hh_b, b_hh_f, b_hh_b,
                hidden_size, *, out_dtype):
    T, B, _ = gi.shape
    H = hidden_size
    return pl.pallas_call(
        bigru_scan_kernel,
        out_shape=(jax.ShapeDtypeStruct((T, B, H), out_dtype),
                   jax.ShapeDtypeStruct((T, B, H), out_dtype)),
        compiler_params=pltpu.CompilerParams(vmem_limit_bytes=VMEM_LIMIT),
    )(gi, lengths_col, w_hh_f, w_hh_b, b_hh_f, b_hh_b)


# ------------- top layer: backward-only scan fused with the FC ------------- #

def gru_bwd_fc_kernel(gi_ref, len_ref, whh_ref, bhh_ref, fcw_ref, fcb_ref, o_ref):
    T, B, _ = gi_ref.shape
    H = whh_ref.shape[0]

    whh = whh_ref[...]
    bhh = bhh_ref[...].astype(jnp.float32)
    lens = len_ref[...]

    def step(t, h):
        tt = T - 1 - t                               # backward direction
        gi = gi_ref[tt]
        m = (lens > tt).astype(jnp.float32)
        return _gru_cell(gi, h, whh, bhh, m)

    h = jnp.zeros((B, H), jnp.float32)
    if T <= 64:
        for t in range(T):
            h = step(t, h)
    else:
        h = jax.lax.fori_loop(0, T, step, h, unroll=8)

    # fc(hidden[-1]) fused: no HBM round trip for h, lane-dense (B,128) store
    o_ref[...] = (jnp.dot(h.astype(fcw_ref.dtype), fcw_ref[...],
                          preferred_element_type=jnp.float32)
                  + fcb_ref[...]).astype(o_ref.dtype)


def gru_bwd_fc(gi_b, lengths_col, w_hh_b, b_hh_b, fc_w, fc_b):
    B = gi_b.shape[1]
    O = fc_w.shape[1]
    return pl.pallas_call(
        gru_bwd_fc_kernel,
        out_shape=jax.ShapeDtypeStruct((B, O), jnp.float32),
        compiler_params=pltpu.CompilerParams(vmem_limit_bytes=VMEM_LIMIT),
    )(gi_b, lengths_col, w_hh_b, b_hh_b, fc_w, fc_b)


# ------------------------------- DAC forward ------------------------------- #

def dac_forward(params, tokens, lengths, *, hidden_size, n_layers,
                act_dtype=jnp.float32):
    """tokens: (B,T) int32; lengths: (B,) int32 sorted descending
    (pack_padded_sequence requirement). Returns (B,7) logits."""
    B0, T = tokens.shape
    H = hidden_size
    G = 3 * H

    # sublane-align the batch; padded rows get length 0 (state stays zero)
    B = -(-B0 // 8) * 8
    pad = B - B0
    tokens_p = jnp.pad(tokens, ((0, pad), (0, 0))) if pad else tokens
    lengths_p = jnp.pad(lengths, (0, pad)) if pad else lengths

    tokens_t = tokens_p.T                                 # input.t() -> (T,B)
    lengths_col = lengths_p.astype(jnp.int32)[:, None]    # (B,1), resident

    # ---- layer 0: embedding folded into the input projection ---------------
    p0 = params["gru"][0]
    if n_layers == 1:
        w0 = p0["w_ih_cat"][:, G:]        # top layer needs only bwd direction
        b0 = p0["b_ih_cat"][:, G:]
    else:
        w0 = p0["w_ih_cat"]
        b0 = p0["b_ih_cat"]
    table = embed_proj(params["embedding"].astype(act_dtype),
                       w0.astype(act_dtype), b0, out_dtype=act_dtype)
    gi = jnp.take(table, tokens_t, axis=0)                # gather (XLA glue)

    # ---- intermediate layers: fused fwd+bwd scan ----------------------------
    y_f = y_b = None
    for layer in range(n_layers - 1):
        p = params["gru"][layer]
        if layer > 0:
            gi = input_proj(y_f.reshape(T * B, H).astype(act_dtype),
                            y_b.reshape(T * B, H).astype(act_dtype),
                            p["w_ih_top"].astype(act_dtype),
                            p["w_ih_bot"].astype(act_dtype),
                            p["b_ih_cat"],
                            out_dtype=act_dtype).reshape(T, B, 2 * G)
        y_f, y_b = bigru_layer(gi, lengths_col,
                               p["w_hh_f"].astype(act_dtype),
                               p["w_hh_b"].astype(act_dtype),
                               p["b_hh_f"], p["b_hh_b"], H,
                               out_dtype=act_dtype)

    # ---- top layer: only the backward direction feeds fc --------------------
    p = params["gru"][n_layers - 1]
    if n_layers == 1:
        gi_b = gi                                         # already bwd-only (T,B,3H)
    else:
        gi_b = input_proj(y_f.reshape(T * B, H).astype(act_dtype),
                          y_b.reshape(T * B, H).astype(act_dtype),
                          p["w_ih_top"][:, G:].astype(act_dtype),
                          p["w_ih_bot"][:, G:].astype(act_dtype),
                          p["b_ih_cat"][:, G:],
                          out_dtype=act_dtype).reshape(T, B, G)

    n_out = params["fc_w"].shape[1]
    fc_w = jnp.pad(params["fc_w"], ((0, 0), (0, FC_PAD - n_out)))
    fc_b = jnp.pad(params["fc_b"], ((0, 0), (0, FC_PAD - n_out)))
    out = gru_bwd_fc(gi_b, lengths_col,
                     p["w_hh_b"].astype(act_dtype), p["b_hh_b"],
                     fc_w.astype(act_dtype), fc_b)        # (B, 128)
    return out[:B0, :n_out]


# ------------------------------ param init --------------------------------- #

def init_params(key, vocab_size, embedding_dim, hidden_size, n_layers):
    H = hidden_size
    G = 3 * H
    keys = jax.random.split(key, 3 + n_layers)
    emb = jax.random.normal(keys[0], (vocab_size + 1, embedding_dim), jnp.float32)

    k = 1.0 / float(H) ** 0.5

    def u(kk, shape):
        return jax.random.uniform(kk, shape, jnp.float32, -k, k)

    gru = []
    for layer in range(n_layers):
        lk = jax.random.split(keys[3 + layer], 8)
        if layer == 0:
            layer_p = dict(
                w_ih_cat=u(lk[0], (embedding_dim, 2 * G)),  # [fwd 3H | bwd 3H]
                b_ih_cat=u(lk[1], (1, 2 * G)),
            )
        else:
            layer_p = dict(
                w_ih_top=u(lk[0], (H, 2 * G)),   # multiplies prev-layer y_fwd
                w_ih_bot=u(lk[6], (H, 2 * G)),   # multiplies prev-layer y_bwd
                b_ih_cat=u(lk[1], (1, 2 * G)),
            )
        layer_p.update(
            w_hh_f=u(lk[2], (H, G)),
            w_hh_b=u(lk[3], (H, G)),
            b_hh_f=u(lk[4], (1, G)),
            b_hh_b=u(lk[5], (1, G)),
        )
        gru.append(layer_p)

    fc_w = u(keys[1], (H, 7))
    fc_b = u(keys[2], (1, 7))
    return dict(embedding=emb, gru=gru, fc_w=fc_w, fc_b=fc_b)


# --------------------------------- main ------------------------------------ #

if __name__ == "__main__":
    vocab_size = 20
    embedding_dim = 16
    hidden_size = 32
    n_layers = 2
    B, T = 4, 8

    root = jax.random.PRNGKey(0)
    k_params, k_tok = jax.random.split(root)

    params = init_params(k_params, vocab_size, embedding_dim, hidden_size, n_layers)

    # token ids in [0, vocab_size] (embedding table has vocab_size+1 rows)
    tokens = jax.random.randint(k_tok, (B, T), 0, vocab_size + 1, dtype=jnp.int32)
    # lengths sorted descending, as required by pack_padded_sequence
    lengths = jnp.array([8, 6, 5, 3], dtype=jnp.int32)

    forward = jax.jit(functools.partial(dac_forward,
                                        hidden_size=hidden_size,
                                        n_layers=n_layers))
    out = forward(params, tokens, lengths)
    out = jax.block_until_ready(out)
    assert out.shape == (B, 7)
    print("KERNEL_OK")
</pallas_src>

<mosaic_0001>
module attributes {stable_mosaic.version = 11 : i64} {
  func.func @embed_proj_kernel(%arg0: memref<21x16xf32, #tpu.memory_space<vmem>>, %arg1: memref<16x192xf32, #tpu.memory_space<vmem>>, %arg2: memref<1x192xf32, #tpu.memory_space<vmem>>, %arg3: memref<21x192xf32, #tpu.memory_space<vmem>>) attributes {dimension_semantics = [], scalar_prefetch = 0 : i64, scratch_operands = 0 : i64, tpu.core_type = #tpu.core_type<tc>} {
    %c0 = arith.constant 0 : index
    %c0_0 = arith.constant 0 : index
    %0 = vector.load %arg0[%c0, %c0_0] : memref<21x16xf32, #tpu.memory_space<vmem>>, vector<21x16xf32>
    %c0_1 = arith.constant 0 : index
    %c0_2 = arith.constant 0 : index
    %1 = vector.load %arg1[%c0_1, %c0_2] : memref<16x192xf32, #tpu.memory_space<vmem>>, vector<16x192xf32>
    %cst = arith.constant dense<0.000000e+00> : vector<21x192xf32>
    %2 = tpu.matmul %0, %1, %cst {dimension_numbers = #tpu.dot_dimension_numbers<[1], [0], [0], [1], [0, 0, 1, 1], [], []>} : vector<21x16xf32>, vector<16x192xf32>, vector<21x192xf32> -> vector<21x192xf32>
    %c0_3 = arith.constant 0 : index
    %c0_4 = arith.constant 0 : index
    %3 = vector.load %arg2[%c0_3, %c0_4] : memref<1x192xf32, #tpu.memory_space<vmem>>, vector<1x192xf32>
    %4 = vector.broadcast %3 : vector<1x192xf32> to vector<21x192xf32>
    %5 = arith.addf %2, %4 : vector<21x192xf32>
    %c0_5 = arith.constant 0 : index
    %c0_6 = arith.constant 0 : index
    %6 = vector.load %arg3[%c0_5, %c0_6] : memref<21x192xf32, #tpu.memory_space<vmem>>, vector<21x192xf32>
    tpu.vector_store %arg3[%c0_5, %c0_6], %5 {strides = array<i32>} : memref<21x192xf32, #tpu.memory_space<vmem>>, vector<21x192xf32>,
    return
  }
}

module attributes {stable_mosaic.version = 11 : i64} {
  func.func @proj_kernel(%arg0: i32, %arg1: memref<64x32xf32, #tpu.memory_space<vmem>>, %arg2: memref<64x32xf32, #tpu.memory_space<vmem>>, %arg3: memref<32x96xf32, #tpu.memory_space<vmem>>, %arg4: memref<32x96xf32, #tpu.memory_space<vmem>>, %arg5: memref<1x96xf32, #tpu.memory_space<vmem>>, %arg6: memref<64x96xf32, #tpu.memory_space<vmem>>) attributes {dimension_semantics = [#tpu.dimension_semantics<parallel>], iteration_bounds = array<i64: 1>, scalar_prefetch = 0 : i64, scratch_operands = 0 : i64, tpu.core_type = #tpu.core_type<tc>, window_params = [{transform_indices = @transform_0, window_bounds = array<i64: 64, 32>}, {transform_indices = @transform_1, window_bounds = array<i64: 64, 32>}, {pipeline_mode = #tpu.pipeline_mode<synchronous>, transform_indices = @transform_2, window_bounds = array<i64: 32, 96>}, {pipeline_mode = #tpu.pipeline_mode<synchronous>, transform_indices = @transform_3, window_bounds = array<i64: 32, 96>}, {pipeline_mode = #tpu.pipeline_mode<synchronous>, transform_indices = @transform_4, window_bounds = array<i64: 1, 96>}, {transform_indices = @transform_5, window_bounds = array<i64: 64, 96>}]} {
    %c0 = arith.constant 0 : index
    %c0_0 = arith.constant 0 : index
    %0 = vector.load %arg1[%c0, %c0_0] : memref<64x32xf32, #tpu.memory_space<vmem>>, vector<64x32xf32>
    %c0_1 = arith.constant 0 : index
    %c0_2 = arith.constant 0 : index
    %1 = vector.load %arg3[%c0_1, %c0_2] : memref<32x96xf32, #tpu.memory_space<vmem>>, vector<32x96xf32>
    %cst = arith.constant dense<0.000000e+00> : vector<64x96xf32>
    %2 = tpu.matmul %0, %1, %cst {dimension_numbers = #tpu.dot_dimension_numbers<[1], [0], [0], [1], [0, 0, 1, 1], [], []>} : vector<64x32xf32>, vector<32x96xf32>, vector<64x96xf32> -> vector<64x96xf32>
    %c0_3 = arith.constant 0 : index
    %c0_4 = arith.constant 0 : index
    %3 = vector.load %arg2[%c0_3, %c0_4] : memref<64x32xf32, #tpu.memory_space<vmem>>, vector<64x32xf32>
    %c0_5 = arith.constant 0 : index
    %c0_6 = arith.constant 0 : index
    %4 = vector.load %arg4[%c0_5, %c0_6] : memref<32x96xf32, #tpu.memory_space<vmem>>, vector<32x96xf32>
    %cst_7 = arith.constant dense<0.000000e+00> : vector<64x96xf32>
    %5 = tpu.matmul %3, %4, %cst_7 {dimension_numbers = #tpu.dot_dimension_numbers<[1], [0], [0], [1], [0, 0, 1, 1], [], []>} : vector<64x32xf32>, vector<32x96xf32>, vector<64x96xf32> -> vector<64x96xf32>
    %6 = arith.addf %2, %5 : vector<64x96xf32>
    %c0_8 = arith.constant 0 : index
    %c0_9 = arith.constant 0 : index
    %7 = vector.load %arg5[%c0_8, %c0_9] : memref<1x96xf32, #tpu.memory_space<vmem>>, vector<1x96xf32>
    %8 = vector.broadcast %7 : vector<1x96xf32> to vector<64x96xf32>
    %9 = arith.addf %6, %8 : vector<64x96xf32>
    %c0_10 = arith.constant 0 : index
    %c0_11 = arith.constant 0 : index
    %10 = vector.load %arg6[%c0_10, %c0_11] : memref<64x96xf32, #tpu.memory_space<vmem>>, vector<64x96xf32>
    tpu.vector_store %arg6[%c0_10, %c0_11], %9 {strides = array<i32>} : memref<64x96xf32, #tpu.memory_space<vmem>>, vector<64x96xf32>,
    return
  }
  func.func @transform_0(%arg0: i32) -> (i32, i32) {
    %c0_i32 = arith.constant 0 : i32
    %c0_i32_0 = arith.constant 0 : i32
    return %arg0, %c0_i32 : i32, i32
  }
  func.func @transform_1(%arg0: i32) -> (i32, i32) {
    %c0_i32 = arith.constant 0 : i32
    %c0_i32_0 = arith.constant 0 : i32
    return %arg0, %c0_i32 : i32, i32
  }
  func.func @transform_2(%arg0: i32) -> (i32, i32) {
    %c0_i32 = arith.constant 0 : i32
    %c0_i32_0 = arith.constant 0 : i32
    %c0_i32_1 = arith.constant 0 : i32
    return %c0_i32, %c0_i32_0 : i32, i32
  }
  func.func @transform_3(%arg0: i32) -> (i32, i32) {
    %c0_i32 = arith.constant 0 : i32
    %c0_i32_0 = arith.constant 0 : i32
    %c0_i32_1 = arith.constant 0 : i32
    return %c0_i32, %c0_i32_0 : i32, i32
  }
  func.func @transform_4(%arg0: i32) -> (i32, i32) {
    %c0_i32 = arith.constant 0 : i32
    %c0_i32_0 = arith.constant 0 : i32
    %c0_i32_1 = arith.constant 0 : i32
    return %c0_i32, %c0_i32_0 : i32, i32
  }
  func.func @transform_5(%arg0: i32) -> (i32, i32) {
    %c0_i32 = arith.constant 0 : i32
    %c0_i32_0 = arith.constant 0 : i32
    return %arg0, %c0_i32 : i32, i32
  }
}

module attributes {stable_mosaic.version = 11 : i64} {
  func.func @bigru_scan_kernel(%arg0: memref<8x8x192xf32, #tpu.memory_space<vmem>>, %arg1: memref<8x1xi32, #tpu.memory_space<vmem>>, %arg2: memref<32x96xf32, #tpu.memory_space<vmem>>, %arg3: memref<32x96xf32, #tpu.memory_space<vmem>>, %arg4: memref<1x96xf32, #tpu.memory_space<vmem>>, %arg5: memref<1x96xf32, #tpu.memory_space<vmem>>, %arg6: memref<8x8x32xf32, #tpu.memory_space<vmem>>, %arg7: memref<8x8x32xf32, #tpu.memory_space<vmem>>) attributes {dimension_semantics = [], scalar_prefetch = 0 : i64, scratch_operands = 0 : i64, tpu.core_type = #tpu.core_type<tc>} {
    %c0 = arith.constant 0 : index
    %c0_0 = arith.constant 0 : index
    %0 = vector.load %arg2[%c0, %c0_0] : memref<32x96xf32, #tpu.memory_space<vmem>>, vector<32x96xf32>
    %c0_1 = arith.constant 0 : index
    %c0_2 = arith.constant 0 : index
    %1 = vector.load %arg3[%c0_1, %c0_2] : memref<32x96xf32, #tpu.memory_space<vmem>>, vector<32x96xf32>
    %c0_3 = arith.constant 0 : index
    %c0_4 = arith.constant 0 : index
    %2 = vector.load %arg4[%c0_3, %c0_4] : memref<1x96xf32, #tpu.memory_space<vmem>>, vector<1x96xf32>
    %c0_5 = arith.constant 0 : index
    %c0_6 = arith.constant 0 : index
    %3 = vector.load %arg5[%c0_5, %c0_6] : memref<1x96xf32, #tpu.memory_space<vmem>>, vector<1x96xf32>
    %c0_7 = arith.constant 0 : index
    %c0_8 = arith.constant 0 : index
    %4 = vector.load %arg1[%c0_7, %c0_8] : memref<8x1xi32, #tpu.memory_space<vmem>>, vector<8x1xi32>
    %cst = arith.constant 0.000000e+00 : f32
    %5 = vector.broadcast %cst : f32 to vector<8x32xf32>
    %c0_9 = arith.constant 0 : index
    %c0_10 = arith.constant 0 : index
    %c0_11 = arith.constant 0 : index
    %6 = vector.load %arg0[%c0_9, %c0_10, %c0_11] : memref<8x8x192xf32, #tpu.memory_space<vmem>>, vector<1x8x96xf32>
    %7 = vector.shape_cast %6 : vector<1x8x96xf32> to vector<8x96xf32>
    %c7 = arith.constant 7 : index
    %c0_12 = arith.constant 0 : index
    %c96 = arith.constant 96 : index
    %8 = vector.load %arg0[%c7, %c0_12, %c96] : memref<8x8x192xf32, #tpu.memory_space<vmem>>, vector<1x8x96xf32>
    %9 = vector.shape_cast %8 : vector<1x8x96xf32> to vector<8x96xf32>
    %c0_i32 = arith.constant 0 : i32
    %10 = vector.broadcast %c0_i32 : i32 to vector<8x1xi32>
    %11 = arith.cmpi sgt, %4, %10 : vector<8x1xi32>
    %12 = arith.extui %11 : vector<8x1xi1> to vector<8x1xi32>
    %13 = arith.sitofp %12 : vector<8x1xi32> to vector<8x1xf32>
    %c7_i32 = arith.constant 7 : i32
    %14 = vector.broadcast %c7_i32 : i32 to vector<8x1xi32>
    %15 = arith.cmpi sgt, %4, %14 : vector<8x1xi32>
    %16 = arith.extui %15 : vector<8x1xi1> to vector<8x1xi32>
    %17 = arith.sitofp %16 : vector<8x1xi32> to vector<8x1xf32>
    %cst_13 = arith.constant dense<0.000000e+00> : vector<8x96xf32>
    %18 = tpu.matmul %5, %0, %cst_13 {dimension_numbers = #tpu.dot_dimension_numbers<[1], [0], [0], [1], [0, 0, 1, 1], [], []>} : vector<8x32xf32>, vector<32x96xf32>, vector<8x96xf32> -> vector<8x96xf32>
    %19 = vector.broadcast %2 : vector<1x96xf32> to vector<8x96xf32>
    %20 = arith.addf %18, %19 : vector<8x96xf32>
    %21 = vector.extract_strided_slice %7 {offsets = [0, 0], sizes = [8, 32], strides = [1, 1]} : vector<8x96xf32> to vector<8x32xf32>
    %22 = vector.extract_strided_slice %20 {offsets = [0, 0], sizes = [8, 32], strides = [1, 1]} : vector<8x96xf32> to vector<8x32xf32>
    %23 = arith.addf %21, %22 : vector<8x32xf32>
    %24 = arith.negf %23 : vector<8x32xf32>
    %25 = math.exp %24 : vector<8x32xf32>
    %cst_14 = arith.constant 1.000000e+00 : f32
    %26 = vector.broadcast %cst_14 : f32 to vector<8x32xf32>
    %27 = arith.addf %26, %25 : vector<8x32xf32>
    %28 = arith.divf %26, %27 : vector<8x32xf32>
    %29 = vector.extract_strided_slice %7 {offsets = [0, 32], sizes = [8, 32], strides = [1, 1]} : vector<8x96xf32> to vector<8x32xf32>
    %30 = vector.extract_strided_slice %20 {offsets = [0, 32], sizes = [8, 32], strides = [1, 1]} : vector<8x96xf32> to vector<8x32xf32>
    %31 = arith.addf %29, %30 : vector<8x32xf32>
    %32 = arith.negf %31 : vector<8x32xf32>
    %33 = math.exp %32 : vector<8x32xf32>
    %cst_15 = arith.constant 1.000000e+00 : f32
    %34 = vector.broadcast %cst_15 : f32 to vector<8x32xf32>
    %35 = arith.addf %34, %33 : vector<8x32xf32>
    %36 = arith.divf %34, %35 : vector<8x32xf32>
    %37 = vector.extract_strided_slice %7 {offsets = [0, 64], sizes = [8, 32], strides = [1, 1]} : vector<8x96xf32> to vector<8x32xf32>
    %38 = vector.extract_strided_slice %20 {offsets = [0, 64], sizes = [8, 32], strides = [1, 1]} : vector<8x96xf32> to vector<8x32xf32>
    %39 = arith.mulf %28, %38 : vector<8x32xf32>
    %40 = arith.addf %37, %39 : vector<8x32xf32>
    %41 = math.tanh %40 : vector<8x32xf32>
    %cst_16 = arith.constant 1.000000e+00 : f32
    %42 = vector.broadcast %cst_16 : f32 to vector<8x32xf32>
    %43 = arith.subf %42, %36 : vector<8x32xf32>
    %44 = arith.mulf %43, %41 : vector<8x32xf32>
    %45 = arith.mulf %36, %5 : vector<8x32xf32>
    %46 = arith.addf %44, %45 : vector<8x32xf32>
    %47 = vector.broadcast %13 : vector<8x1xf32> to vector<8x32xf32>
    %48 = arith.mulf %47, %46 : vector<8x32xf32>
    %cst_17 = arith.constant 1.000000e+00 : f32
    %49 = vector.broadcast %cst_17 : f32 to vector<8x1xf32>
    %50 = arith.subf %49, %13 : vector<8x1xf32>
    %51 = vector.broadcast %50 : vector<8x1xf32> to vector<8x32xf32>
    %52 = arith.mulf %51, %5 : vector<8x32xf32>
    %53 = arith.addf %48, %52 : vector<8x32xf32>
    %cst_18 = arith.constant dense<0.000000e+00> : vector<8x96xf32>
    %54 = tpu.matmul %5, %1, %cst_18 {dimension_numbers = #tpu.dot_dimension_numbers<[1], [0], [0], [1], [0, 0, 1, 1], [], []>} : vector<8x32xf32>, vector<32x96xf32>, vector<8x96xf32> -> vector<8x96xf32>
    %55 = vector.broadcast %3 : vector<1x96xf32> to vector<8x96xf32>
    %56 = arith.addf %54, %55 : vector<8x96xf32>
    %57 = vector.extract_strided_slice %9 {offsets = [0, 0], sizes = [8, 32], strides = [1, 1]} : vector<8x96xf32> to vector<8x32xf32>
    %58 = vector.extract_strided_slice %56 {offsets = [0, 0], sizes = [8, 32], strides = [1, 1]} : vector<8x96xf32> to vector<8x32xf32>
    %59 = arith.addf %57, %58 : vector<8x32xf32>
    %60 = arith.negf %59 : vector<8x32xf32>
    %61 = math.exp %60 : vector<8x32xf32>
    %cst_19 = arith.constant 1.000000e+00 : f32
    %62 = vector.broadcast %cst_19 : f32 to vector<8x32xf32>
    %63 = arith.addf %62, %61 : vector<8x32xf32>
    %64 = arith.divf %62, %63 : vector<8x32xf32>
    %65 = vector.extract_strided_slice %9 {offsets = [0, 32], sizes = [8, 32], strides = [1, 1]} : vector<8x96xf32> to vector<8x32xf32>
    %66 = vector.extract_strided_slice %56 {offsets = [0, 32], sizes = [8, 32], strides = [1, 1]} : vector<8x96xf32> to vector<8x32xf32>
    %67 = arith.addf %65, %66 : vector<8x32xf32>
    %68 = arith.negf %67 : vector<8x32xf32>
    %69 = math.exp %68 : vector<8x32xf32>
    %cst_20 = arith.constant 1.000000e+00 : f32
    %70 = vector.broadcast %cst_20 : f32 to vector<8x32xf32>
    %71 = arith.addf %70, %69 : vector<8x32xf32>
    %72 = arith.divf %70, %71 : vector<8x32xf32>
    %73 = vector.extract_strided_slice %9 {offsets = [0, 64], sizes = [8, 32], strides = [1, 1]} : vector<8x96xf32> to vector<8x32xf32>
    %74 = vector.extract_strided_slice %56 {offsets = [0, 64], sizes = [8, 32], strides = [1, 1]} : vector<8x96xf32> to vector<8x32xf32>
    %75 = arith.mulf %64, %74 : vector<8x32xf32>
    %76 = arith.addf %73, %75 : vector<8x32xf32>
    %77 = math.tanh %76 : vector<8x32xf32>
    %cst_21 = arith.constant 1.000000e+00 : f32
    %78 = vector.broadcast %cst_21 : f32 to vector<8x32xf32>
    %79 = arith.subf %78, %72 : vector<8x32xf32>
    %80 = arith.mulf %79, %77 : vector<8x32xf32>
    %81 = arith.mulf %72, %5 : vector<8x32xf32>
    %82 = arith.addf %80, %81 : vector<8x32xf32>
    %83 = vector.broadcast %17 : vector<8x1xf32> to vector<8x32xf32>
    %84 = arith.mulf %83, %82 : vector<8x32xf32>
    %cst_22 = arith.constant 1.000000e+00 : f32
    %85 = vector.broadcast %cst_22 : f32 to vector<8x1xf32>
    %86 = arith.subf %85, %17 : vector<8x1xf32>
    %87 = vector.broadcast %86 : vector<8x1xf32> to vector<8x32xf32>
    %88 = arith.mulf %87, %5 : vector<8x32xf32>
    %89 = arith.addf %84, %88 : vector<8x32xf32>
    %c0_23 = arith.constant 0 : index
    %c0_24 = arith.constant 0 : index
    %c0_25 = arith.constant 0 : index
    %90 = vector.load %arg6[%c0_23, %c0_24, %c0_25] : memref<8x8x32xf32, #tpu.memory_space<vmem>>, vector<1x8x32xf32>
    %91 = vector.shape_cast %90 : vector<1x8x32xf32> to vector<8x32xf32>
    %92 = vector.shape_cast %53 : vector<8x32xf32> to vector<1x8x32xf32>
    tpu.vector_store %arg6[%c0_23, %c0_24, %c0_25], %92 {strides = array<i32>} : memref<8x8x32xf32, #tpu.memory_space<vmem>>, vector<1x8x32xf32>,
    %c7_26 = arith.constant 7 : index
    %c0_27 = arith.constant 0 : index
    %c0_28 = arith.constant 0 : index
    %93 = vector.load %arg7[%c7_26, %c0_27, %c0_28] : memref<8x8x32xf32, #tpu.memory_space<vmem>>, vector<1x8x32xf32>
    %94 = vector.shape_cast %93 : vector<1x8x32xf32> to vector<8x32xf32>
    %95 = vector.shape_cast %89 : vector<8x32xf32> to vector<1x8x32xf32>
    tpu.vector_store %arg7[%c7_26, %c0_27, %c0_28], %95 {strides = array<i32>} : memref<8x8x32xf32, #tpu.memory_space<vmem>>, vector<1x8x32xf32>,
    %c1 = arith.constant 1 : index
    %c0_29 = arith.constant 0 : index
    %c0_30 = arith.constant 0 : index
    %96 = vector.load %arg0[%c1, %c0_29, %c0_30] : memref<8x8x192xf32, #tpu.memory_space<vmem>>, vector<1x8x96xf32>
    %97 = vector.shape_cast %96 : vector<1x8x96xf32> to vector<8x96xf32>
    %c6 = arith.constant 6 : index
    %c0_31 = arith.constant 0 : index
    %c96_32 = arith.constant 96 : index
    %98 = vector.load %arg0[%c6, %c0_31, %c96_32] : memref<8x8x192xf32, #tpu.memory_space<vmem>>, vector<1x8x96xf32>
    %99 = vector.shape_cast %98 : vector<1x8x96xf32> to vector<8x96xf32>
    %c1_i32 = arith.constant 1 : i32
    %100 = vector.broadcast %c1_i32 : i32 to vector<8x1xi32>
    %101 = arith.cmpi sgt, %4, %100 : vector<8x1xi32>
    %102 = arith.extui %101 : vector<8x1xi1> to vector<8x1xi32>
    %103 = arith.sitofp %102 : vector<8x1xi32> to vector<8x1xf32>
    %c6_i32 = arith.constant 6 : i32
    %104 = vector.broadcast %c6_i32 : i32 to vector<8x1xi32>
    %105 = arith.cmpi sgt, %4, %104 : vector<8x1xi32>
    %106 = arith.extui %105 : vector<8x1xi1> to vector<8x1xi32>
    %107 = arith.sitofp %106 : vector<8x1xi32> to vector<8x1xf32>
    %cst_33 = arith.constant dense<0.000000e+00> : vector<8x96xf32>
    %108 = tpu.matmul %53, %0, %cst_33 {dimension_numbers = #tpu.dot_dimension_numbers<[1], [0], [0], [1], [0, 0, 1, 1], [], []>} : vector<8x32xf32>, vector<32x96xf32>, vector<8x96xf32> -> vector<8x96xf32>
    %109 = vector.broadcast %2 : vector<1x96xf32> to vector<8x96xf32>
    %110 = arith.addf %108, %109 : vector<8x96xf32>
    %111 = vector.extract_strided_slice %97 {offsets = [0, 0], sizes = [8, 32], strides = [1, 1]} : vector<8x96xf32> to vector<8x32xf32>
    %112 = vector.extract_strided_slice %110 {offsets = [0, 0], sizes = [8, 32], strides = [1, 1]} : vector<8x96xf32> to vector<8x32xf32>
    %113 = arith.addf %111, %112 : vector<8x32xf32>
    %114 = arith.negf %113 : vector<8x32xf32>
    %115 = math.exp %114 : vector<8x32xf32>
    %cst_34 = arith.constant 1.000000e+00 : f32
    %116 = vector.broadcast %cst_34 : f32 to vector<8x32xf32>
    %117 = arith.addf %116, %115 : vector<8x32xf32>
    %118 = arith.divf %116, %117 : vector<8x32xf32>
    %119 = vector.extract_strided_slice %97 {offsets = [0, 32], sizes = [8, 32], strides = [1, 1]} : vector<8x96xf32> to vector<8x32xf32>
    %120 = vector.extract_strided_slice %110 {offsets = [0, 32], sizes = [8, 32], strides = [1, 1]} : vector<8x96xf32> to vector<8x32xf32>
    %121 = arith.addf %119, %120 : vector<8x32xf32>
    %122 = arith.negf %121 : vector<8x32xf32>
    %123 = math.exp %122 : vector<8x32xf32>
    %cst_35 = arith.constant 1.000000e+00 : f32
    %124 = vector.broadcast %cst_35 : f32 to vector<8x32xf32>
    %125 = arith.addf %124, %123 : vector<8x32xf32>
    %126 = arith.divf %124, %125 : vector<8x32xf32>
    %127 = vector.extract_strided_slice %97 {offsets = [0, 64], sizes = [8, 32], strides = [1, 1]} : vector<8x96xf32> to vector<8x32xf32>
    %128 = vector.extract_strided_slice %110 {offsets = [0, 64], sizes = [8, 32], strides = [1, 1]} : vector<8x96xf32> to vector<8x32xf32>
    %129 = arith.mulf %118, %128 : vector<8x32xf32>
    %130 = arith.addf %127, %129 : vector<8x32xf32>
    %131 = math.tanh %130 : vector<8x32xf32>
    %cst_36 = arith.constant 1.000000e+00 : f32
    %132 = vector.broadcast %cst_36 : f32 to vector<8x32xf32>
    %133 = arith.subf %132, %126 : vector<8x32xf32>
    %134 = arith.mulf %133, %131 : vector<8x32xf32>
    %135 = arith.mulf %126, %53 : vector<8x32xf32>
    %136 = arith.addf %134, %135 : vector<8x32xf32>
    %137 = vector.broadcast %103 : vector<8x1xf32> to vector<8x32xf32>
    %138 = arith.mulf %137, %136 : vector<8x32xf32>
    %cst_37 = arith.constant 1.000000e+00 : f32
    %139 = vector.broadcast %cst_37 : f32 to vector<8x1xf32>
    %140 = arith.subf %139, %103 : vector<8x1xf32>
    %141 = vector.broadcast %140 : vector<8x1xf32> to vector<8x32xf32>
    %142 = arith.mulf %141, %53 : vector<8x32xf32>
    %143 = arith.addf %138, %142 : vector<8x32xf32>
    %cst_38 = arith.constant dense<0.000000e+00> : vector<8x96xf32>
    %144 = tpu.matmul %89, %1, %cst_38 {dimension_numbers = #tpu.dot_dimension_numbers<[1], [0], [0], [1], [0, 0, 1, 1], [], []>} : vector<8x32xf32>, vector<32x96xf32>, vector<8x96xf32> -> vector<8x96xf32>
    %145 = vector.broadcast %3 : vector<1x96xf32> to vector<8x96xf32>
    %146 = arith.addf %144, %145 : vector<8x96xf32>
    %147 = vector.extract_strided_slice %99 {offsets = [0, 0], sizes = [8, 32], strides = [1, 1]} : vector<8x96xf32> to vector<8x32xf32>
    %148 = vector.extract_strided_slice %146 {offsets = [0, 0], sizes = [8, 32], strides = [1, 1]} : vector<8x96xf32> to vector<8x32xf32>
    %149 = arith.addf %147, %148 : vector<8x32xf32>
    %150 = arith.negf %149 : vector<8x32xf32>
    %151 = math.exp %150 : vector<8x32xf32>
    %cst_39 = arith.constant 1.000000e+00 : f32
    %152 = vector.broadcast %cst_39 : f32 to vector<8x32xf32>
    %153 = arith.addf %152, %151 : vector<8x32xf32>
    %154 = arith.divf %152, %153 : vector<8x32xf32>
    %155 = vector.extract_strided_slice %99 {offsets = [0, 32], sizes = [8, 32], strides = [1, 1]} : vector<8x96xf32> to vector<8x32xf32>
    %156 = vector.extract_strided_slice %146 {offsets = [0, 32], sizes = [8, 32], strides = [1, 1]} : vector<8x96xf32> to vector<8x32xf32>
    %157 = arith.addf %155, %156 : vector<8x32xf32>
    %158 = arith.negf %157 : vector<8x32xf32>
    %159 = math.exp %158 : vector<8x32xf32>
    %cst_40 = arith.constant 1.000000e+00 : f32
    %160 = vector.broadcast %cst_40 : f32 to vector<8x32xf32>
    %161 = arith.addf %160, %159 : vector<8x32xf32>
    %162 = arith.divf %160, %161 : vector<8x32xf32>
    %163 = vector.extract_strided_slice %99 {offsets = [0, 64], sizes = [8, 32], strides = [1, 1]} : vector<8x96xf32> to vector<8x32xf32>
    %164 = vector.extract_strided_slice %146 {offsets = [0, 64], sizes = [8, 32], strides = [1, 1]} : vector<8x96xf32> to vector<8x32xf32>
    %165 = arith.mulf %154, %164 : vector<8x32xf32>
    %166 = arith.addf %163, %165 : vector<8x32xf32>
    %167 = math.tanh %166 : vector<8x32xf32>
    %cst_41 = arith.constant 1.000000e+00 : f32
    %168 = vector.broadcast %cst_41 : f32 to vector<8x32xf32>
    %169 = arith.subf %168, %162 : vector<8x32xf32>
    %170 = arith.mulf %169, %167 : vector<8x32xf32>
    %171 = arith.mulf %162, %89 : vector<8x32xf32>
    %172 = arith.addf %170, %171 : vector<8x32xf32>
    %173 = vector.broadcast %107 : vector<8x1xf32> to vector<8x32xf32>
    %174 = arith.mulf %173, %172 : vector<8x32xf32>
    %cst_42 = arith.constant 1.000000e+00 : f32
    %175 = vector.broadcast %cst_42 : f32 to vector<8x1xf32>
    %176 = arith.subf %175, %107 : vector<8x1xf32>
    %177 = vector.broadcast %176 : vector<8x1xf32> to vector<8x32xf32>
    %178 = arith.mulf %177, %89 : vector<8x32xf32>
    %179 = arith.addf %174, %178 : vector<8x32xf32>
    %c1_43 = arith.constant 1 : index
    %c0_44 = arith.constant 0 : index
    %c0_45 = arith.constant 0 : index
    %180 = vector.load %arg6[%c1_43, %c0_44, %c0_45] : memref<8x8x32xf32, #tpu.memory_space<vmem>>, vector<1x8x32xf32>
    %181 = vector.shape_cast %180 : vector<1x8x32xf32> to vector<8x32xf32>
    %182 = vector.shape_cast %143 : vector<8x32xf32> to vector<1x8x32xf32>
    tpu.vector_store %arg6[%c1_43, %c0_44, %c0_45], %182 {strides = array<i32>} : memref<8x8x32xf32, #tpu.memory_space<vmem>>, vector<1x8x32xf32>,
    %c6_46 = arith.constant 6 : index
    %c0_47 = arith.constant 0 : index
    %c0_48 = arith.constant 0 : index
    %183 = vector.load %arg7[%c6_46, %c0_47, %c0_48] : memref<8x8x32xf32, #tpu.memory_space<vmem>>, vector<1x8x32xf32>
    %184 = vector.shape_cast %183 : vector<1x8x32xf32> to vector<8x32xf32>
    %185 = vector.shape_cast %179 : vector<8x32xf32> to vector<1x8x32xf32>
    tpu.vector_store %arg7[%c6_46, %c0_47, %c0_48], %185 {strides = array<i32>} : memref<8x8x32xf32, #tpu.memory_space<vmem>>, vector<1x8x32xf32>,
    %c2 = arith.constant 2 : index
    %c0_49 = arith.constant 0 : index
    %c0_50 = arith.constant 0 : index
    %186 = vector.load %arg0[%c2, %c0_49, %c0_50] : memref<8x8x192xf32, #tpu.memory_space<vmem>>, vector<1x8x96xf32>
    %187 = vector.shape_cast %186 : vector<1x8x96xf32> to vector<8x96xf32>
    %c5 = arith.constant 5 : index
    %c0_51 = arith.constant 0 : index
    %c96_52 = arith.constant 96 : index
    %188 = vector.load %arg0[%c5, %c0_51, %c96_52] : memref<8x8x192xf32, #tpu.memory_space<vmem>>, vector<1x8x96xf32>
    %189 = vector.shape_cast %188 : vector<1x8x96xf32> to vector<8x96xf32>
    %c2_i32 = arith.constant 2 : i32
    %190 = vector.broadcast %c2_i32 : i32 to vector<8x1xi32>
    %191 = arith.cmpi sgt, %4, %190 : vector<8x1xi32>
    %192 = arith.extui %191 : vector<8x1xi1> to vector<8x1xi32>
    %193 = arith.sitofp %192 : vector<8x1xi32> to vector<8x1xf32>
    %c5_i32 = arith.constant 5 : i32
    %194 = vector.broadcast %c5_i32 : i32 to vector<8x1xi32>
    %195 = arith.cmpi sgt, %4, %194 : vector<8x1xi32>
    %196 = arith.extui %195 : vector<8x1xi1> to vector<8x1xi32>
    %197 = arith.sitofp %196 : vector<8x1xi32> to vector<8x1xf32>
    %cst_53 = arith.constant dense<0.000000e+00> : vector<8x96xf32>
    %198 = tpu.matmul %143, %0, %cst_53 {dimension_numbers = #tpu.dot_dimension_numbers<[1], [0], [0], [1], [0, 0, 1, 1], [], []>} : vector<8x32xf32>, vector<32x96xf32>, vector<8x96xf32> -> vector<8x96xf32>
    %199 = vector.broadcast %2 : vector<1x96xf32> to vector<8x96xf32>
    %200 = arith.addf %198, %199 : vector<8x96xf32>
    %201 = vector.extract_strided_slice %187 {offsets = [0, 0], sizes = [8, 32], strides = [1, 1]} : vector<8x96xf32> to vector<8x32xf32>
    %202 = vector.extract_strided_slice %200 {offsets = [0, 0], sizes = [8, 32], strides = [1, 1]} : vector<8x96xf32> to vector<8x32xf32>
    %203 = arith.addf %201, %202 : vector<8x32xf32>
    %204 = arith.negf %203 : vector<8x32xf32>
    %205 = math.exp %204 : vector<8x32xf32>
    %cst_54 = arith.constant 1.000000e+00 : f32
    %206 = vector.broadcast %cst_54 : f32 to vector<8x32xf32>
    %207 = arith.addf %206, %205 : vector<8x32xf32>
    %208 = arith.divf %206, %207 : vector<8x32xf32>
    %209 = vector.extract_strided_slice %187 {offsets = [0, 32], sizes = [8, 32], strides = [1, 1]} : vector<8x96xf32> to vector<8x32xf32>
    %210 = vector.extract_strided_slice %200 {offsets = [0, 32], sizes = [8, 32], strides = [1, 1]} : vector<8x96xf32> to vector<8x32xf32>
    %211 = arith.addf %209, %210 : vector<8x32xf32>
    %212 = arith.negf %211 : vector<8x32xf32>
    %213 = math.exp %212 : vector<8x32xf32>
    %cst_55 = arith.constant 1.000000e+00 : f32
    %214 = vector.broadcast %cst_55 : f32 to vector<8x32xf32>
    %215 = arith.addf %214, %213 : vector<8x32xf32>
    %216 = arith.divf %214, %215 : vector<8x32xf32>
    %217 = vector.extract_strided_slice %187 {offsets = [0, 64], sizes = [8, 32], strides = [1, 1]} : vector<8x96xf32> to vector<8x32xf32>
    %218 = vector.extract_strided_slice %200 {offsets = [0, 64], sizes = [8, 32], strides = [1, 1]} : vector<8x96xf32> to vector<8x32xf32>
    %219 = arith.mulf %208, %218 : vector<8x32xf32>
    %220 = arith.addf %217, %219 : vector<8x32xf32>
    %221 = math.tanh %220 : vector<8x32xf32>
    %cst_56 = arith.constant 1.000000e+00 : f32
    %222 = vector.broadcast %cst_56 : f32 to vector<8x32xf32>
    %223 = arith.subf %222, %216 : vector<8x32xf32>
    %224 = arith.mulf %223, %221 : vector<8x32xf32>
    %225 = arith.mulf %216, %143 : vector<8x32xf32>
    %226 = arith.addf %224, %225 : vector<8x32xf32>
    %227 = vector.broadcast %193 : vector<8x1xf32> to vector<8x32xf32>
    %228 = arith.mulf %227, %226 : vector<8x32xf32>
    %cst_57 = arith.constant 1.000000e+00 : f32
    %229 = vector.broadcast %cst_57 : f32 to vector<8x1xf32>
    %230 = arith.subf %229, %193 : vector<8x1xf32>
    %231 = vector.broadcast %230 : vector<8x1xf32> to vector<8x32xf32>
    %232 = arith.mulf %231, %143 : vector<8x32xf32>
    %233 = arith.addf %228, %232 : vector<8x32xf32>
    %cst_58 = arith.constant dense<0.000000e+00> : vector<8x96xf32>
    %234 = tpu.matmul %179, %1, %cst_58 {dimension_numbers = #tpu.dot_dimension_numbers<[1], [0], [0], [1], [0, 0, 1, 1], [], []>} : vector<8x32xf32>, vector<32x96xf32>, vector<8x96xf32> -> vector<8x96xf32>
    %235 = vector.broadcast %3 : vector<1x96xf32> to vector<8x96xf32>
    %236 = arith.addf %234, %235 : vector<8x96xf32>
    %237 = vector.extract_strided_slice %189 {offsets = [0, 0], sizes = [8, 32], strides = [1, 1]} : vector<8x96xf32> to vector<8x32xf32>
    %238 = vector.extract_strided_slice %236 {offsets = [0, 0], sizes = [8, 32], strides = [1, 1]} : vector<8x96xf32> to vector<8x32xf32>
    %239 = arith.addf %237, %238 : vector<8x32xf32>
    %240 = arith.negf %239 : vector<8x32xf32>
    %241 = math.exp %240 : vector<8x32xf32>
    %cst_59 = arith.constant 1.000000e+00 : f32
    %242 = vector.broadcast %cst_59 : f32 to vector<8x32xf32>
    %243 = arith.addf %242, %241 : vector<8x32xf32>
    %244 = arith.divf %242, %243 : vector<8x32xf32>
    %245 = vector.extract_strided_slice %189 {offsets = [0, 32], sizes = [8, 32], strides = [1, 1]} : vector<8x96xf32> to vector<8x32xf32>
    %246 = vector.extract_strided_slice %236 {offsets = [0, 32], sizes = [8, 32], strides = [1, 1]} : vector<8x96xf32> to vector<8x32xf32>
    %247 = arith.addf %245, %246 : vector<8x32xf32>
    %248 = arith.negf %247 : vector<8x32xf32>
    %249 = math.exp %248 : vector<8x32xf32>
    %cst_60 = arith.constant 1.000000e+00 : f32
    %250 = vector.broadcast %cst_60 : f32 to vector<8x32xf32>
    %251 = arith.addf %250, %249 : vector<8x32xf32>
    %252 = arith.divf %250, %251 : vector<8x32xf32>
    %253 = vector.extract_strided_slice %189 {offsets = [0, 64], sizes = [8, 32], strides = [1, 1]} : vector<8x96xf32> to vector<8x32xf32>
    %254 = vector.extract_strided_slice %236 {offsets = [0, 64], sizes = [8, 32], strides = [1, 1]} : vector<8x96xf32> to vector<8x32xf32>
    %255 = arith.mulf %244, %254 : vector<8x32xf32>
    %256 = arith.addf %253, %255 : vector<8x32xf32>
    %257 = math.tanh %256 : vector<8x32xf32>
    %cst_61 = arith.constant 1.000000e+00 : f32
    %258 = vector.broadcast %cst_61 : f32 to vector<8x32xf32>
    %259 = arith.subf %258, %252 : vector<8x32xf32>
    %260 = arith.mulf %259, %257 : vector<8x32xf32>
    %261 = arith.mulf %252, %179 : vector<8x32xf32>
    %262 = arith.addf %260, %261 : vector<8x32xf32>
    %263 = vector.broadcast %197 : vector<8x1xf32> to vector<8x32xf32>
    %264 = arith.mulf %263, %262 : vector<8x32xf32>
    %cst_62 = arith.constant 1.000000e+00 : f32
    %265 = vector.broadcast %cst_62 : f32 to vector<8x1xf32>
    %266 = arith.subf %265, %197 : vector<8x1xf32>
    %267 = vector.broadcast %266 : vector<8x1xf32> to vector<8x32xf32>
    %268 = arith.mulf %267, %179 : vector<8x32xf32>
    %269 = arith.addf %264, %268 : vector<8x32xf32>
    %c2_63 = arith.constant 2 : index
    %c0_64 = arith.constant 0 : index
    %c0_65 = arith.constant 0 : index
    %270 = vector.load %arg6[%c2_63, %c0_64, %c0_65] : memref<8x8x32xf32, #tpu.memory_space<vmem>>, vector<1x8x32xf32>
    %271 = vector.shape_cast %270 : vector<1x8x32xf32> to vector<8x32xf32>
    %272 = vector.shape_cast %233 : vector<8x32xf32> to vector<1x8x32xf32>
    tpu.vector_store %arg6[%c2_63, %c0_64, %c0_65], %272 {strides = array<i32>} : memref<8x8x32xf32, #tpu.memory_space<vmem>>, vector<1x8x32xf32>,
    %c5_66 = arith.constant 5 : index
    %c0_67 = arith.constant 0 : index
    %c0_68 = arith.constant 0 : index
    %273 = vector.load %arg7[%c5_66, %c0_67, %c0_68] : memref<8x8x32xf32, #tpu.memory_space<vmem>>, vector<1x8x32xf32>
    %274 = vector.shape_cast %273 : vector<1x8x32xf32> to vector<8x32xf32>
    %275 = vector.shape_cast %269 : vector<8x32xf32> to vector<1x8x32xf32>
    tpu.vector_store %arg7[%c5_66, %c0_67, %c0_68], %275 {strides = array<i32>} : memref<8x8x32xf32, #tpu.memory_space<vmem>>, vector<1x8x32xf32>,
    %c3 = arith.constant 3 : index
    %c0_69 = arith.constant 0 : index
    %c0_70 = arith.constant 0 : index
    %276 = vector.load %arg0[%c3, %c0_69, %c0_70] : memref<8x8x192xf32, #tpu.memory_space<vmem>>, vector<1x8x96xf32>
    %277 = vector.shape_cast %276 : vector<1x8x96xf32> to vector<8x96xf32>
    %c4 = arith.constant 4 : index
    %c0_71 = arith.constant 0 : index
    %c96_72 = arith.constant 96 : index
    %278 = vector.load %arg0[%c4, %c0_71, %c96_72] : memref<8x8x192xf32, #tpu.memory_space<vmem>>, vector<1x8x96xf32>
    %279 = vector.shape_cast %278 : vector<1x8x96xf32> to vector<8x96xf32>
    %c3_i32 = arith.constant 3 : i32
    %280 = vector.broadcast %c3_i32 : i32 to vector<8x1xi32>
    %281 = arith.cmpi sgt, %4, %280 : vector<8x1xi32>
    %282 = arith.extui %281 : vector<8x1xi1> to vector<8x1xi32>
    %283 = arith.sitofp %282 : vector<8x1xi32> to vector<8x1xf32>
    %c4_i32 = arith.constant 4 : i32
    %284 = vector.broadcast %c4_i32 : i32 to vector<8x1xi32>
    %285 = arith.cmpi sgt, %4, %284 : vector<8x1xi32>
    %286 = arith.extui %285 : vector<8x1xi1> to vector<8x1xi32>
    %287 = arith.sitofp %286 : vector<8x1xi32> to vector<8x1xf32>
    %cst_73 = arith.constant dense<0.000000e+00> : vector<8x96xf32>
    %288 = tpu.matmul %233, %0, %cst_73 {dimension_numbers = #tpu.dot_dimension_numbers<[1], [0], [0], [1], [0, 0, 1, 1], [], []>} : vector<8x32xf32>, vector<32x96xf32>, vector<8x96xf32> -> vector<8x96xf32>
    %289 = vector.broadcast %2 : vector<1x96xf32> to vector<8x96xf32>
    %290 = arith.addf %288, %289 : vector<8x96xf32>
    %291 = vector.extract_strided_slice %277 {offsets = [0, 0], sizes = [8, 32], strides = [1, 1]} : vector<8x96xf32> to vector<8x32xf32>
    %292 = vector.extract_strided_slice %290 {offsets = [0, 0], sizes = [8, 32], strides = [1, 1]} : vector<8x96xf32> to vector<8x32xf32>
    %293 = arith.addf %291, %292 : vector<8x32xf32>
    %294 = arith.negf %293 : vector<8x32xf32>
    %295 = math.exp %294 : vector<8x32xf32>
    %cst_74 = arith.constant 1.000000e+00 : f32
    %296 = vector.broadcast %cst_74 : f32 to vector<8x32xf32>
    %297 = arith.addf %296, %295 : vector<8x32xf32>
    %298 = arith.divf %296, %297 : vector<8x32xf32>
    %299 = vector.extract_strided_slice %277 {offsets = [0, 32], sizes = [8, 32], strides = [1, 1]} : vector<8x96xf32> to vector<8x32xf32>
    %300 = vector.extract_strided_slice %290 {offsets = [0, 32], sizes = [8, 32], strides = [1, 1]} : vector<8x96xf32> to vector<8x32xf32>
    %301 = arith.addf %299, %300 : vector<8x32xf32>
    %302 = arith.negf %301 : vector<8x32xf32>
    %303 = math.exp %302 : vector<8x32xf32>
    %cst_75 = arith.constant 1.000000e+00 : f32
    %304 = vector.broadcast %cst_75 : f32 to vector<8x32xf32>
    %305 = arith.addf %304, %303 : vector<8x32xf32>
    %306 = arith.divf %304, %305 : vector<8x32xf32>
    %307 = vector.extract_strided_slice %277 {offsets = [0, 64], sizes = [8, 32], strides = [1, 1]} : vector<8x96xf32> to vector<8x32xf32>
    %308 = vector.extract_strided_slice %290 {offsets = [0, 64], sizes = [8, 32], strides = [1, 1]} : vector<8x96xf32> to vector<8x32xf32>
    %309 = arith.mulf %298, %308 : vector<8x32xf32>
    %310 = arith.addf %307, %309 : vector<8x32xf32>
    %311 = math.tanh %310 : vector<8x32xf32>
    %cst_76 = arith.constant 1.000000e+00 : f32
    %312 = vector.broadcast %cst_76 : f32 to vector<8x32xf32>
    %313 = arith.subf %312, %306 : vector<8x32xf32>
    %314 = arith.mulf %313, %311 : vector<8x32xf32>
    %315 = arith.mulf %306, %233 : vector<8x32xf32>
    %316 = arith.addf %314, %315 : vector<8x32xf32>
    %317 = vector.broadcast %283 : vector<8x1xf32> to vector<8x32xf32>
    %318 = arith.mulf %317, %316 : vector<8x32xf32>
    %cst_77 = arith.constant 1.000000e+00 : f32
    %319 = vector.broadcast %cst_77 : f32 to vector<8x1xf32>
    %320 = arith.subf %319, %283 : vector<8x1xf32>
    %321 = vector.broadcast %320 : vector<8x1xf32> to vector<8x32xf32>
    %322 = arith.mulf %321, %233 : vector<8x32xf32>
    %323 = arith.addf %318, %322 : vector<8x32xf32>
    %cst_78 = arith.constant dense<0.000000e+00> : vector<8x96xf32>
    %324 = tpu.matmul %269, %1, %cst_78 {dimension_numbers = #tpu.dot_dimension_numbers<[1], [0], [0], [1], [0, 0, 1, 1], [], []>} : vector<8x32xf32>, vector<32x96xf32>, vector<8x96xf32> -> vector<8x96xf32>
    %325 = vector.broadcast %3 : vector<1x96xf32> to vector<8x96xf32>
    %326 = arith.addf %324, %325 : vector<8x96xf32>
    %327 = vector.extract_strided_slice %279 {offsets = [0, 0], sizes = [8, 32], strides = [1, 1]} : vector<8x96xf32> to vector<8x32xf32>
    %328 = vector.extract_strided_slice %326 {offsets = [0, 0], sizes = [8, 32], strides = [1, 1]} : vector<8x96xf32> to vector<8x32xf32>
    %329 = arith.addf %327, %328 : vector<8x32xf32>
    %330 = arith.negf %329 : vector<8x32xf32>
    %331 = math.exp %330 : vector<8x32xf32>
    %cst_79 = arith.constant 1.000000e+00 : f32
    %332 = vector.broadcast %cst_79 : f32 to vector<8x32xf32>
    %333 = arith.addf %332, %331 : vector<8x32xf32>
    %334 = arith.divf %332, %333 : vector<8x32xf32>
    %335 = vector.extract_strided_slice %279 {offsets = [0, 32], sizes = [8, 32], strides = [1, 1]} : vector<8x96xf32> to vector<8x32xf32>
    %336 = vector.extract_strided_slice %326 {offsets = [0, 32], sizes = [8, 32], strides = [1, 1]} : vector<8x96xf32> to vector<8x32xf32>
    %337 = arith.addf %335, %336 : vector<8x32xf32>
    %338 = arith.negf %337 : vector<8x32xf32>
    %339 = math.exp %338 : vector<8x32xf32>
    %cst_80 = arith.constant 1.000000e+00 : f32
    %340 = vector.broadcast %cst_80 : f32 to vector<8x32xf32>
    %341 = arith.addf %340, %339 : vector<8x32xf32>
    %342 = arith.divf %340, %341 : vector<8x32xf32>
    %343 = vector.extract_strided_slice %279 {offsets = [0, 64], sizes = [8, 32], strides = [1, 1]} : vector<8x96xf32> to vector<8x32xf32>
    %344 = vector.extract_strided_slice %326 {offsets = [0, 64], sizes = [8, 32], strides = [1, 1]} : vector<8x96xf32> to vector<8x32xf32>
    %345 = arith.mulf %334, %344 : vector<8x32xf32>
    %346 = arith.addf %343, %345 : vector<8x32xf32>
    %347 = math.tanh %346 : vector<8x32xf32>
    %cst_81 = arith.constant 1.000000e+00 : f32
    %348 = vector.broadcast %cst_81 : f32 to vector<8x32xf32>
    %349 = arith.subf %348, %342 : vector<8x32xf32>
    %350 = arith.mulf %349, %347 : vector<8x32xf32>
    %351 = arith.mulf %342, %269 : vector<8x32xf32>
    %352 = arith.addf %350, %351 : vector<8x32xf32>
    %353 = vector.broadcast %287 : vector<8x1xf32> to vector<8x32xf32>
    %354 = arith.mulf %353, %352 : vector<8x32xf32>
    %cst_82 = arith.constant 1.000000e+00 : f32
    %355 = vector.broadcast %cst_82 : f32 to vector<8x1xf32>
    %356 = arith.subf %355, %287 : vector<8x1xf32>
    %357 = vector.broadcast %356 : vector<8x1xf32> to vector<8x32xf32>
    %358 = arith.mulf %357, %269 : vector<8x32xf32>
    %359 = arith.addf %354, %358 : vector<8x32xf32>
    %c3_83 = arith.constant 3 : index
    %c0_84 = arith.constant 0 : index
    %c0_85 = arith.constant 0 : index
    %360 = vector.load %arg6[%c3_83, %c0_84, %c0_85] : memref<8x8x32xf32, #tpu.memory_space<vmem>>, vector<1x8x32xf32>
    %361 = vector.shape_cast %360 : vector<1x8x32xf32> to vector<8x32xf32>
    %362 = vector.shape_cast %323 : vector<8x32xf32> to vector<1x8x32xf32>
    tpu.vector_store %arg6[%c3_83, %c0_84, %c0_85], %362 {strides = array<i32>} : memref<8x8x32xf32, #tpu.memory_space<vmem>>, vector<1x8x32xf32>,
    %c4_86 = arith.constant 4 : index
    %c0_87 = arith.constant 0 : index
    %c0_88 = arith.constant 0 : index
    %363 = vector.load %arg7[%c4_86, %c0_87, %c0_88] : memref<8x8x32xf32, #tpu.memory_space<vmem>>, vector<1x8x32xf32>
    %364 = vector.shape_cast %363 : vector<1x8x32xf32> to vector<8x32xf32>
    %365 = vector.shape_cast %359 : vector<8x32xf32> to vector<1x8x32xf32>
    tpu.vector_store %arg7[%c4_86, %c0_87, %c0_88], %365 {strides = array<i32>} : memref<8x8x32xf32, #tpu.memory_space<vmem>>, vector<1x8x32xf32>,
    %c4_89 = arith.constant 4 : index
    %c0_90 = arith.constant 0 : index
    %c0_91 = arith.constant 0 : index
    %366 = vector.load %arg0[%c4_89, %c0_90, %c0_91] : memref<8x8x192xf32, #tpu.memory_space<vmem>>, vector<1x8x96xf32>
    %367 = vector.shape_cast %366 : vector<1x8x96xf32> to vector<8x96xf32>
    %c3_92 = arith.constant 3 : index
    %c0_93 = arith.constant 0 : index
    %c96_94 = arith.constant 96 : index
    %368 = vector.load %arg0[%c3_92, %c0_93, %c96_94] : memref<8x8x192xf32, #tpu.memory_space<vmem>>, vector<1x8x96xf32>
    %369 = vector.shape_cast %368 : vector<1x8x96xf32> to vector<8x96xf32>
    %c4_i32_95 = arith.constant 4 : i32
    %370 = vector.broadcast %c4_i32_95 : i32 to vector<8x1xi32>
    %371 = arith.cmpi sgt, %4, %370 : vector<8x1xi32>
    %372 = arith.extui %371 : vector<8x1xi1> to vector<8x1xi32>
    %373 = arith.sitofp %372 : vector<8x1xi32> to vector<8x1xf32>
    %c3_i32_96 = arith.constant 3 : i32
    %374 = vector.broadcast %c3_i32_96 : i32 to vector<8x1xi32>
    %375 = arith.cmpi sgt, %4, %374 : vector<8x1xi32>
    %376 = arith.extui %375 : vector<8x1xi1> to vector<8x1xi32>
    %377 = arith.sitofp %376 : vector<8x1xi32> to vector<8x1xf32>
    %cst_97 = arith.constant dense<0.000000e+00> : vector<8x96xf32>
    %378 = tpu.matmul %323, %0, %cst_97 {dimension_numbers = #tpu.dot_dimension_numbers<[1], [0], [0], [1], [0, 0, 1, 1], [], []>} : vector<8x32xf32>, vector<32x96xf32>, vector<8x96xf32> -> vector<8x96xf32>
    %379 = vector.broadcast %2 : vector<1x96xf32> to vector<8x96xf32>
    %380 = arith.addf %378, %379 : vector<8x96xf32>
    %381 = vector.extract_strided_slice %367 {offsets = [0, 0], sizes = [8, 32], strides = [1, 1]} : vector<8x96xf32> to vector<8x32xf32>
    %382 = vector.extract_strided_slice %380 {offsets = [0, 0], sizes = [8, 32], strides = [1, 1]} : vector<8x96xf32> to vector<8x32xf32>
    %383 = arith.addf %381, %382 : vector<8x32xf32>
    %384 = arith.negf %383 : vector<8x32xf32>
    %385 = math.exp %384 : vector<8x32xf32>
    %cst_98 = arith.constant 1.000000e+00 : f32
    %386 = vector.broadcast %cst_98 : f32 to vector<8x32xf32>
    %387 = arith.addf %386, %385 : vector<8x32xf32>
    %388 = arith.divf %386, %387 : vector<8x32xf32>
    %389 = vector.extract_strided_slice %367 {offsets = [0, 32], sizes = [8, 32], strides = [1, 1]} : vector<8x96xf32> to vector<8x32xf32>
    %390 = vector.extract_strided_slice %380 {offsets = [0, 32], sizes = [8, 32], strides = [1, 1]} : vector<8x96xf32> to vector<8x32xf32>
    %391 = arith.addf %389, %390 : vector<8x32xf32>
    %392 = arith.negf %391 : vector<8x32xf32>
    %393 = math.exp %392 : vector<8x32xf32>
    %cst_99 = arith.constant 1.000000e+00 : f32
    %394 = vector.broadcast %cst_99 : f32 to vector<8x32xf32>
    %395 = arith.addf %394, %393 : vector<8x32xf32>
    %396 = arith.divf %394, %395 : vector<8x32xf32>
    %397 = vector.extract_strided_slice %367 {offsets = [0, 64], sizes = [8, 32], strides = [1, 1]} : vector<8x96xf32> to vector<8x32xf32>
    %398 = vector.extract_strided_slice %380 {offsets = [0, 64], sizes = [8, 32], strides = [1, 1]} : vector<8x96xf32> to vector<8x32xf32>
    %399 = arith.mulf %388, %398 : vector<8x32xf32>
    %400 = arith.addf %397, %399 : vector<8x32xf32>
    %401 = math.tanh %400 : vector<8x32xf32>
    %cst_100 = arith.constant 1.000000e+00 : f32
    %402 = vector.broadcast %cst_100 : f32 to vector<8x32xf32>
    %403 = arith.subf %402, %396 : vector<8x32xf32>
    %404 = arith.mulf %403, %401 : vector<8x32xf32>
    %405 = arith.mulf %396, %323 : vector<8x32xf32>
    %406 = arith.addf %404, %405 : vector<8x32xf32>
    %407 = vector.broadcast %373 : vector<8x1xf32> to vector<8x32xf32>
    %408 = arith.mulf %407, %406 : vector<8x32xf32>
    %cst_101 = arith.constant 1.000000e+00 : f32
    %409 = vector.broadcast %cst_101 : f32 to vector<8x1xf32>
    %410 = arith.subf %409, %373 : vector<8x1xf32>
    %411 = vector.broadcast %410 : vector<8x1xf32> to vector<8x32xf32>
    %412 = arith.mulf %411, %323 : vector<8x32xf32>
    %413 = arith.addf %408, %412 : vector<8x32xf32>
    %cst_102 = arith.constant dense<0.000000e+00> : vector<8x96xf32>
    %414 = tpu.matmul %359, %1, %cst_102 {dimension_numbers = #tpu.dot_dimension_numbers<[1], [0], [0], [1], [0, 0, 1, 1], [], []>} : vector<8x32xf32>, vector<32x96xf32>, vector<8x96xf32> -> vector<8x96xf32>
    %415 = vector.broadcast %3 : vector<1x96xf32> to vector<8x96xf32>
    %416 = arith.addf %414, %415 : vector<8x96xf32>
    %417 = vector.extract_strided_slice %369 {offsets = [0, 0], sizes = [8, 32], strides = [1, 1]} : vector<8x96xf32> to vector<8x32xf32>
    %418 = vector.extract_strided_slice %416 {offsets = [0, 0], sizes = [8, 32], strides = [1, 1]} : vector<8x96xf32> to vector<8x32xf32>
    %419 = arith.addf %417, %418 : vector<8x32xf32>
    %420 = arith.negf %419 : vector<8x32xf32>
    %421 = math.exp %420 : vector<8x32xf32>
    %cst_103 = arith.constant 1.000000e+00 : f32
    %422 = vector.broadcast %cst_103 : f32 to vector<8x32xf32>
    %423 = arith.addf %422, %421 : vector<8x32xf32>
    %424 = arith.divf %422, %423 : vector<8x32xf32>
    %425 = vector.extract_strided_slice %369 {offsets = [0, 32], sizes = [8, 32], strides = [1, 1]} : vector<8x96xf32> to vector<8x32xf32>
    %426 = vector.extract_strided_slice %416 {offsets = [0, 32], sizes = [8, 32], strides = [1, 1]} : vector<8x96xf32> to vector<8x32xf32>
    %427 = arith.addf %425, %426 : vector<8x32xf32>
    %428 = arith.negf %427 : vector<8x32xf32>
    %429 = math.exp %428 : vector<8x32xf32>
    %cst_104 = arith.constant 1.000000e+00 : f32
    %430 = vector.broadcast %cst_104 : f32 to vector<8x32xf32>
    %431 = arith.addf %430, %429 : vector<8x32xf32>
    %432 = arith.divf %430, %431 : vector<8x32xf32>
    %433 = vector.extract_strided_slice %369 {offsets = [0, 64], sizes = [8, 32], strides = [1, 1]} : vector<8x96xf32> to vector<8x32xf32>
    %434 = vector.extract_strided_slice %416 {offsets = [0, 64], sizes = [8, 32], strides = [1, 1]} : vector<8x96xf32> to vector<8x32xf32>
    %435 = arith.mulf %424, %434 : vector<8x32xf32>
    %436 = arith.addf %433, %435 : vector<8x32xf32>
    %437 = math.tanh %436 : vector<8x32xf32>
    %cst_105 = arith.constant 1.000000e+00 : f32
    %438 = vector.broadcast %cst_105 : f32 to vector<8x32xf32>
    %439 = arith.subf %438, %432 : vector<8x32xf32>
    %440 = arith.mulf %439, %437 : vector<8x32xf32>
    %441 = arith.mulf %432, %359 : vector<8x32xf32>
    %442 = arith.addf %440, %441 : vector<8x32xf32>
    %443 = vector.broadcast %377 : vector<8x1xf32> to vector<8x32xf32>
    %444 = arith.mulf %443, %442 : vector<8x32xf32>
    %cst_106 = arith.constant 1.000000e+00 : f32
    %445 = vector.broadcast %cst_106 : f32 to vector<8x1xf32>
    %446 = arith.subf %445, %377 : vector<8x1xf32>
    %447 = vector.broadcast %446 : vector<8x1xf32> to vector<8x32xf32>
    %448 = arith.mulf %447, %359 : vector<8x32xf32>
    %449 = arith.addf %444, %448 : vector<8x32xf32>
    %c4_107 = arith.constant 4 : index
    %c0_108 = arith.constant 0 : index
    %c0_109 = arith.constant 0 : index
    %450 = vector.load %arg6[%c4_107, %c0_108, %c0_109] : memref<8x8x32xf32, #tpu.memory_space<vmem>>, vector<1x8x32xf32>
    %451 = vector.shape_cast %450 : vector<1x8x32xf32> to vector<8x32xf32>
    %452 = vector.shape_cast %413 : vector<8x32xf32> to vector<1x8x32xf32>
    tpu.vector_store %arg6[%c4_107, %c0_108, %c0_109], %452 {strides = array<i32>} : memref<8x8x32xf32, #tpu.memory_space<vmem>>, vector<1x8x32xf32>,
    %c3_110 = arith.constant 3 : index
    %c0_111 = arith.constant 0 : index
    %c0_112 = arith.constant 0 : index
    %453 = vector.load %arg7[%c3_110, %c0_111, %c0_112] : memref<8x8x32xf32, #tpu.memory_space<vmem>>, vector<1x8x32xf32>
    %454 = vector.shape_cast %453 : vector<1x8x32xf32> to vector<8x32xf32>
    %455 = vector.shape_cast %449 : vector<8x32xf32> to vector<1x8x32xf32>
    tpu.vector_store %arg7[%c3_110, %c0_111, %c0_112], %455 {strides = array<i32>} : memref<8x8x32xf32, #tpu.memory_space<vmem>>, vector<1x8x32xf32>,
    %c5_113 = arith.constant 5 : index
    %c0_114 = arith.constant 0 : index
    %c0_115 = arith.constant 0 : index
    %456 = vector.load %arg0[%c5_113, %c0_114, %c0_115] : memref<8x8x192xf32, #tpu.memory_space<vmem>>, vector<1x8x96xf32>
    %457 = vector.shape_cast %456 : vector<1x8x96xf32> to vector<8x96xf32>
    %c2_116 = arith.constant 2 : index
    %c0_117 = arith.constant 0 : index
    %c96_118 = arith.constant 96 : index
    %458 = vector.load %arg0[%c2_116, %c0_117, %c96_118] : memref<8x8x192xf32, #tpu.memory_space<vmem>>, vector<1x8x96xf32>
    %459 = vector.shape_cast %458 : vector<1x8x96xf32> to vector<8x96xf32>
    %c5_i32_119 = arith.constant 5 : i32
    %460 = vector.broadcast %c5_i32_119 : i32 to vector<8x1xi32>
    %461 = arith.cmpi sgt, %4, %460 : vector<8x1xi32>
    %462 = arith.extui %461 : vector<8x1xi1> to vector<8x1xi32>
    %463 = arith.sitofp %462 : vector<8x1xi32> to vector<8x1xf32>
    %c2_i32_120 = arith.constant 2 : i32
    %464 = vector.broadcast %c2_i32_120 : i32 to vector<8x1xi32>
    %465 = arith.cmpi sgt, %4, %464 : vector<8x1xi32>
    %466 = arith.extui %465 : vector<8x1xi1> to vector<8x1xi32>
    %467 = arith.sitofp %466 : vector<8x1xi32> to vector<8x1xf32>
    %cst_121 = arith.constant dense<0.000000e+00> : vector<8x96xf32>
    %468 = tpu.matmul %413, %0, %cst_121 {dimension_numbers = #tpu.dot_dimension_numbers<[1], [0], [0], [1], [0, 0, 1, 1], [], []>} : vector<8x32xf32>, vector<32x96xf32>, vector<8x96xf32> -> vector<8x96xf32>
    %469 = vector.broadcast %2 : vector<1x96xf32> to vector<8x96xf32>
    %470 = arith.addf %468, %469 : vector<8x96xf32>
    %471 = vector.extract_strided_slice %457 {offsets = [0, 0], sizes = [8, 32], strides = [1, 1]} : vector<8x96xf32> to vector<8x32xf32>
    %472 = vector.extract_strided_slice %470 {offsets = [0, 0], sizes = [8, 32], strides = [1, 1]} : vector<8x96xf32> to vector<8x32xf32>
    %473 = arith.addf %471, %472 : vector<8x32xf32>
    %474 = arith.negf %473 : vector<8x32xf32>
    %475 = math.exp %474 : vector<8x32xf32>
    %cst_122 = arith.constant 1.000000e+00 : f32
    %476 = vector.broadcast %cst_122 : f32 to vector<8x32xf32>
    %477 = arith.addf %476, %475 : vector<8x32xf32>
    %478 = arith.divf %476, %477 : vector<8x32xf32>
    %479 = vector.extract_strided_slice %457 {offsets = [0, 32], sizes = [8, 32], strides = [1, 1]} : vector<8x96xf32> to vector<8x32xf32>
    %480 = vector.extract_strided_slice %470 {offsets = [0, 32], sizes = [8, 32], strides = [1, 1]} : vector<8x96xf32> to vector<8x32xf32>
    %481 = arith.addf %479, %480 : vector<8x32xf32>
    %482 = arith.negf %481 : vector<8x32xf32>
    %483 = math.exp %482 : vector<8x32xf32>
    %cst_123 = arith.constant 1.000000e+00 : f32
    %484 = vector.broadcast %cst_123 : f32 to vector<8x32xf32>
    %485 = arith.addf %484, %483 : vector<8x32xf32>
    %486 = arith.divf %484, %485 : vector<8x32xf32>
    %487 = vector.extract_strided_slice %457 {offsets = [0, 64], sizes = [8, 32], strides = [1, 1]} : vector<8x96xf32> to vector<8x32xf32>
    %488 = vector.extract_strided_slice %470 {offsets = [0, 64], sizes = [8, 32], strides = [1, 1]} : vector<8x96xf32> to vector<8x32xf32>
    %489 = arith.mulf %478, %488 : vector<8x32xf32>
    %490 = arith.addf %487, %489 : vector<8x32xf32>
    %491 = math.tanh %490 : vector<8x32xf32>
    %cst_124 = arith.constant 1.000000e+00 : f32
    %492 = vector.broadcast %cst_124 : f32 to vector<8x32xf32>
    %493 = arith.subf %492, %486 : vector<8x32xf32>
    %494 = arith.mulf %493, %491 : vector<8x32xf32>
    %495 = arith.mulf %486, %413 : vector<8x32xf32>
    %496 = arith.addf %494, %495 : vector<8x32xf32>
    %497 = vector.broadcast %463 : vector<8x1xf32> to vector<8x32xf32>
    %498 = arith.mulf %497, %496 : vector<8x32xf32>
    %cst_125 = arith.constant 1.000000e+00 : f32
    %499 = vector.broadcast %cst_125 : f32 to vector<8x1xf32>
    %500 = arith.subf %499, %463 : vector<8x1xf32>
    %501 = vector.broadcast %500 : vector<8x1xf32> to vector<8x32xf32>
    %502 = arith.mulf %501, %413 : vector<8x32xf32>
    %503 = arith.addf %498, %502 : vector<8x32xf32>
    %cst_126 = arith.constant dense<0.000000e+00> : vector<8x96xf32>
    %504 = tpu.matmul %449, %1, %cst_126 {dimension_numbers = #tpu.dot_dimension_numbers<[1], [0], [0], [1], [0, 0, 1, 1], [], []>} : vector<8x32xf32>, vector<32x96xf32>, vector<8x96xf32> -> vector<8x96xf32>
    %505 = vector.broadcast %3 : vector<1x96xf32> to vector<8x96xf32>
    %506 = arith.addf %504, %505 : vector<8x96xf32>
    %507 = vector.extract_strided_slice %459 {offsets = [0, 0], sizes = [8, 32], strides = [1, 1]} : vector<8x96xf32> to vector<8x32xf32>
    %508 = vector.extract_strided_slice %506 {offsets = [0, 0], sizes = [8, 32], strides = [1, 1]} : vector<8x96xf32> to vector<8x32xf32>
    %509 = arith.addf %507, %508 : vector<8x32xf32>
    %510 = arith.negf %509 : vector<8x32xf32>
    %511 = math.exp %510 : vector<8x32xf32>
    %cst_127 = arith.constant 1.000000e+00 : f32
    %512 = vector.broadcast %cst_127 : f32 to vector<8x32xf32>
    %513 = arith.addf %512, %511 : vector<8x32xf32>
    %514 = arith.divf %512, %513 : vector<8x32xf32>
    %515 = vector.extract_strided_slice %459 {offsets = [0, 32], sizes = [8, 32], strides = [1, 1]} : vector<8x96xf32> to vector<8x32xf32>
    %516 = vector.extract_strided_slice %506 {offsets = [0, 32], sizes = [8, 32], strides = [1, 1]} : vector<8x96xf32> to vector<8x32xf32>
    %517 = arith.addf %515, %516 : vector<8x32xf32>
    %518 = arith.negf %517 : vector<8x32xf32>
    %519 = math.exp %518 : vector<8x32xf32>
    %cst_128 = arith.constant 1.000000e+00 : f32
    %520 = vector.broadcast %cst_128 : f32 to vector<8x32xf32>
    %521 = arith.addf %520, %519 : vector<8x32xf32>
    %522 = arith.divf %520, %521 : vector<8x32xf32>
    %523 = vector.extract_strided_slice %459 {offsets = [0, 64], sizes = [8, 32], strides = [1, 1]} : vector<8x96xf32> to vector<8x32xf32>
    %524 = vector.extract_strided_slice %506 {offsets = [0, 64], sizes = [8, 32], strides = [1, 1]} : vector<8x96xf32> to vector<8x32xf32>
    %525 = arith.mulf %514, %524 : vector<8x32xf32>
    %526 = arith.addf %523, %525 : vector<8x32xf32>
    %527 = math.tanh %526 : vector<8x32xf32>
    %cst_129 = arith.constant 1.000000e+00 : f32
    %528 = vector.broadcast %cst_129 : f32 to vector<8x32xf32>
    %529 = arith.subf %528, %522 : vector<8x32xf32>
    %530 = arith.mulf %529, %527 : vector<8x32xf32>
    %531 = arith.mulf %522, %449 : vector<8x32xf32>
    %532 = arith.addf %530, %531 : vector<8x32xf32>
    %533 = vector.broadcast %467 : vector<8x1xf32> to vector<8x32xf32>
    %534 = arith.mulf %533, %532 : vector<8x32xf32>
    %cst_130 = arith.constant 1.000000e+00 : f32
    %535 = vector.broadcast %cst_130 : f32 to vector<8x1xf32>
    %536 = arith.subf %535, %467 : vector<8x1xf32>
    %537 = vector.broadcast %536 : vector<8x1xf32> to vector<8x32xf32>
    %538 = arith.mulf %537, %449 : vector<8x32xf32>
    %539 = arith.addf %534, %538 : vector<8x32xf32>
    %c5_131 = arith.constant 5 : index
    %c0_132 = arith.constant 0 : index
    %c0_133 = arith.constant 0 : index
    %540 = vector.load %arg6[%c5_131, %c0_132, %c0_133] : memref<8x8x32xf32, #tpu.memory_space<vmem>>, vector<1x8x32xf32>
    %541 = vector.shape_cast %540 : vector<1x8x32xf32> to vector<8x32xf32>
    %542 = vector.shape_cast %503 : vector<8x32xf32> to vector<1x8x32xf32>
    tpu.vector_store %arg6[%c5_131, %c0_132, %c0_133], %542 {strides = array<i32>} : memref<8x8x32xf32, #tpu.memory_space<vmem>>, vector<1x8x32xf32>,
    %c2_134 = arith.constant 2 : index
    %c0_135 = arith.constant 0 : index
    %c0_136 = arith.constant 0 : index
    %543 = vector.load %arg7[%c2_134, %c0_135, %c0_136] : memref<8x8x32xf32, #tpu.memory_space<vmem>>, vector<1x8x32xf32>
    %544 = vector.shape_cast %543 : vector<1x8x32xf32> to vector<8x32xf32>
    %545 = vector.shape_cast %539 : vector<8x32xf32> to vector<1x8x32xf32>
    tpu.vector_store %arg7[%c2_134, %c0_135, %c0_136], %545 {strides = array<i32>} : memref<8x8x32xf32, #tpu.memory_space<vmem>>, vector<1x8x32xf32>,
    %c6_137 = arith.constant 6 : index
    %c0_138 = arith.constant 0 : index
    %c0_139 = arith.constant 0 : index
    %546 = vector.load %arg0[%c6_137, %c0_138, %c0_139] : memref<8x8x192xf32, #tpu.memory_space<vmem>>, vector<1x8x96xf32>
    %547 = vector.shape_cast %546 : vector<1x8x96xf32> to vector<8x96xf32>
    %c1_140 = arith.constant 1 : index
    %c0_141 = arith.constant 0 : index
    %c96_142 = arith.constant 96 : index
    %548 = vector.load %arg0[%c1_140, %c0_141, %c96_142] : memref<8x8x192xf32, #tpu.memory_space<vmem>>, vector<1x8x96xf32>
    %549 = vector.shape_cast %548 : vector<1x8x96xf32> to vector<8x96xf32>
    %c6_i32_143 = arith.constant 6 : i32
    %550 = vector.broadcast %c6_i32_143 : i32 to vector<8x1xi32>
    %551 = arith.cmpi sgt, %4, %550 : vector<8x1xi32>
    %552 = arith.extui %551 : vector<8x1xi1> to vector<8x1xi32>
    %553 = arith.sitofp %552 : vector<8x1xi32> to vector<8x1xf32>
    %c1_i32_144 = arith.constant 1 : i32
    %554 = vector.broadcast %c1_i32_144 : i32 to vector<8x1xi32>
    %555 = arith.cmpi sgt, %4, %554 : vector<8x1xi32>
    %556 = arith.extui %555 : vector<8x1xi1> to vector<8x1xi32>
    %557 = arith.sitofp %556 : vector<8x1xi32> to vector<8x1xf32>
    %cst_145 = arith.constant dense<0.000000e+00> : vector<8x96xf32>
    %558 = tpu.matmul %503, %0, %cst_145 {dimension_numbers = #tpu.dot_dimension_numbers<[1], [0], [0], [1], [0, 0, 1, 1], [], []>} : vector<8x32xf32>, vector<32x96xf32>, vector<8x96xf32> -> vector<8x96xf32>
    %559 = vector.broadcast %2 : vector<1x96xf32> to vector<8x96xf32>
    %560 = arith.addf %558, %559 : vector<8x96xf32>
    %561 = vector.extract_strided_slice %547 {offsets = [0, 0], sizes = [8, 32], strides = [1, 1]} : vector<8x96xf32> to vector<8x32xf32>
    %562 = vector.extract_strided_slice %560 {offsets = [0, 0], sizes = [8, 32], strides = [1, 1]} : vector<8x96xf32> to vector<8x32xf32>
    %563 = arith.addf %561, %562 : vector<8x32xf32>
    %564 = arith.negf %563 : vector<8x32xf32>
    %565 = math.exp %564 : vector<8x32xf32>
    %cst_146 = arith.constant 1.000000e+00 : f32
    %566 = vector.broadcast %cst_146 : f32 to vector<8x32xf32>
    %567 = arith.addf %566, %565 : vector<8x32xf32>
    %568 = arith.divf %566, %567 : vector<8x32xf32>
    %569 = vector.extract_strided_slice %547 {offsets = [0, 32], sizes = [8, 32], strides = [1, 1]} : vector<8x96xf32> to vector<8x32xf32>
    %570 = vector.extract_strided_slice %560 {offsets = [0, 32], sizes = [8, 32], strides = [1, 1]} : vector<8x96xf32> to vector<8x32xf32>
    %571 = arith.addf %569, %570 : vector<8x32xf32>
    %572 = arith.negf %571 : vector<8x32xf32>
    %573 = math.exp %572 : vector<8x32xf32>
    %cst_147 = arith.constant 1.000000e+00 : f32
    %574 = vector.broadcast %cst_147 : f32 to vector<8x32xf32>
    %575 = arith.addf %574, %573 : vector<8x32xf32>
    %576 = arith.divf %574, %575 : vector<8x32xf32>
    %577 = vector.extract_strided_slice %547 {offsets = [0, 64], sizes = [8, 32], strides = [1, 1]} : vector<8x96xf32> to vector<8x32xf32>
    %578 = vector.extract_strided_slice %560 {offsets = [0, 64], sizes = [8, 32], strides = [1, 1]} : vector<8x96xf32> to vector<8x32xf32>
    %579 = arith.mulf %568, %578 : vector<8x32xf32>
    %580 = arith.addf %577, %579 : vector<8x32xf32>
    %581 = math.tanh %580 : vector<8x32xf32>
    %cst_148 = arith.constant 1.000000e+00 : f32
    %582 = vector.broadcast %cst_148 : f32 to vector<8x32xf32>
    %583 = arith.subf %582, %576 : vector<8x32xf32>
    %584 = arith.mulf %583, %581 : vector<8x32xf32>
    %585 = arith.mulf %576, %503 : vector<8x32xf32>
    %586 = arith.addf %584, %585 : vector<8x32xf32>
    %587 = vector.broadcast %553 : vector<8x1xf32> to vector<8x32xf32>
    %588 = arith.mulf %587, %586 : vector<8x32xf32>
    %cst_149 = arith.constant 1.000000e+00 : f32
    %589 = vector.broadcast %cst_149 : f32 to vector<8x1xf32>
    %590 = arith.subf %589, %553 : vector<8x1xf32>
    %591 = vector.broadcast %590 : vector<8x1xf32> to vector<8x32xf32>
    %592 = arith.mulf %591, %503 : vector<8x32xf32>
    %593 = arith.addf %588, %592 : vector<8x32xf32>
    %cst_150 = arith.constant dense<0.000000e+00> : vector<8x96xf32>
    %594 = tpu.matmul %539, %1, %cst_150 {dimension_numbers = #tpu.dot_dimension_numbers<[1], [0], [0], [1], [0, 0, 1, 1], [], []>} : vector<8x32xf32>, vector<32x96xf32>, vector<8x96xf32> -> vector<8x96xf32>
    %595 = vector.broadcast %3 : vector<1x96xf32> to vector<8x96xf32>
    %596 = arith.addf %594, %595 : vector<8x96xf32>
    %597 = vector.extract_strided_slice %549 {offsets = [0, 0], sizes = [8, 32], strides = [1, 1]} : vector<8x96xf32> to vector<8x32xf32>
    %598 = vector.extract_strided_slice %596 {offsets = [0, 0], sizes = [8, 32], strides = [1, 1]} : vector<8x96xf32> to vector<8x32xf32>
    %599 = arith.addf %597, %598 : vector<8x32xf32>
    %600 = arith.negf %599 : vector<8x32xf32>
    %601 = math.exp %600 : vector<8x32xf32>
    %cst_151 = arith.constant 1.000000e+00 : f32
    %602 = vector.broadcast %cst_151 : f32 to vector<8x32xf32>
    %603 = arith.addf %602, %601 : vector<8x32xf32>
    %604 = arith.divf %602, %603 : vector<8x32xf32>
    %605 = vector.extract_strided_slice %549 {offsets = [0, 32], sizes = [8, 32], strides = [1, 1]} : vector<8x96xf32> to vector<8x32xf32>
    %606 = vector.extract_strided_slice %596 {offsets = [0, 32], sizes = [8, 32], strides = [1, 1]} : vector<8x96xf32> to vector<8x32xf32>
    %607 = arith.addf %605, %606 : vector<8x32xf32>
    %608 = arith.negf %607 : vector<8x32xf32>
    %609 = math.exp %608 : vector<8x32xf32>
    %cst_152 = arith.constant 1.000000e+00 : f32
    %610 = vector.broadcast %cst_152 : f32 to vector<8x32xf32>
    %611 = arith.addf %610, %609 : vector<8x32xf32>
    %612 = arith.divf %610, %611 : vector<8x32xf32>
    %613 = vector.extract_strided_slice %549 {offsets = [0, 64], sizes = [8, 32], strides = [1, 1]} : vector<8x96xf32> to vector<8x32xf32>
    %614 = vector.extract_strided_slice %596 {offsets = [0, 64], sizes = [8, 32], strides = [1, 1]} : vector<8x96xf32> to vector<8x32xf32>
    %615 = arith.mulf %604, %614 : vector<8x32xf32>
    %616 = arith.addf %613, %615 : vector<8x32xf32>
    %617 = math.tanh %616 : vector<8x32xf32>
    %cst_153 = arith.constant 1.000000e+00 : f32
    %618 = vector.broadcast %cst_153 : f32 to vector<8x32xf32>
    %619 = arith.subf %618, %612 : vector<8x32xf32>
    %620 = arith.mulf %619, %617 : vector<8x32xf32>
    %621 = arith.mulf %612, %539 : vector<8x32xf32>
    %622 = arith.addf %620, %621 : vector<8x32xf32>
    %623 = vector.broadcast %557 : vector<8x1xf32> to vector<8x32xf32>
    %624 = arith.mulf %623, %622 : vector<8x32xf32>
    %cst_154 = arith.constant 1.000000e+00 : f32
    %625 = vector.broadcast %cst_154 : f32 to vector<8x1xf32>
    %626 = arith.subf %625, %557 : vector<8x1xf32>
    %627 = vector.broadcast %626 : vector<8x1xf32> to vector<8x32xf32>
    %628 = arith.mulf %627, %539 : vector<8x32xf32>
    %629 = arith.addf %624, %628 : vector<8x32xf32>
    %c6_155 = arith.constant 6 : index
    %c0_156 = arith.constant 0 : index
    %c0_157 = arith.constant 0 : index
    %630 = vector.load %arg6[%c6_155, %c0_156, %c0_157] : memref<8x8x32xf32, #tpu.memory_space<vmem>>, vector<1x8x32xf32>
    %631 = vector.shape_cast %630 : vector<1x8x32xf32> to vector<8x32xf32>
    %632 = vector.shape_cast %593 : vector<8x32xf32> to vector<1x8x32xf32>
    tpu.vector_store %arg6[%c6_155, %c0_156, %c0_157], %632 {strides = array<i32>} : memref<8x8x32xf32, #tpu.memory_space<vmem>>, vector<1x8x32xf32>,
    %c1_158 = arith.constant 1 : index
    %c0_159 = arith.constant 0 : index
    %c0_160 = arith.constant 0 : index
    %633 = vector.load %arg7[%c1_158, %c0_159, %c0_160] : memref<8x8x32xf32, #tpu.memory_space<vmem>>, vector<1x8x32xf32>
    %634 = vector.shape_cast %633 : vector<1x8x32xf32> to vector<8x32xf32>
    %635 = vector.shape_cast %629 : vector<8x32xf32> to vector<1x8x32xf32>
    tpu.vector_store %arg7[%c1_158, %c0_159, %c0_160], %635 {strides = array<i32>} : memref<8x8x32xf32, #tpu.memory_space<vmem>>, vector<1x8x32xf32>,
    %c7_161 = arith.constant 7 : index
    %c0_162 = arith.constant 0 : index
    %c0_163 = arith.constant 0 : index
    %636 = vector.load %arg0[%c7_161, %c0_162, %c0_163] : memref<8x8x192xf32, #tpu.memory_space<vmem>>, vector<1x8x96xf32>
    %637 = vector.shape_cast %636 : vector<1x8x96xf32> to vector<8x96xf32>
    %c0_164 = arith.constant 0 : index
    %c0_165 = arith.constant 0 : index
    %c96_166 = arith.constant 96 : index
    %638 = vector.load %arg0[%c0_164, %c0_165, %c96_166] : memref<8x8x192xf32, #tpu.memory_space<vmem>>, vector<1x8x96xf32>
    %639 = vector.shape_cast %638 : vector<1x8x96xf32> to vector<8x96xf32>
    %c7_i32_167 = arith.constant 7 : i32
    %640 = vector.broadcast %c7_i32_167 : i32 to vector<8x1xi32>
    %641 = arith.cmpi sgt, %4, %640 : vector<8x1xi32>
    %642 = arith.extui %641 : vector<8x1xi1> to vector<8x1xi32>
    %643 = arith.sitofp %642 : vector<8x1xi32> to vector<8x1xf32>
    %c0_i32_168 = arith.constant 0 : i32
    %644 = vector.broadcast %c0_i32_168 : i32 to vector<8x1xi32>
    %645 = arith.cmpi sgt, %4, %644 : vector<8x1xi32>
    %646 = arith.extui %645 : vector<8x1xi1> to vector<8x1xi32>
    %647 = arith.sitofp %646 : vector<8x1xi32> to vector<8x1xf32>
    %cst_169 = arith.constant dense<0.000000e+00> : vector<8x96xf32>
    %648 = tpu.matmul %593, %0, %cst_169 {dimension_numbers = #tpu.dot_dimension_numbers<[1], [0], [0], [1], [0, 0, 1, 1], [], []>} : vector<8x32xf32>, vector<32x96xf32>, vector<8x96xf32> -> vector<8x96xf32>
    %649 = vector.broadcast %2 : vector<1x96xf32> to vector<8x96xf32>
    %650 = arith.addf %648, %649 : vector<8x96xf32>
    %651 = vector.extract_strided_slice %637 {offsets = [0, 0], sizes = [8, 32], strides = [1, 1]} : vector<8x96xf32> to vector<8x32xf32>
    %652 = vector.extract_strided_slice %650 {offsets = [0, 0], sizes = [8, 32], strides = [1, 1]} : vector<8x96xf32> to vector<8x32xf32>
    %653 = arith.addf %651, %652 : vector<8x32xf32>
    %654 = arith.negf %653 : vector<8x32xf32>
    %655 = math.exp %654 : vector<8x32xf32>
    %cst_170 = arith.constant 1.000000e+00 : f32
    %656 = vector.broadcast %cst_170 : f32 to vector<8x32xf32>
    %657 = arith.addf %656, %655 : vector<8x32xf32>
    %658 = arith.divf %656, %657 : vector<8x32xf32>
    %659 = vector.extract_strided_slice %637 {offsets = [0, 32], sizes = [8, 32], strides = [1, 1]} : vector<8x96xf32> to vector<8x32xf32>
    %660 = vector.extract_strided_slice %650 {offsets = [0, 32], sizes = [8, 32], strides = [1, 1]} : vector<8x96xf32> to vector<8x32xf32>
    %661 = arith.addf %659, %660 : vector<8x32xf32>
    %662 = arith.negf %661 : vector<8x32xf32>
    %663 = math.exp %662 : vector<8x32xf32>
    %cst_171 = arith.constant 1.000000e+00 : f32
    %664 = vector.broadcast %cst_171 : f32 to vector<8x32xf32>
    %665 = arith.addf %664, %663 : vector<8x32xf32>
    %666 = arith.divf %664, %665 : vector<8x32xf32>
    %667 = vector.extract_strided_slice %637 {offsets = [0, 64], sizes = [8, 32], strides = [1, 1]} : vector<8x96xf32> to vector<8x32xf32>
    %668 = vector.extract_strided_slice %650 {offsets = [0, 64], sizes = [8, 32], strides = [1, 1]} : vector<8x96xf32> to vector<8x32xf32>
    %669 = arith.mulf %658, %668 : vector<8x32xf32>
    %670 = arith.addf %667, %669 : vector<8x32xf32>
    %671 = math.tanh %670 : vector<8x32xf32>
    %cst_172 = arith.constant 1.000000e+00 : f32
    %672 = vector.broadcast %cst_172 : f32 to vector<8x32xf32>
    %673 = arith.subf %672, %666 : vector<8x32xf32>
    %674 = arith.mulf %673, %671 : vector<8x32xf32>
    %675 = arith.mulf %666, %593 : vector<8x32xf32>
    %676 = arith.addf %674, %675 : vector<8x32xf32>
    %677 = vector.broadcast %643 : vector<8x1xf32> to vector<8x32xf32>
    %678 = arith.mulf %677, %676 : vector<8x32xf32>
    %cst_173 = arith.constant 1.000000e+00 : f32
    %679 = vector.broadcast %cst_173 : f32 to vector<8x1xf32>
    %680 = arith.subf %679, %643 : vector<8x1xf32>
    %681 = vector.broadcast %680 : vector<8x1xf32> to vector<8x32xf32>
    %682 = arith.mulf %681, %593 : vector<8x32xf32>
    %683 = arith.addf %678, %682 : vector<8x32xf32>
    %cst_174 = arith.constant dense<0.000000e+00> : vector<8x96xf32>
    %684 = tpu.matmul %629, %1, %cst_174 {dimension_numbers = #tpu.dot_dimension_numbers<[1], [0], [0], [1], [0, 0, 1, 1], [], []>} : vector<8x32xf32>, vector<32x96xf32>, vector<8x96xf32> -> vector<8x96xf32>
    %685 = vector.broadcast %3 : vector<1x96xf32> to vector<8x96xf32>
    %686 = arith.addf %684, %685 : vector<8x96xf32>
    %687 = vector.extract_strided_slice %639 {offsets = [0, 0], sizes = [8, 32], strides = [1, 1]} : vector<8x96xf32> to vector<8x32xf32>
    %688 = vector.extract_strided_slice %686 {offsets = [0, 0], sizes = [8, 32], strides = [1, 1]} : vector<8x96xf32> to vector<8x32xf32>
    %689 = arith.addf %687, %688 : vector<8x32xf32>
    %690 = arith.negf %689 : vector<8x32xf32>
    %691 = math.exp %690 : vector<8x32xf32>
    %cst_175 = arith.constant 1.000000e+00 : f32
    %692 = vector.broadcast %cst_175 : f32 to vector<8x32xf32>
    %693 = arith.addf %692, %691 : vector<8x32xf32>
    %694 = arith.divf %692, %693 : vector<8x32xf32>
    %695 = vector.extract_strided_slice %639 {offsets = [0, 32], sizes = [8, 32], strides = [1, 1]} : vector<8x96xf32> to vector<8x32xf32>
    %696 = vector.extract_strided_slice %686 {offsets = [0, 32], sizes = [8, 32], strides = [1, 1]} : vector<8x96xf32> to vector<8x32xf32>
    %697 = arith.addf %695, %696 : vector<8x32xf32>
    %698 = arith.negf %697 : vector<8x32xf32>
    %699 = math.exp %698 : vector<8x32xf32>
    %cst_176 = arith.constant 1.000000e+00 : f32
    %700 = vector.broadcast %cst_176 : f32 to vector<8x32xf32>
    %701 = arith.addf %700, %699 : vector<8x32xf32>
    %702 = arith.divf %700, %701 : vector<8x32xf32>
    %703 = vector.extract_strided_slice %639 {offsets = [0, 64], sizes = [8, 32], strides = [1, 1]} : vector<8x96xf32> to vector<8x32xf32>
    %704 = vector.extract_strided_slice %686 {offsets = [0, 64], sizes = [8, 32], strides = [1, 1]} : vector<8x96xf32> to vector<8x32xf32>
    %705 = arith.mulf %694, %704 : vector<8x32xf32>
    %706 = arith.addf %703, %705 : vector<8x32xf32>
    %707 = math.tanh %706 : vector<8x32xf32>
    %cst_177 = arith.constant 1.000000e+00 : f32
    %708 = vector.broadcast %cst_177 : f32 to vector<8x32xf32>
    %709 = arith.subf %708, %702 : vector<8x32xf32>
    %710 = arith.mulf %709, %707 : vector<8x32xf32>
    %711 = arith.mulf %702, %629 : vector<8x32xf32>
    %712 = arith.addf %710, %711 : vector<8x32xf32>
    %713 = vector.broadcast %647 : vector<8x1xf32> to vector<8x32xf32>
    %714 = arith.mulf %713, %712 : vector<8x32xf32>
    %cst_178 = arith.constant 1.000000e+00 : f32
    %715 = vector.broadcast %cst_178 : f32 to vector<8x1xf32>
    %716 = arith.subf %715, %647 : vector<8x1xf32>
    %717 = vector.broadcast %716 : vector<8x1xf32> to vector<8x32xf32>
    %718 = arith.mulf %717, %629 : vector<8x32xf32>
    %719 = arith.addf %714, %718 : vector<8x32xf32>
    %c7_179 = arith.constant 7 : index
    %c0_180 = arith.constant 0 : index
    %c0_181 = arith.constant 0 : index
    %720 = vector.load %arg6[%c7_179, %c0_180, %c0_181] : memref<8x8x32xf32, #tpu.memory_space<vmem>>, vector<1x8x32xf32>
    %721 = vector.shape_cast %720 : vector<1x8x32xf32> to vector<8x32xf32>
    %722 = vector.shape_cast %683 : vector<8x32xf32> to vector<1x8x32xf32>
    tpu.vector_store %arg6[%c7_179, %c0_180, %c0_181], %722 {strides = array<i32>} : memref<8x8x32xf32, #tpu.memory_space<vmem>>, vector<1x8x32xf32>,
    %c0_182 = arith.constant 0 : index
    %c0_183 = arith.constant 0 : index
    %c0_184 = arith.constant 0 : index
    %723 = vector.load %arg7[%c0_182, %c0_183, %c0_184] : memref<8x8x32xf32, #tpu.memory_space<vmem>>, vector<1x8x32xf32>
    %724 = vector.shape_cast %723 : vector<1x8x32xf32> to vector<8x32xf32>
    %725 = vector.shape_cast %719 : vector<8x32xf32> to vector<1x8x32xf32>
    tpu.vector_store %arg7[%c0_182, %c0_183, %c0_184], %725 {strides = array<i32>} : memref<8x8x32xf32, #tpu.memory_space<vmem>>, vector<1x8x32xf32>,
    return
  }
}

module attributes {stable_mosaic.version = 11 : i64} {
  func.func @gru_bwd_fc_kernel(%arg0: memref<8x8x96xf32, #tpu.memory_space<vmem>>, %arg1: memref<8x1xi32, #tpu.memory_space<vmem>>, %arg2: memref<32x96xf32, #tpu.memory_space<vmem>>, %arg3: memref<1x96xf32, #tpu.memory_space<vmem>>, %arg4: memref<32x128xf32, #tpu.memory_space<vmem>>, %arg5: memref<1x128xf32, #tpu.memory_space<vmem>>, %arg6: memref<8x128xf32, #tpu.memory_space<vmem>>) attributes {dimension_semantics = [], scalar_prefetch = 0 : i64, scratch_operands = 0 : i64, tpu.core_type = #tpu.core_type<tc>} {
    %c0 = arith.constant 0 : index
    %c0_0 = arith.constant 0 : index
    %0 = vector.load %arg2[%c0, %c0_0] : memref<32x96xf32, #tpu.memory_space<vmem>>, vector<32x96xf32>
    %c0_1 = arith.constant 0 : index
    %c0_2 = arith.constant 0 : index
    %1 = vector.load %arg3[%c0_1, %c0_2] : memref<1x96xf32, #tpu.memory_space<vmem>>, vector<1x96xf32>
    %c0_3 = arith.constant 0 : index
    %c0_4 = arith.constant 0 : index
    %2 = vector.load %arg1[%c0_3, %c0_4] : memref<8x1xi32, #tpu.memory_space<vmem>>, vector<8x1xi32>
    %cst = arith.constant 0.000000e+00 : f32
    %3 = vector.broadcast %cst : f32 to vector<8x32xf32>
    %c7 = arith.constant 7 : index
    %c0_5 = arith.constant 0 : index
    %c0_6 = arith.constant 0 : index
    %4 = vector.load %arg0[%c7, %c0_5, %c0_6] : memref<8x8x96xf32, #tpu.memory_space<vmem>>, vector<1x8x96xf32>
    %5 = vector.shape_cast %4 : vector<1x8x96xf32> to vector<8x96xf32>
    %c7_i32 = arith.constant 7 : i32
    %6 = vector.broadcast %c7_i32 : i32 to vector<8x1xi32>
    %7 = arith.cmpi sgt, %2, %6 : vector<8x1xi32>
    %8 = arith.extui %7 : vector<8x1xi1> to vector<8x1xi32>
    %9 = arith.sitofp %8 : vector<8x1xi32> to vector<8x1xf32>
    %cst_7 = arith.constant dense<0.000000e+00> : vector<8x96xf32>
    %10 = tpu.matmul %3, %0, %cst_7 {dimension_numbers = #tpu.dot_dimension_numbers<[1], [0], [0], [1], [0, 0, 1, 1], [], []>} : vector<8x32xf32>, vector<32x96xf32>, vector<8x96xf32> -> vector<8x96xf32>
    %11 = vector.broadcast %1 : vector<1x96xf32> to vector<8x96xf32>
    %12 = arith.addf %10, %11 : vector<8x96xf32>
    %13 = vector.extract_strided_slice %5 {offsets = [0, 0], sizes = [8, 32], strides = [1, 1]} : vector<8x96xf32> to vector<8x32xf32>
    %14 = vector.extract_strided_slice %12 {offsets = [0, 0], sizes = [8, 32], strides = [1, 1]} : vector<8x96xf32> to vector<8x32xf32>
    %15 = arith.addf %13, %14 : vector<8x32xf32>
    %16 = arith.negf %15 : vector<8x32xf32>
    %17 = math.exp %16 : vector<8x32xf32>
    %cst_8 = arith.constant 1.000000e+00 : f32
    %18 = vector.broadcast %cst_8 : f32 to vector<8x32xf32>
    %19 = arith.addf %18, %17 : vector<8x32xf32>
    %20 = arith.divf %18, %19 : vector<8x32xf32>
    %21 = vector.extract_strided_slice %5 {offsets = [0, 32], sizes = [8, 32], strides = [1, 1]} : vector<8x96xf32> to vector<8x32xf32>
    %22 = vector.extract_strided_slice %12 {offsets = [0, 32], sizes = [8, 32], strides = [1, 1]} : vector<8x96xf32> to vector<8x32xf32>
    %23 = arith.addf %21, %22 : vector<8x32xf32>
    %24 = arith.negf %23 : vector<8x32xf32>
    %25 = math.exp %24 : vector<8x32xf32>
    %cst_9 = arith.constant 1.000000e+00 : f32
    %26 = vector.broadcast %cst_9 : f32 to vector<8x32xf32>
    %27 = arith.addf %26, %25 : vector<8x32xf32>
    %28 = arith.divf %26, %27 : vector<8x32xf32>
    %29 = vector.extract_strided_slice %5 {offsets = [0, 64], sizes = [8, 32], strides = [1, 1]} : vector<8x96xf32> to vector<8x32xf32>
    %30 = vector.extract_strided_slice %12 {offsets = [0, 64], sizes = [8, 32], strides = [1, 1]} : vector<8x96xf32> to vector<8x32xf32>
    %31 = arith.mulf %20, %30 : vector<8x32xf32>
    %32 = arith.addf %29, %31 : vector<8x32xf32>
    %33 = math.tanh %32 : vector<8x32xf32>
    %cst_10 = arith.constant 1.000000e+00 : f32
    %34 = vector.broadcast %cst_10 : f32 to vector<8x32xf32>
    %35 = arith.subf %34, %28 : vector<8x32xf32>
    %36 = arith.mulf %35, %33 : vector<8x32xf32>
    %37 = arith.mulf %28, %3 : vector<8x32xf32>
    %38 = arith.addf %36, %37 : vector<8x32xf32>
    %39 = vector.broadcast %9 : vector<8x1xf32> to vector<8x32xf32>
    %40 = arith.mulf %39, %38 : vector<8x32xf32>
    %cst_11 = arith.constant 1.000000e+00 : f32
    %41 = vector.broadcast %cst_11 : f32 to vector<8x1xf32>
    %42 = arith.subf %41, %9 : vector<8x1xf32>
    %43 = vector.broadcast %42 : vector<8x1xf32> to vector<8x32xf32>
    %44 = arith.mulf %43, %3 : vector<8x32xf32>
    %45 = arith.addf %40, %44 : vector<8x32xf32>
    %c6 = arith.constant 6 : index
    %c0_12 = arith.constant 0 : index
    %c0_13 = arith.constant 0 : index
    %46 = vector.load %arg0[%c6, %c0_12, %c0_13] : memref<8x8x96xf32, #tpu.memory_space<vmem>>, vector<1x8x96xf32>
    %47 = vector.shape_cast %46 : vector<1x8x96xf32> to vector<8x96xf32>
    %c6_i32 = arith.constant 6 : i32
    %48 = vector.broadcast %c6_i32 : i32 to vector<8x1xi32>
    %49 = arith.cmpi sgt, %2, %48 : vector<8x1xi32>
    %50 = arith.extui %49 : vector<8x1xi1> to vector<8x1xi32>
    %51 = arith.sitofp %50 : vector<8x1xi32> to vector<8x1xf32>
    %cst_14 = arith.constant dense<0.000000e+00> : vector<8x96xf32>
    %52 = tpu.matmul %45, %0, %cst_14 {dimension_numbers = #tpu.dot_dimension_numbers<[1], [0], [0], [1], [0, 0, 1, 1], [], []>} : vector<8x32xf32>, vector<32x96xf32>, vector<8x96xf32> -> vector<8x96xf32>
    %53 = vector.broadcast %1 : vector<1x96xf32> to vector<8x96xf32>
    %54 = arith.addf %52, %53 : vector<8x96xf32>
    %55 = vector.extract_strided_slice %47 {offsets = [0, 0], sizes = [8, 32], strides = [1, 1]} : vector<8x96xf32> to vector<8x32xf32>
    %56 = vector.extract_strided_slice %54 {offsets = [0, 0], sizes = [8, 32], strides = [1, 1]} : vector<8x96xf32> to vector<8x32xf32>
    %57 = arith.addf %55, %56 : vector<8x32xf32>
    %58 = arith.negf %57 : vector<8x32xf32>
    %59 = math.exp %58 : vector<8x32xf32>
    %cst_15 = arith.constant 1.000000e+00 : f32
    %60 = vector.broadcast %cst_15 : f32 to vector<8x32xf32>
    %61 = arith.addf %60, %59 : vector<8x32xf32>
    %62 = arith.divf %60, %61 : vector<8x32xf32>
    %63 = vector.extract_strided_slice %47 {offsets = [0, 32], sizes = [8, 32], strides = [1, 1]} : vector<8x96xf32> to vector<8x32xf32>
    %64 = vector.extract_strided_slice %54 {offsets = [0, 32], sizes = [8, 32], strides = [1, 1]} : vector<8x96xf32> to vector<8x32xf32>
    %65 = arith.addf %63, %64 : vector<8x32xf32>
    %66 = arith.negf %65 : vector<8x32xf32>
    %67 = math.exp %66 : vector<8x32xf32>
    %cst_16 = arith.constant 1.000000e+00 : f32
    %68 = vector.broadcast %cst_16 : f32 to vector<8x32xf32>
    %69 = arith.addf %68, %67 : vector<8x32xf32>
    %70 = arith.divf %68, %69 : vector<8x32xf32>
    %71 = vector.extract_strided_slice %47 {offsets = [0, 64], sizes = [8, 32], strides = [1, 1]} : vector<8x96xf32> to vector<8x32xf32>
    %72 = vector.extract_strided_slice %54 {offsets = [0, 64], sizes = [8, 32], strides = [1, 1]} : vector<8x96xf32> to vector<8x32xf32>
    %73 = arith.mulf %62, %72 : vector<8x32xf32>
    %74 = arith.addf %71, %73 : vector<8x32xf32>
    %75 = math.tanh %74 : vector<8x32xf32>
    %cst_17 = arith.constant 1.000000e+00 : f32
    %76 = vector.broadcast %cst_17 : f32 to vector<8x32xf32>
    %77 = arith.subf %76, %70 : vector<8x32xf32>
    %78 = arith.mulf %77, %75 : vector<8x32xf32>
    %79 = arith.mulf %70, %45 : vector<8x32xf32>
    %80 = arith.addf %78, %79 : vector<8x32xf32>
    %81 = vector.broadcast %51 : vector<8x1xf32> to vector<8x32xf32>
    %82 = arith.mulf %81, %80 : vector<8x32xf32>
    %cst_18 = arith.constant 1.000000e+00 : f32
    %83 = vector.broadcast %cst_18 : f32 to vector<8x1xf32>
    %84 = arith.subf %83, %51 : vector<8x1xf32>
    %85 = vector.broadcast %84 : vector<8x1xf32> to vector<8x32xf32>
    %86 = arith.mulf %85, %45 : vector<8x32xf32>
    %87 = arith.addf %82, %86 : vector<8x32xf32>
    %c5 = arith.constant 5 : index
    %c0_19 = arith.constant 0 : index
    %c0_20 = arith.constant 0 : index
    %88 = vector.load %arg0[%c5, %c0_19, %c0_20] : memref<8x8x96xf32, #tpu.memory_space<vmem>>, vector<1x8x96xf32>
    %89 = vector.shape_cast %88 : vector<1x8x96xf32> to vector<8x96xf32>
    %c5_i32 = arith.constant 5 : i32
    %90 = vector.broadcast %c5_i32 : i32 to vector<8x1xi32>
    %91 = arith.cmpi sgt, %2, %90 : vector<8x1xi32>
    %92 = arith.extui %91 : vector<8x1xi1> to vector<8x1xi32>
    %93 = arith.sitofp %92 : vector<8x1xi32> to vector<8x1xf32>
    %cst_21 = arith.constant dense<0.000000e+00> : vector<8x96xf32>
    %94 = tpu.matmul %87, %0, %cst_21 {dimension_numbers = #tpu.dot_dimension_numbers<[1], [0], [0], [1], [0, 0, 1, 1], [], []>} : vector<8x32xf32>, vector<32x96xf32>, vector<8x96xf32> -> vector<8x96xf32>
    %95 = vector.broadcast %1 : vector<1x96xf32> to vector<8x96xf32>
    %96 = arith.addf %94, %95 : vector<8x96xf32>
    %97 = vector.extract_strided_slice %89 {offsets = [0, 0], sizes = [8, 32], strides = [1, 1]} : vector<8x96xf32> to vector<8x32xf32>
    %98 = vector.extract_strided_slice %96 {offsets = [0, 0], sizes = [8, 32], strides = [1, 1]} : vector<8x96xf32> to vector<8x32xf32>
    %99 = arith.addf %97, %98 : vector<8x32xf32>
    %100 = arith.negf %99 : vector<8x32xf32>
    %101 = math.exp %100 : vector<8x32xf32>
    %cst_22 = arith.constant 1.000000e+00 : f32
    %102 = vector.broadcast %cst_22 : f32 to vector<8x32xf32>
    %103 = arith.addf %102, %101 : vector<8x32xf32>
    %104 = arith.divf %102, %103 : vector<8x32xf32>
    %105 = vector.extract_strided_slice %89 {offsets = [0, 32], sizes = [8, 32], strides = [1, 1]} : vector<8x96xf32> to vector<8x32xf32>
    %106 = vector.extract_strided_slice %96 {offsets = [0, 32], sizes = [8, 32], strides = [1, 1]} : vector<8x96xf32> to vector<8x32xf32>
    %107 = arith.addf %105, %106 : vector<8x32xf32>
    %108 = arith.negf %107 : vector<8x32xf32>
    %109 = math.exp %108 : vector<8x32xf32>
    %cst_23 = arith.constant 1.000000e+00 : f32
    %110 = vector.broadcast %cst_23 : f32 to vector<8x32xf32>
    %111 = arith.addf %110, %109 : vector<8x32xf32>
    %112 = arith.divf %110, %111 : vector<8x32xf32>
    %113 = vector.extract_strided_slice %89 {offsets = [0, 64], sizes = [8, 32], strides = [1, 1]} : vector<8x96xf32> to vector<8x32xf32>
    %114 = vector.extract_strided_slice %96 {offsets = [0, 64], sizes = [8, 32], strides = [1, 1]} : vector<8x96xf32> to vector<8x32xf32>
    %115 = arith.mulf %104, %114 : vector<8x32xf32>
    %116 = arith.addf %113, %115 : vector<8x32xf32>
    %117 = math.tanh %116 : vector<8x32xf32>
    %cst_24 = arith.constant 1.000000e+00 : f32
    %118 = vector.broadcast %cst_24 : f32 to vector<8x32xf32>
    %119 = arith.subf %118, %112 : vector<8x32xf32>
    %120 = arith.mulf %119, %117 : vector<8x32xf32>
    %121 = arith.mulf %112, %87 : vector<8x32xf32>
    %122 = arith.addf %120, %121 : vector<8x32xf32>
    %123 = vector.broadcast %93 : vector<8x1xf32> to vector<8x32xf32>
    %124 = arith.mulf %123, %122 : vector<8x32xf32>
    %cst_25 = arith.constant 1.000000e+00 : f32
    %125 = vector.broadcast %cst_25 : f32 to vector<8x1xf32>
    %126 = arith.subf %125, %93 : vector<8x1xf32>
    %127 = vector.broadcast %126 : vector<8x1xf32> to vector<8x32xf32>
    %128 = arith.mulf %127, %87 : vector<8x32xf32>
    %129 = arith.addf %124, %128 : vector<8x32xf32>
    %c4 = arith.constant 4 : index
    %c0_26 = arith.constant 0 : index
    %c0_27 = arith.constant 0 : index
    %130 = vector.load %arg0[%c4, %c0_26, %c0_27] : memref<8x8x96xf32, #tpu.memory_space<vmem>>, vector<1x8x96xf32>
    %131 = vector.shape_cast %130 : vector<1x8x96xf32> to vector<8x96xf32>
    %c4_i32 = arith.constant 4 : i32
    %132 = vector.broadcast %c4_i32 : i32 to vector<8x1xi32>
    %133 = arith.cmpi sgt, %2, %132 : vector<8x1xi32>
    %134 = arith.extui %133 : vector<8x1xi1> to vector<8x1xi32>
    %135 = arith.sitofp %134 : vector<8x1xi32> to vector<8x1xf32>
    %cst_28 = arith.constant dense<0.000000e+00> : vector<8x96xf32>
    %136 = tpu.matmul %129, %0, %cst_28 {dimension_numbers = #tpu.dot_dimension_numbers<[1], [0], [0], [1], [0, 0, 1, 1], [], []>} : vector<8x32xf32>, vector<32x96xf32>, vector<8x96xf32> -> vector<8x96xf32>
    %137 = vector.broadcast %1 : vector<1x96xf32> to vector<8x96xf32>
    %138 = arith.addf %136, %137 : vector<8x96xf32>
    %139 = vector.extract_strided_slice %131 {offsets = [0, 0], sizes = [8, 32], strides = [1, 1]} : vector<8x96xf32> to vector<8x32xf32>
    %140 = vector.extract_strided_slice %138 {offsets = [0, 0], sizes = [8, 32], strides = [1, 1]} : vector<8x96xf32> to vector<8x32xf32>
    %141 = arith.addf %139, %140 : vector<8x32xf32>
    %142 = arith.negf %141 : vector<8x32xf32>
    %143 = math.exp %142 : vector<8x32xf32>
    %cst_29 = arith.constant 1.000000e+00 : f32
    %144 = vector.broadcast %cst_29 : f32 to vector<8x32xf32>
    %145 = arith.addf %144, %143 : vector<8x32xf32>
    %146 = arith.divf %144, %145 : vector<8x32xf32>
    %147 = vector.extract_strided_slice %131 {offsets = [0, 32], sizes = [8, 32], strides = [1, 1]} : vector<8x96xf32> to vector<8x32xf32>
    %148 = vector.extract_strided_slice %138 {offsets = [0, 32], sizes = [8, 32], strides = [1, 1]} : vector<8x96xf32> to vector<8x32xf32>
    %149 = arith.addf %147, %148 : vector<8x32xf32>
    %150 = arith.negf %149 : vector<8x32xf32>
    %151 = math.exp %150 : vector<8x32xf32>
    %cst_30 = arith.constant 1.000000e+00 : f32
    %152 = vector.broadcast %cst_30 : f32 to vector<8x32xf32>
    %153 = arith.addf %152, %151 : vector<8x32xf32>
    %154 = arith.divf %152, %153 : vector<8x32xf32>
    %155 = vector.extract_strided_slice %131 {offsets = [0, 64], sizes = [8, 32], strides = [1, 1]} : vector<8x96xf32> to vector<8x32xf32>
    %156 = vector.extract_strided_slice %138 {offsets = [0, 64], sizes = [8, 32], strides = [1, 1]} : vector<8x96xf32> to vector<8x32xf32>
    %157 = arith.mulf %146, %156 : vector<8x32xf32>
    %158 = arith.addf %155, %157 : vector<8x32xf32>
    %159 = math.tanh %158 : vector<8x32xf32>
    %cst_31 = arith.constant 1.000000e+00 : f32
    %160 = vector.broadcast %cst_31 : f32 to vector<8x32xf32>
    %161 = arith.subf %160, %154 : vector<8x32xf32>
    %162 = arith.mulf %161, %159 : vector<8x32xf32>
    %163 = arith.mulf %154, %129 : vector<8x32xf32>
    %164 = arith.addf %162, %163 : vector<8x32xf32>
    %165 = vector.broadcast %135 : vector<8x1xf32> to vector<8x32xf32>
    %166 = arith.mulf %165, %164 : vector<8x32xf32>
    %cst_32 = arith.constant 1.000000e+00 : f32
    %167 = vector.broadcast %cst_32 : f32 to vector<8x1xf32>
    %168 = arith.subf %167, %135 : vector<8x1xf32>
    %169 = vector.broadcast %168 : vector<8x1xf32> to vector<8x32xf32>
    %170 = arith.mulf %169, %129 : vector<8x32xf32>
    %171 = arith.addf %166, %170 : vector<8x32xf32>
    %c3 = arith.constant 3 : index
    %c0_33 = arith.constant 0 : index
    %c0_34 = arith.constant 0 : index
    %172 = vector.load %arg0[%c3, %c0_33, %c0_34] : memref<8x8x96xf32, #tpu.memory_space<vmem>>, vector<1x8x96xf32>
    %173 = vector.shape_cast %172 : vector<1x8x96xf32> to vector<8x96xf32>
    %c3_i32 = arith.constant 3 : i32
    %174 = vector.broadcast %c3_i32 : i32 to vector<8x1xi32>
    %175 = arith.cmpi sgt, %2, %174 : vector<8x1xi32>
    %176 = arith.extui %175 : vector<8x1xi1> to vector<8x1xi32>
    %177 = arith.sitofp %176 : vector<8x1xi32> to vector<8x1xf32>
    %cst_35 = arith.constant dense<0.000000e+00> : vector<8x96xf32>
    %178 = tpu.matmul %171, %0, %cst_35 {dimension_numbers = #tpu.dot_dimension_numbers<[1], [0], [0], [1], [0, 0, 1, 1], [], []>} : vector<8x32xf32>, vector<32x96xf32>, vector<8x96xf32> -> vector<8x96xf32>
    %179 = vector.broadcast %1 : vector<1x96xf32> to vector<8x96xf32>
    %180 = arith.addf %178, %179 : vector<8x96xf32>
    %181 = vector.extract_strided_slice %173 {offsets = [0, 0], sizes = [8, 32], strides = [1, 1]} : vector<8x96xf32> to vector<8x32xf32>
    %182 = vector.extract_strided_slice %180 {offsets = [0, 0], sizes = [8, 32], strides = [1, 1]} : vector<8x96xf32> to vector<8x32xf32>
    %183 = arith.addf %181, %182 : vector<8x32xf32>
    %184 = arith.negf %183 : vector<8x32xf32>
    %185 = math.exp %184 : vector<8x32xf32>
    %cst_36 = arith.constant 1.000000e+00 : f32
    %186 = vector.broadcast %cst_36 : f32 to vector<8x32xf32>
    %187 = arith.addf %186, %185 : vector<8x32xf32>
    %188 = arith.divf %186, %187 : vector<8x32xf32>
    %189 = vector.extract_strided_slice %173 {offsets = [0, 32], sizes = [8, 32], strides = [1, 1]} : vector<8x96xf32> to vector<8x32xf32>
    %190 = vector.extract_strided_slice %180 {offsets = [0, 32], sizes = [8, 32], strides = [1, 1]} : vector<8x96xf32> to vector<8x32xf32>
    %191 = arith.addf %189, %190 : vector<8x32xf32>
    %192 = arith.negf %191 : vector<8x32xf32>
    %193 = math.exp %192 : vector<8x32xf32>
    %cst_37 = arith.constant 1.000000e+00 : f32
    %194 = vector.broadcast %cst_37 : f32 to vector<8x32xf32>
    %195 = arith.addf %194, %193 : vector<8x32xf32>
    %196 = arith.divf %194, %195 : vector<8x32xf32>
    %197 = vector.extract_strided_slice %173 {offsets = [0, 64], sizes = [8, 32], strides = [1, 1]} : vector<8x96xf32> to vector<8x32xf32>
    %198 = vector.extract_strided_slice %180 {offsets = [0, 64], sizes = [8, 32], strides = [1, 1]} : vector<8x96xf32> to vector<8x32xf32>
    %199 = arith.mulf %188, %198 : vector<8x32xf32>
    %200 = arith.addf %197, %199 : vector<8x32xf32>
    %201 = math.tanh %200 : vector<8x32xf32>
    %cst_38 = arith.constant 1.000000e+00 : f32
    %202 = vector.broadcast %cst_38 : f32 to vector<8x32xf32>
    %203 = arith.subf %202, %196 : vector<8x32xf32>
    %204 = arith.mulf %203, %201 : vector<8x32xf32>
    %205 = arith.mulf %196, %171 : vector<8x32xf32>
    %206 = arith.addf %204, %205 : vector<8x32xf32>
    %207 = vector.broadcast %177 : vector<8x1xf32> to vector<8x32xf32>
    %208 = arith.mulf %207, %206 : vector<8x32xf32>
    %cst_39 = arith.constant 1.000000e+00 : f32
    %209 = vector.broadcast %cst_39 : f32 to vector<8x1xf32>
    %210 = arith.subf %209, %177 : vector<8x1xf32>
    %211 = vector.broadcast %210 : vector<8x1xf32> to vector<8x32xf32>
    %212 = arith.mulf %211, %171 : vector<8x32xf32>
    %213 = arith.addf %208, %212 : vector<8x32xf32>
    %c2 = arith.constant 2 : index
    %c0_40 = arith.constant 0 : index
    %c0_41 = arith.constant 0 : index
    %214 = vector.load %arg0[%c2, %c0_40, %c0_41] : memref<8x8x96xf32, #tpu.memory_space<vmem>>, vector<1x8x96xf32>
    %215 = vector.shape_cast %214 : vector<1x8x96xf32> to vector<8x96xf32>
    %c2_i32 = arith.constant 2 : i32
    %216 = vector.broadcast %c2_i32 : i32 to vector<8x1xi32>
    %217 = arith.cmpi sgt, %2, %216 : vector<8x1xi32>
    %218 = arith.extui %217 : vector<8x1xi1> to vector<8x1xi32>
    %219 = arith.sitofp %218 : vector<8x1xi32> to vector<8x1xf32>
    %cst_42 = arith.constant dense<0.000000e+00> : vector<8x96xf32>
    %220 = tpu.matmul %213, %0, %cst_42 {dimension_numbers = #tpu.dot_dimension_numbers<[1], [0], [0], [1], [0, 0, 1, 1], [], []>} : vector<8x32xf32>, vector<32x96xf32>, vector<8x96xf32> -> vector<8x96xf32>
    %221 = vector.broadcast %1 : vector<1x96xf32> to vector<8x96xf32>
    %222 = arith.addf %220, %221 : vector<8x96xf32>
    %223 = vector.extract_strided_slice %215 {offsets = [0, 0], sizes = [8, 32], strides = [1, 1]} : vector<8x96xf32> to vector<8x32xf32>
    %224 = vector.extract_strided_slice %222 {offsets = [0, 0], sizes = [8, 32], strides = [1, 1]} : vector<8x96xf32> to vector<8x32xf32>
    %225 = arith.addf %223, %224 : vector<8x32xf32>
    %226 = arith.negf %225 : vector<8x32xf32>
    %227 = math.exp %226 : vector<8x32xf32>
    %cst_43 = arith.constant 1.000000e+00 : f32
    %228 = vector.broadcast %cst_43 : f32 to vector<8x32xf32>
    %229 = arith.addf %228, %227 : vector<8x32xf32>
    %230 = arith.divf %228, %229 : vector<8x32xf32>
    %231 = vector.extract_strided_slice %215 {offsets = [0, 32], sizes = [8, 32], strides = [1, 1]} : vector<8x96xf32> to vector<8x32xf32>
    %232 = vector.extract_strided_slice %222 {offsets = [0, 32], sizes = [8, 32], strides = [1, 1]} : vector<8x96xf32> to vector<8x32xf32>
    %233 = arith.addf %231, %232 : vector<8x32xf32>
    %234 = arith.negf %233 : vector<8x32xf32>
    %235 = math.exp %234 : vector<8x32xf32>
    %cst_44 = arith.constant 1.000000e+00 : f32
    %236 = vector.broadcast %cst_44 : f32 to vector<8x32xf32>
    %237 = arith.addf %236, %235 : vector<8x32xf32>
    %238 = arith.divf %236, %237 : vector<8x32xf32>
    %239 = vector.extract_strided_slice %215 {offsets = [0, 64], sizes = [8, 32], strides = [1, 1]} : vector<8x96xf32> to vector<8x32xf32>
    %240 = vector.extract_strided_slice %222 {offsets = [0, 64], sizes = [8, 32], strides = [1, 1]} : vector<8x96xf32> to vector<8x32xf32>
    %241 = arith.mulf %230, %240 : vector<8x32xf32>
    %242 = arith.addf %239, %241 : vector<8x32xf32>
    %243 = math.tanh %242 : vector<8x32xf32>
    %cst_45 = arith.constant 1.000000e+00 : f32
    %244 = vector.broadcast %cst_45 : f32 to vector<8x32xf32>
    %245 = arith.subf %244, %238 : vector<8x32xf32>
    %246 = arith.mulf %245, %243 : vector<8x32xf32>
    %247 = arith.mulf %238, %213 : vector<8x32xf32>
    %248 = arith.addf %246, %247 : vector<8x32xf32>
    %249 = vector.broadcast %219 : vector<8x1xf32> to vector<8x32xf32>
    %250 = arith.mulf %249, %248 : vector<8x32xf32>
    %cst_46 = arith.constant 1.000000e+00 : f32
    %251 = vector.broadcast %cst_46 : f32 to vector<8x1xf32>
    %252 = arith.subf %251, %219 : vector<8x1xf32>
    %253 = vector.broadcast %252 : vector<8x1xf32> to vector<8x32xf32>
    %254 = arith.mulf %253, %213 : vector<8x32xf32>
    %255 = arith.addf %250, %254 : vector<8x32xf32>
    %c1 = arith.constant 1 : index
    %c0_47 = arith.constant 0 : index
    %c0_48 = arith.constant 0 : index
    %256 = vector.load %arg0[%c1, %c0_47, %c0_48] : memref<8x8x96xf32, #tpu.memory_space<vmem>>, vector<1x8x96xf32>
    %257 = vector.shape_cast %256 : vector<1x8x96xf32> to vector<8x96xf32>
    %c1_i32 = arith.constant 1 : i32
    %258 = vector.broadcast %c1_i32 : i32 to vector<8x1xi32>
    %259 = arith.cmpi sgt, %2, %258 : vector<8x1xi32>
    %260 = arith.extui %259 : vector<8x1xi1> to vector<8x1xi32>
    %261 = arith.sitofp %260 : vector<8x1xi32> to vector<8x1xf32>
    %cst_49 = arith.constant dense<0.000000e+00> : vector<8x96xf32>
    %262 = tpu.matmul %255, %0, %cst_49 {dimension_numbers = #tpu.dot_dimension_numbers<[1], [0], [0], [1], [0, 0, 1, 1], [], []>} : vector<8x32xf32>, vector<32x96xf32>, vector<8x96xf32> -> vector<8x96xf32>
    %263 = vector.broadcast %1 : vector<1x96xf32> to vector<8x96xf32>
    %264 = arith.addf %262, %263 : vector<8x96xf32>
    %265 = vector.extract_strided_slice %257 {offsets = [0, 0], sizes = [8, 32], strides = [1, 1]} : vector<8x96xf32> to vector<8x32xf32>
    %266 = vector.extract_strided_slice %264 {offsets = [0, 0], sizes = [8, 32], strides = [1, 1]} : vector<8x96xf32> to vector<8x32xf32>
    %267 = arith.addf %265, %266 : vector<8x32xf32>
    %268 = arith.negf %267 : vector<8x32xf32>
    %269 = math.exp %268 : vector<8x32xf32>
    %cst_50 = arith.constant 1.000000e+00 : f32
    %270 = vector.broadcast %cst_50 : f32 to vector<8x32xf32>
    %271 = arith.addf %270, %269 : vector<8x32xf32>
    %272 = arith.divf %270, %271 : vector<8x32xf32>
    %273 = vector.extract_strided_slice %257 {offsets = [0, 32], sizes = [8, 32], strides = [1, 1]} : vector<8x96xf32> to vector<8x32xf32>
    %274 = vector.extract_strided_slice %264 {offsets = [0, 32], sizes = [8, 32], strides = [1, 1]} : vector<8x96xf32> to vector<8x32xf32>
    %275 = arith.addf %273, %274 : vector<8x32xf32>
    %276 = arith.negf %275 : vector<8x32xf32>
    %277 = math.exp %276 : vector<8x32xf32>
    %cst_51 = arith.constant 1.000000e+00 : f32
    %278 = vector.broadcast %cst_51 : f32 to vector<8x32xf32>
    %279 = arith.addf %278, %277 : vector<8x32xf32>
    %280 = arith.divf %278, %279 : vector<8x32xf32>
    %281 = vector.extract_strided_slice %257 {offsets = [0, 64], sizes = [8, 32], strides = [1, 1]} : vector<8x96xf32> to vector<8x32xf32>
    %282 = vector.extract_strided_slice %264 {offsets = [0, 64], sizes = [8, 32], strides = [1, 1]} : vector<8x96xf32> to vector<8x32xf32>
    %283 = arith.mulf %272, %282 : vector<8x32xf32>
    %284 = arith.addf %281, %283 : vector<8x32xf32>
    %285 = math.tanh %284 : vector<8x32xf32>
    %cst_52 = arith.constant 1.000000e+00 : f32
    %286 = vector.broadcast %cst_52 : f32 to vector<8x32xf32>
    %287 = arith.subf %286, %280 : vector<8x32xf32>
    %288 = arith.mulf %287, %285 : vector<8x32xf32>
    %289 = arith.mulf %280, %255 : vector<8x32xf32>
    %290 = arith.addf %288, %289 : vector<8x32xf32>
    %291 = vector.broadcast %261 : vector<8x1xf32> to vector<8x32xf32>
    %292 = arith.mulf %291, %290 : vector<8x32xf32>
    %cst_53 = arith.constant 1.000000e+00 : f32
    %293 = vector.broadcast %cst_53 : f32 to vector<8x1xf32>
    %294 = arith.subf %293, %261 : vector<8x1xf32>
    %295 = vector.broadcast %294 : vector<8x1xf32> to vector<8x32xf32>
    %296 = arith.mulf %295, %255 : vector<8x32xf32>
    %297 = arith.addf %292, %296 : vector<8x32xf32>
    %c0_54 = arith.constant 0 : index
    %c0_55 = arith.constant 0 : index
    %c0_56 = arith.constant 0 : index
    %298 = vector.load %arg0[%c0_54, %c0_55, %c0_56] : memref<8x8x96xf32, #tpu.memory_space<vmem>>, vector<1x8x96xf32>
    %299 = vector.shape_cast %298 : vector<1x8x96xf32> to vector<8x96xf32>
    %c0_i32 = arith.constant 0 : i32
    %300 = vector.broadcast %c0_i32 : i32 to vector<8x1xi32>
    %301 = arith.cmpi sgt, %2, %300 : vector<8x1xi32>
    %302 = arith.extui %301 : vector<8x1xi1> to vector<8x1xi32>
    %303 = arith.sitofp %302 : vector<8x1xi32> to vector<8x1xf32>
    %cst_57 = arith.constant dense<0.000000e+00> : vector<8x96xf32>
    %304 = tpu.matmul %297, %0, %cst_57 {dimension_numbers = #tpu.dot_dimension_numbers<[1], [0], [0], [1], [0, 0, 1, 1], [], []>} : vector<8x32xf32>, vector<32x96xf32>, vector<8x96xf32> -> vector<8x96xf32>
    %305 = vector.broadcast %1 : vector<1x96xf32> to vector<8x96xf32>
    %306 = arith.addf %304, %305 : vector<8x96xf32>
    %307 = vector.extract_strided_slice %299 {offsets = [0, 0], sizes = [8, 32], strides = [1, 1]} : vector<8x96xf32> to vector<8x32xf32>
    %308 = vector.extract_strided_slice %306 {offsets = [0, 0], sizes = [8, 32], strides = [1, 1]} : vector<8x96xf32> to vector<8x32xf32>
    %309 = arith.addf %307, %308 : vector<8x32xf32>
    %310 = arith.negf %309 : vector<8x32xf32>
    %311 = math.exp %310 : vector<8x32xf32>
    %cst_58 = arith.constant 1.000000e+00 : f32
    %312 = vector.broadcast %cst_58 : f32 to vector<8x32xf32>
    %313 = arith.addf %312, %311 : vector<8x32xf32>
    %314 = arith.divf %312, %313 : vector<8x32xf32>
    %315 = vector.extract_strided_slice %299 {offsets = [0, 32], sizes = [8, 32], strides = [1, 1]} : vector<8x96xf32> to vector<8x32xf32>
    %316 = vector.extract_strided_slice %306 {offsets = [0, 32], sizes = [8, 32], strides = [1, 1]} : vector<8x96xf32> to vector<8x32xf32>
    %317 = arith.addf %315, %316 : vector<8x32xf32>
    %318 = arith.negf %317 : vector<8x32xf32>
    %319 = math.exp %318 : vector<8x32xf32>
    %cst_59 = arith.constant 1.000000e+00 : f32
    %320 = vector.broadcast %cst_59 : f32 to vector<8x32xf32>
    %321 = arith.addf %320, %319 : vector<8x32xf32>
    %322 = arith.divf %320, %321 : vector<8x32xf32>
    %323 = vector.extract_strided_slice %299 {offsets = [0, 64], sizes = [8, 32], strides = [1, 1]} : vector<8x96xf32> to vector<8x32xf32>
    %324 = vector.extract_strided_slice %306 {offsets = [0, 64], sizes = [8, 32], strides = [1, 1]} : vector<8x96xf32> to vector<8x32xf32>
    %325 = arith.mulf %314, %324 : vector<8x32xf32>
    %326 = arith.addf %323, %325 : vector<8x32xf32>
    %327 = math.tanh %326 : vector<8x32xf32>
    %cst_60 = arith.constant 1.000000e+00 : f32
    %328 = vector.broadcast %cst_60 : f32 to vector<8x32xf32>
    %329 = arith.subf %328, %322 : vector<8x32xf32>
    %330 = arith.mulf %329, %327 : vector<8x32xf32>
    %331 = arith.mulf %322, %297 : vector<8x32xf32>
    %332 = arith.addf %330, %331 : vector<8x32xf32>
    %333 = vector.broadcast %303 : vector<8x1xf32> to vector<8x32xf32>
    %334 = arith.mulf %333, %332 : vector<8x32xf32>
    %cst_61 = arith.constant 1.000000e+00 : f32
    %335 = vector.broadcast %cst_61 : f32 to vector<8x1xf32>
    %336 = arith.subf %335, %303 : vector<8x1xf32>
    %337 = vector.broadcast %336 : vector<8x1xf32> to vector<8x32xf32>
    %338 = arith.mulf %337, %297 : vector<8x32xf32>
    %339 = arith.addf %334, %338 : vector<8x32xf32>
    %c0_62 = arith.constant 0 : index
    %c0_63 = arith.constant 0 : index
    %340 = vector.load %arg4[%c0_62, %c0_63] : memref<32x128xf32, #tpu.memory_space<vmem>>, vector<32x128xf32>
    %cst_64 = arith.constant dense<0.000000e+00> : vector<8x128xf32>
    %341 = tpu.matmul %339, %340, %cst_64 {dimension_numbers = #tpu.dot_dimension_numbers<[1], [0], [0], [1], [0, 0, 1, 1], [], []>} : vector<8x32xf32>, vector<32x128xf32>, vector<8x128xf32> -> vector<8x128xf32>
    %c0_65 = arith.constant 0 : index
    %c0_66 = arith.constant 0 : index
    %342 = vector.load %arg5[%c0_65, %c0_66] : memref<1x128xf32, #tpu.memory_space<vmem>>, vector<1x128xf32>
    %343 = vector.broadcast %342 : vector<1x128xf32> to vector<8x128xf32>
    %344 = arith.addf %341, %343 : vector<8x128xf32>
    %c0_67 = arith.constant 0 : index
    %c0_68 = arith.constant 0 : index
    %345 = vector.load %arg6[%c0_67, %c0_68] : memref<8x128xf32, #tpu.memory_space<vmem>>, vector<8x128xf32>
    tpu.vector_store %arg6[%c0_67, %c0_68], %344 {strides = array<i32>} : memref<8x128xf32, #tpu.memory_space<vmem>>, vector<8x128xf32>,
    return
  }
}

</mosaic_0001>

<llo_original>
// kernel: dac_forward.4
$region0: #{dac_forward.4}
  #allocation0 [shape = 'u32[]', space=smem, size = 0x4, offset = 0x4, fixed_abs, tag = 'smem constant byte address 0x4 - core index']
  #allocation1 [shape = 'u32[144,128]{1,0:T(1,128)}', space=vmem, size = 0x12000, scoped, tag = 'internal scratch']
  %s0 = inlined_call_operand.vmem [shape: f32[21,16], index: 0, kind: input, shape index: {}]
  %s1 = inlined_call_operand.vmem [shape: f32[16,192], index: 1, kind: input, shape index: {}]
  %s2 = inlined_call_operand.vmem [shape: f32[1,192], index: 2, kind: input, shape index: {}]
  %s3 = inlined_call_operand.vmem [shape: f32[21,192], index: 3, kind: output, shape index: {}]
  %s4 = sld [smem:[#allocation0]]
  $region22: #{dac_forward.4} parent=0
    _
  %s6 = ssub.s32 1, %s4
  %s7 = scalar_select 0, %s6, %s4
  // Predicated region
  $region2: #{dac_forward.4} parent=0 // pred_check
    _
  $region3: #{dac_forward.4} parent=0 // pred_check_branch
    %9 = sbr.rel (0) target = $region5
  $region4: #{dac_forward.4} parent=0 // pred_region
    _
  $region5: #{dac_forward.4} parent=0 // pred_fallthru
    _
  // Predicated region
  $region6: #{dac_forward.4} parent=0 // pred_check
    _
  $region7: #{dac_forward.4} parent=0 // pred_check_branch
    %11 = sbr.rel (0) target = $region9
  $region8: #{dac_forward.4} parent=0 // pred_region
    _
  $region9: #{dac_forward.4} parent=0 // pred_fallthru
    _
  // Predicated region
  $region10: #{dac_forward.4} parent=0 // pred_check
    _
  $region11: #{dac_forward.4} parent=0 // pred_check_branch
    %13 = sbr.rel (0) target = $region13
  $region12: #{dac_forward.4} parent=0 // pred_region
    _
  $region13: #{dac_forward.4} parent=0 // pred_fallthru
    _
  %v14 = vld [vmem:[%s0] sm:$0xff]
  %v15 = vld [vmem:[%s0 + $0x8] sm:$0xff]
  %v16 = vld [vmem:[%s0 + $0x10] sm:$0x1f]
  %v17 = vld [vmem:[%s1] sm:$0xff]
  %v18 = vld [vmem:[%s1 + $0x8] sm:$0xff]
  %v19 = vld [vmem:[%s1 + $0x10] sm:$0xff]
  %v20 = vld [vmem:[%s1 + $0x18] sm:$0xff]
  %v21 = vld [vmem:[%s2] sm:$0x3]
  %v23 = vlaneseq
  %v24 = vshrl.u32 %v23, 7
  %v25 = vsub.s32 0, %v24
  %v26 = vrot.slane %v21, %v25
  %v27 = vlaneseq
  %v28 = vshrl.u32 %v27, 7
  %v29 = vsub.s32 1, %v28
  %v30 = vrot.slane %v21, %v29
  %vm33 = vcmask 130048
  %v35 = vsel %vm33, %v14, 0
  %v38 = vsel %vm33, %v15, 0
  %v41 = vsel %vm33, %v16, 0
  %43 = vmatprep.subr.mxu0 %v18
  %44 = vmatpush1.msra.mxu0 %v17
  %45 = vmatprep.subr.mxu0 %v20
  %46 = vmatpush1.msra.mxu0 %v19
  %47 = vmatprep.subr.mxu0 0.0
  %48 = vmatpush1.msra.mxu0 0.0
  %49 = vmatprep.subr.mxu0 0.0
  %50 = vmatpush1.msra.mxu0 0.0
  %51 = vmatprep.subr.mxu0 0.0
  %52 = vmatpush1.msra.mxu0 0.0
  %53 = vmatprep.subr.mxu0 0.0
  %54 = vmatpush1.msra.mxu0 0.0
  %55 = vmatprep.subr.mxu0 0.0
  %56 = vmatpush1.msra.mxu0 0.0
  %57 = vmatprep.subr.mxu0 0.0
  %58 = vmatpush1.msra.mxu0 0.0
  %59 = vmatprep.subr.mxu0 0.0
  %60 = vmatpush1.msra.mxu0 0.0
  %61 = vmatprep.subr.mxu0 0.0
  %62 = vmatpush1.msra.mxu0 0.0
  %63 = vmatprep.subr.mxu0 0.0
  %64 = vmatpush1.msra.mxu0 0.0
  %65 = vmatprep.subr.mxu0 0.0
  %66 = vmatpush1.msra.mxu0 0.0
  %67 = vmatprep.subr.mxu0 0.0
  %68 = vmatpush1.msra.mxu0 0.0
  %69 = vmatprep.subr.mxu0 0.0
  %70 = vmatpush1.msra.mxu0 0.0
  %71 = vmatprep.subr.mxu0 0.0
  %72 = vmatpush1.msra.mxu0 0.0
  %73 = vmatprep.subr.mxu0 0.0
  %74 = vmatpush1.msra.mxu0 0.0
  %75 = vmatprep.subr.mxu0 0.0
  %76 = vmatpush1.msra.mxu0 0.0
  %77 = vmatprep.subr.mxu0 0.0
  %78 = vmatpush1.msra.mxu0 0.0
  %79 = vmatprep.subr.mxu0 0.0
  %80 = vmatpush1.msra.mxu0 0.0
  %81 = vmatprep.subr.mxu0 0.0
  %82 = vmatpush1.msra.mxu0 0.0
  %83 = vmatprep.subr.mxu0 0.0
  %84 = vmatpush1.msra.mxu0 0.0
  %85 = vmatprep.subr.mxu0 0.0
  %86 = vmatpush1.msra.mxu0 0.0
  %87 = vmatprep.subr.mxu0 0.0
  %88 = vmatpush1.msra.mxu0 0.0
  %89 = vmatprep.subr.mxu0 0.0
  %90 = vmatpush1.msra.mxu0 0.0
  %91 = vmatprep.subr.mxu0 0.0
  %92 = vmatpush1.msra.mxu0 0.0
  %93 = vmatprep.subr.mxu0 0.0
  %94 = vmatpush1.msra.mxu0 0.0
  %95 = vmatprep.subr.mxu0 0.0
  %96 = vmatpush1.msra.mxu0 0.0
  %97 = vmatprep.subr.mxu0 0.0
  %98 = vmatpush1.msra.mxu0 0.0
  %99 = vmatprep.subr.mxu0 0.0
  %100 = vmatpush1.msra.mxu0 0.0
  %101 = vmatprep.subr.mxu0 0.0
  %102 = vmatpush1.msra.mxu0 0.0
  %103 = vmatprep.subr.mxu0 0.0
  %104 = vmatpush1.msra.mxu0 0.0
  %105 = vmatprep.subr.mxu0 0.0
  %106 = vmatpush1.msra.mxu0 0.0
  %107 = vmatprep.mubr.f32.mxu0 0.0
  %108 = vmatmul.mubr.f32.gmra.mrb[0].mxu0 %v35
  %v109 = vpop.f32.mrb[0].mxu0
  %v110 = vadd.f32 %v26, %v109
  %v111 = vpop.f32.mrb[0].mxu0
  %v112 = vadd.f32 %v30, %v111
  %113 = vmatprep.mubr.f32.mxu0 0.0
  %114 = vmatmul.mubr.f32.gmra.mrb[0].mxu0 %v38
  %v115 = vpop.f32.mrb[0].mxu0
  %v116 = vadd.f32 %v26, %v115
  %v117 = vpop.f32.mrb[0].mxu0
  %v118 = vadd.f32 %v30, %v117
  %119 = vmatprep.mubr.f32.mxu0 0.0
  %120 = vmatmul.mubr.f32.gmra.mrb[0].mxu0 %v41
  %v121 = vpop.f32.mrb[0].mxu0
  %v122 = vadd.f32 %v26, %v121
  %v123 = vpop.f32.mrb[0].mxu0
  %v124 = vadd.f32 %v30, %v123
  %125 = vdwg.mxu0
  %126 = vst [vmem:[%s3] sm:$0xff] %v110
  %vm127 = vcmask 523264
  %128 = vst.msk [vmem:[%s3 + $0x8] sm:$0xff] %vm127, %v112
  %129 = vst [vmem:[%s3 + $0x10] sm:$0xff] %v116
  %130 = vst.msk [vmem:[%s3 + $0x18] sm:$0xff] %vm127, %v118
  %131 = vst [vmem:[%s3 + $0x20] sm:$0x1f] %v122
  %vm132 = vcmask 520192
  %133 = vst.msk [vmem:[%s3 + $0x28] sm:$0x1f] %vm132, %v124
  // Predicated region
  $region14: #{dac_forward.4} parent=0 // pred_check
    _
  $region15: #{dac_forward.4} parent=0 // pred_check_branch
    %135 = sbr.rel (0) target = $region17
  $region16: #{dac_forward.4} parent=0 // pred_region
    _
  $region17: #{dac_forward.4} parent=0 // pred_fallthru
    _
  // Predicated region
  $region18: #{dac_forward.4} parent=0 // pred_check
    _
  $region19: #{dac_forward.4} parent=0 // pred_check_branch
    %137 = sbr.rel (0) target = $region21
  $region20: #{dac_forward.4} parent=0 // pred_region
    _
  $region21: #{dac_forward.4} parent=0 // pred_fallthru
    _

// kernel: dac_forward.6
$region0: #{dac_forward.6}
  #allocation0 [shape = 'u32[]', space=smem, size = 0x4, offset = 0x4, fixed_abs, tag = 'smem constant byte address 0x4 - core index']
  #allocation1 [shape = 'u32[144,128]{1,0:T(1,128)}', space=vmem, size = 0x12000, scoped, tag = 'internal scratch']
  %s0 = inlined_call_operand.vmem [shape: f32[64,32], index: 0, kind: input, shape index: {}]
  %s1 = inlined_call_operand.vmem [shape: f32[64,32], index: 1, kind: input, shape index: {}]
  %s2 = inlined_call_operand.vmem [shape: f32[32,96], index: 2, kind: input, shape index: {}]
  %s3 = inlined_call_operand.vmem [shape: f32[32,96], index: 3, kind: input, shape index: {}]
  %s4 = inlined_call_operand.vmem [shape: f32[1,96], index: 4, kind: input, shape index: {}]
  %s5 = inlined_call_operand.vmem [shape: f32[64,96], index: 5, kind: output, shape index: {}]
  %s6 = sld [smem:[#allocation0]]
  $region30: #{dac_forward.6} parent=0
    _
  %s8 = ssub.s32 1, %s6
  %s9 = scalar_select 0, %s8, %s6
  // Predicated region
  $region2: #{dac_forward.6} parent=0 // pred_check
    _
  $region3: #{dac_forward.6} parent=0 // pred_check_branch
    %11 = sbr.rel (0) target = $region5
  $region4: #{dac_forward.6} parent=0 // pred_region
    _
  $region5: #{dac_forward.6} parent=0 // pred_fallthru
    _
  // Predicated region
  $region6: #{dac_forward.6} parent=0 // pred_check
    _
  $region7: #{dac_forward.6} parent=0 // pred_check_branch
    %13 = sbr.rel (0) target = $region9
  $region8: #{dac_forward.6} parent=0 // pred_region
    _
  $region9: #{dac_forward.6} parent=0 // pred_fallthru
    _
  // Predicated region
  $region10: #{dac_forward.6} parent=0 // pred_check
    _
  $region11: #{dac_forward.6} parent=0 // pred_check_branch
    %15 = sbr.rel (0) target = $region13
  $region12: #{dac_forward.6} parent=0 // pred_region
    _
  $region13: #{dac_forward.6} parent=0 // pred_fallthru
    _
  // Predicated region
  $region14: #{dac_forward.6} parent=0 // pred_check
    _
  $region15: #{dac_forward.6} parent=0 // pred_check_branch
    %17 = sbr.rel (0) target = $region17
  $region16: #{dac_forward.6} parent=0 // pred_region
    _
  $region17: #{dac_forward.6} parent=0 // pred_fallthru
    _
  // Predicated region
  $region18: #{dac_forward.6} parent=0 // pred_check
    _
  $region19: #{dac_forward.6} parent=0 // pred_check_branch
    %19 = sbr.rel (0) target = $region21
  $region20: #{dac_forward.6} parent=0 // pred_region
    _
  $region21: #{dac_forward.6} parent=0 // pred_fallthru
    _
  %v20 = vld [vmem:[%s0] sm:$0xff]
  %v21 = vld [vmem:[%s0 + $0x8] sm:$0xff]
  %v22 = vld [vmem:[%s0 + $0x10] sm:$0xff]
  %v23 = vld [vmem:[%s0 + $0x18] sm:$0xff]
  %v24 = vld [vmem:[%s0 + $0x20] sm:$0xff]
  %v25 = vld [vmem:[%s0 + $0x28] sm:$0xff]
  %v26 = vld [vmem:[%s0 + $0x30] sm:$0xff]
  %v27 = vld [vmem:[%s0 + $0x38] sm:$0xff]
  %v28 = vld [vmem:[%s2] sm:$0xff]
  %v29 = vld [vmem:[%s2 + $0x8] sm:$0xff]
  %v30 = vld [vmem:[%s2 + $0x10] sm:$0xff]
  %v31 = vld [vmem:[%s2 + $0x18] sm:$0xff]
  %v32 = vld [vmem:[%s1] sm:$0xff]
  %v33 = vld [vmem:[%s1 + $0x8] sm:$0xff]
  %v34 = vld [vmem:[%s1 + $0x10] sm:$0xff]
  %v35 = vld [vmem:[%s1 + $0x18] sm:$0xff]
  %v36 = vld [vmem:[%s1 + $0x20] sm:$0xff]
  %v37 = vld [vmem:[%s1 + $0x28] sm:$0xff]
  %v38 = vld [vmem:[%s1 + $0x30] sm:$0xff]
  %v39 = vld [vmem:[%s1 + $0x38] sm:$0xff]
  %v40 = vld [vmem:[%s3] sm:$0xff]
  %v41 = vld [vmem:[%s3 + $0x8] sm:$0xff]
  %v42 = vld [vmem:[%s3 + $0x10] sm:$0xff]
  %v43 = vld [vmem:[%s3 + $0x18] sm:$0xff]
  %vm44 = vcmask 261120
  %v46 = vsel %vm44, %v32, 0
  %v49 = vsel %vm44, %v33, 0
  %v52 = vsel %vm44, %v34, 0
  %v55 = vsel %vm44, %v35, 0
  %v58 = vsel %vm44, %v36, 0
  %v61 = vsel %vm44, %v37, 0
  %v64 = vsel %vm44, %v38, 0
  %v67 = vsel %vm44, %v39, 0
  %69 = vmatprep.subr.mxu0 0.0
  %70 = vmatpush1.msra.mxu0 %v40
  %71 = vmatprep.subr.mxu0 0.0
  %72 = vmatpush1.msra.mxu0 %v41
  %73 = vmatprep.subr.mxu0 0.0
  %74 = vmatpush1.msra.mxu0 %v42
  %75 = vmatprep.subr.mxu0 0.0
  %76 = vmatpush1.msra.mxu0 %v43
  %77 = vmatprep.subr.mxu0 0.0
  %78 = vmatpush1.msra.mxu0 0.0
  %79 = vmatprep.subr.mxu0 0.0
  %80 = vmatpush1.msra.mxu0 0.0
  %81 = vmatprep.subr.mxu0 0.0
  %82 = vmatpush1.msra.mxu0 0.0
  %83 = vmatprep.subr.mxu0 0.0
  %84 = vmatpush1.msra.mxu0 0.0
  %85 = vmatprep.subr.mxu0 0.0
  %86 = vmatpush1.msra.mxu0 0.0
  %87 = vmatprep.subr.mxu0 0.0
  %88 = vmatpush1.msra.mxu0 0.0
  %89 = vmatprep.subr.mxu0 0.0
  %90 = vmatpush1.msra.mxu0 0.0
  %91 = vmatprep.subr.mxu0 0.0
  %92 = vmatpush1.msra.mxu0 0.0
  %93 = vmatprep.subr.mxu0 0.0
  %94 = vmatpush1.msra.mxu0 0.0
  %95 = vmatprep.subr.mxu0 0.0
  %96 = vmatpush1.msra.mxu0 0.0
  %97 = vmatprep.subr.mxu0 0.0
  %98 = vmatpush1.msra.mxu0 0.0
  %99 = vmatprep.subr.mxu0 0.0
  %100 = vmatpush1.msra.mxu0 0.0
  %101 = vmatprep.subr.mxu0 0.0
  %102 = vmatpush1.msra.mxu0 0.0
  %103 = vmatprep.subr.mxu0 0.0
  %104 = vmatpush1.msra.mxu0 0.0
  %105 = vmatprep.subr.mxu0 0.0
  %106 = vmatpush1.msra.mxu0 0.0
  %107 = vmatprep.subr.mxu0 0.0
  %108 = vmatpush1.msra.mxu0 0.0
  %109 = vmatprep.subr.mxu0 0.0
  %110 = vmatpush1.msra.mxu0 0.0
  %111 = vmatprep.subr.mxu0 0.0
  %112 = vmatpush1.msra.mxu0 0.0
  %113 = vmatprep.subr.mxu0 0.0
  %114 = vmatpush1.msra.mxu0 0.0
  %115 = vmatprep.subr.mxu0 0.0
  %116 = vmatpush1.msra.mxu0 0.0
  %117 = vmatprep.subr.mxu0 0.0
  %118 = vmatpush1.msra.mxu0 0.0
  %119 = vmatprep.subr.mxu0 0.0
  %120 = vmatpush1.msra.mxu0 0.0
  %121 = vmatprep.subr.mxu0 0.0
  %122 = vmatpush1.msra.mxu0 0.0
  %123 = vmatprep.subr.mxu0 0.0
  %124 = vmatpush1.msra.mxu0 0.0
  %125 = vmatprep.subr.mxu0 0.0
  %126 = vmatpush1.msra.mxu0 0.0
  %127 = vmatprep.subr.mxu0 0.0
  %128 = vmatpush1.msra.mxu0 0.0
  %129 = vmatprep.subr.mxu0 0.0
  %130 = vmatpush1.msra.mxu0 0.0
  %131 = vmatprep.subr.mxu0 0.0
  %132 = vmatpush1.msra.mxu0 0.0
  %133 = vmatprep.mubr.f32.mxu0 0.0
  %134 = vmatmul.mubr.f32.gmra.mrb[0].mxu0 %v46
  %v135 = vpop.f32.mrb[0].mxu0
  %v136 = vadd.f32 0.0, %v135
  %v137 = vpop.f32.mrb[0].mxu0
  %138 = vmatprep.mubr.f32.mxu0 0.0
  %139 = vmatmul.mubr.f32.gmra.mrb[0].mxu0 %v49
  %v140 = vpop.f32.mrb[0].mxu0
  %v141 = vadd.f32 0.0, %v140
  %v142 = vpop.f32.mrb[0].mxu0
  %143 = vmatprep.mubr.f32.mxu0 0.0
  %144 = vmatmul.mubr.f32.gmra.mrb[0].mxu0 %v52
  %v145 = vpop.f32.mrb[0].mxu0
  %v146 = vadd.f32 0.0, %v145
  %v147 = vpop.f32.mrb[0].mxu0
  %148 = vmatprep.mubr.f32.mxu0 0.0
  %149 = vmatmul.mubr.f32.gmra.mrb[0].mxu0 %v55
  %v150 = vpop.f32.mrb[0].mxu0
  %v151 = vadd.f32 0.0, %v150
  %v152 = vpop.f32.mrb[0].mxu0
  %153 = vmatprep.mubr.f32.mxu0 0.0
  %154 = vmatmul.mubr.f32.gmra.mrb[0].mxu0 %v58
  %v155 = vpop.f32.mrb[0].mxu0
  %v156 = vadd.f32 0.0, %v155
  %v157 = vpop.f32.mrb[0].mxu0
  %158 = vmatprep.mubr.f32.mxu0 0.0
  %159 = vmatmul.mubr.f32.gmra.mrb[0].mxu0 %v61
  %v160 = vpop.f32.mrb[0].mxu0
  %v161 = vadd.f32 0.0, %v160
  %v162 = vpop.f32.mrb[0].mxu0
  %163 = vmatprep.mubr.f32.mxu0 0.0
  %164 = vmatmul.mubr.f32.gmra.mrb[0].mxu0 %v64
  %v165 = vpop.f32.mrb[0].mxu0
  %v166 = vadd.f32 0.0, %v165
  %v167 = vpop.f32.mrb[0].mxu0
  %168 = vmatprep.mubr.f32.mxu0 0.0
  %169 = vmatmul.mubr.f32.gmra.mrb[0].mxu0 %v67
  %v170 = vpop.f32.mrb[0].mxu0
  %v171 = vadd.f32 0.0, %v170
  %v172 = vpop.f32.mrb[0].mxu0
  %173 = vdwg.mxu0
  %v175 = vsel %vm44, %v20, 0
  %v178 = vsel %vm44, %v21, 0
  %v181 = vsel %vm44, %v22, 0
  %v184 = vsel %vm44, %v23, 0
  %v187 = vsel %vm44, %v24, 0
  %v190 = vsel %vm44, %v25, 0
  %v193 = vsel %vm44, %v26, 0
  %v196 = vsel %vm44, %v27, 0
  %198 = vmatprep.subr.mxu0 0.0
  %199 = vmatpush1.msra.mxu0 %v28
  %200 = vmatprep.subr.mxu0 0.0
  %201 = vmatpush1.msra.mxu0 %v29
  %202 = vmatprep.subr.mxu0 0.0
  %203 = vmatpush1.msra.mxu0 %v30
  %204 = vmatprep.subr.mxu0 0.0
  %205 = vmatpush1.msra.mxu0 %v31
  %206 = vmatprep.subr.mxu0 0.0
  %207 = vmatpush1.msra.mxu0 0.0
  %208 = vmatprep.subr.mxu0 0.0
  %209 = vmatpush1.msra.mxu0 0.0
  %210 = vmatprep.subr.mxu0 0.0
  %211 = vmatpush1.msra.mxu0 0.0
  %212 = vmatprep.subr.mxu0 0.0
  %213 = vmatpush1.msra.mxu0 0.0
  %214 = vmatprep.subr.mxu0 0.0
  %215 = vmatpush1.msra.mxu0 0.0
  %216 = vmatprep.subr.mxu0 0.0
  %217 = vmatpush1.msra.mxu0 0.0
  %218 = vmatprep.subr.mxu0 0.0
  %219 = vmatpush1.msra.mxu0 0.0
  %220 = vmatprep.subr.mxu0 0.0
  %221 = vmatpush1.msra.mxu0 0.0
  %222 = vmatprep.subr.mxu0 0.0
  %223 = vmatpush1.msra.mxu0 0.0
  %224 = vmatprep.subr.mxu0 0.0
  %225 = vmatpush1.msra.mxu0 0.0
  %226 = vmatprep.subr.mxu0 0.0
  %227 = vmatpush1.msra.mxu0 0.0
  %228 = vmatprep.subr.mxu0 0.0
  %229 = vmatpush1.msra.mxu0 0.0
  %230 = vmatprep.subr.mxu0 0.0
  %231 = vmatpush1.msra.mxu0 0.0
  %232 = vmatprep.subr.mxu0 0.0
  %233 = vmatpush1.msra.mxu0 0.0
  %234 = vmatprep.subr.mxu0 0.0
  %235 = vmatpush1.msra.mxu0 0.0
  %236 = vmatprep.subr.mxu0 0.0
  %237 = vmatpush1.msra.mxu0 0.0
  %238 = vmatprep.subr.mxu0 0.0
  %239 = vmatpush1.msra.mxu0 0.0
  %240 = vmatprep.subr.mxu0 0.0
  %241 = vmatpush1.msra.mxu0 0.0
  %242 = vmatprep.subr.mxu0 0.0
  %243 = vmatpush1.msra.mxu0 0.0
  %244 = vmatprep.subr.mxu0 0.0
  %245 = vmatpush1.msra.mxu0 0.0
  %246 = vmatprep.subr.mxu0 0.0
  %247 = vmatpush1.msra.mxu0 0.0
  %248 = vmatprep.subr.mxu0 0.0
  %249 = vmatpush1.msra.mxu0 0.0
  %250 = vmatprep.subr.mxu0 0.0
  %251 = vmatpush1.msra.mxu0 0.0
  %252 = vmatprep.subr.mxu0 0.0
  %253 = vmatpush1.msra.mxu0 0.0
  %254 = vmatprep.subr.mxu0 0.0
  %255 = vmatpush1.msra.mxu0 0.0
  %256 = vmatprep.subr.mxu0 0.0
  %257 = vmatpush1.msra.mxu0 0.0
  %258 = vmatprep.subr.mxu0 0.0
  %259 = vmatpush1.msra.mxu0 0.0
  %260 = vmatprep.subr.mxu0 0.0
  %261 = vmatpush1.msra.mxu0 0.0
  %262 = vmatprep.mubr.f32.mxu0 0.0
  %263 = vmatmul.mubr.f32.gmra.mrb[0].mxu0 %v175
  %v264 = vpop.f32.mrb[0].mxu0
  %v265 = vadd.f32 %v136, %v264
  %v266 = vpop.f32.mrb[0].mxu0
  %267 = vmatprep.mubr.f32.mxu0 0.0
  %268 = vmatmul.mubr.f32.gmra.mrb[0].mxu0 %v178
  %v269 = vpop.f32.mrb[0].mxu0
  %v270 = vadd.f32 %v141, %v269
  %v271 = vpop.f32.mrb[0].mxu0
  %272 = vmatprep.mubr.f32.mxu0 0.0
  %273 = vmatmul.mubr.f32.gmra.mrb[0].mxu0 %v181
  %v274 = vpop.f32.mrb[0].mxu0
  %v275 = vadd.f32 %v146, %v274
  %v276 = vpop.f32.mrb[0].mxu0
  %277 = vmatprep.mubr.f32.mxu0 0.0
  %278 = vmatmul.mubr.f32.gmra.mrb[0].mxu0 %v184
  %v279 = vpop.f32.mrb[0].mxu0
  %v280 = vadd.f32 %v151, %v279
  %v281 = vpop.f32.mrb[0].mxu0
  %282 = vmatprep.mubr.f32.mxu0 0.0
  %283 = vmatmul.mubr.f32.gmra.mrb[0].mxu0 %v187
  %v284 = vpop.f32.mrb[0].mxu0
  %v285 = vadd.f32 %v156, %v284
  %v286 = vpop.f32.mrb[0].mxu0
  %287 = vmatprep.mubr.f32.mxu0 0.0
  %288 = vmatmul.mubr.f32.gmra.mrb[0].mxu0 %v190
  %v289 = vpop.f32.mrb[0].mxu0
  %v290 = vadd.f32 %v161, %v289
  %v291 = vpop.f32.mrb[0].mxu0
  %292 = vmatprep.mubr.f32.mxu0 0.0
  %293 = vmatmul.mubr.f32.gmra.mrb[0].mxu0 %v193
  %v294 = vpop.f32.mrb[0].mxu0
  %v295 = vadd.f32 %v166, %v294
  %v296 = vpop.f32.mrb[0].mxu0
  %297 = vmatprep.mubr.f32.mxu0 0.0
  %298 = vmatmul.mubr.f32.gmra.mrb[0].mxu0 %v196
  %v299 = vpop.f32.mrb[0].mxu0
  %v300 = vadd.f32 %v171, %v299
  %v301 = vpop.f32.mrb[0].mxu0
  %302 = vdwg.mxu0
  %v303 = vld [vmem:[%s4] sm:$0x1]
  %v305 = vlaneseq
  %v306 = vshrl.u32 %v305, 7
  %v307 = vsub.s32 0, %v306
  %v308 = vrot.slane %v303, %v307
  %v310 = vadd.f32 %v265, %v308
  %v311 = vadd.f32 %v270, %v308
  %v312 = vadd.f32 %v275, %v308
  %v313 = vadd.f32 %v280, %v308
  %v314 = vadd.f32 %v285, %v308
  %v315 = vadd.f32 %v290, %v308
  %v316 = vadd.f32 %v295, %v308
  %v317 = vadd.f32 %v300, %v308
  %vm318 = vcmask 785408
  %319 = vst.msk [vmem:[%s5] sm:$0xff] %vm318, %v310
  %320 = vst.msk [vmem:[%s5 + $0x8] sm:$0xff] %vm318, %v311
  %321 = vst.msk [vmem:[%s5 + $0x10] sm:$0xff] %vm318, %v312
  %322 = vst.msk [vmem:[%s5 + $0x18] sm:$0xff] %vm318, %v313
  %323 = vst.msk [vmem:[%s5 + $0x20] sm:$0xff] %vm318, %v314
  %324 = vst.msk [vmem:[%s5 + $0x28] sm:$0xff] %vm318, %v315
  %325 = vst.msk [vmem:[%s5 + $0x30] sm:$0xff] %vm318, %v316
  %326 = vst.msk [vmem:[%s5 + $0x38] sm:$0xff] %vm318, %v317
  // Predicated region
  $region22: #{dac_forward.6} parent=0 // pred_check
    _
  $region23: #{dac_forward.6} parent=0 // pred_check_branch
    %328 = sbr.rel (0) target = $region25
  $region24: #{dac_forward.6} parent=0 // pred_region
    _
  $region25: #{dac_forward.6} parent=0 // pred_fallthru
    _
  // Predicated region
  $region26: #{dac_forward.6} parent=0 // pred_check
    _
  $region27: #{dac_forward.6} parent=0 // pred_check_branch
    %330 = sbr.rel (0) target = $region29
  $region28: #{dac_forward.6} parent=0 // pred_region
    _
  $region29: #{dac_forward.6} parent=0 // pred_fallthru
    _

// kernel: dac_forward.7
$region0: #{dac_forward.7}
  #allocation0 [shape = 'u32[]', space=smem, size = 0x4, offset = 0x4, fixed_abs, tag = 'smem constant byte address 0x4 - core index']
  #allocation1 [shape = 'u32[144,128]{1,0:T(1,128)}', space=vmem, size = 0x12000, scoped, tag = 'internal scratch']
  %s0 = inlined_call_operand.vmem [shape: f32[8,8,96], index: 0, kind: input, shape index: {}]
  %s1 = inlined_call_operand.vmem [shape: s32[8,1], index: 1, kind: input, shape index: {}]
  %s2 = inlined_call_operand.vmem [shape: f32[32,96], index: 2, kind: input, shape index: {}]
  %s3 = inlined_call_operand.vmem [shape: f32[1,96], index: 3, kind: input, shape index: {}]
  %s4 = inlined_call_operand.vmem [shape: f32[32,128], index: 4, kind: input, shape index: {}]
  %s5 = inlined_call_operand.vmem [shape: f32[1,128], index: 5, kind: input, shape index: {}]
  %s6 = inlined_call_operand.vmem [shape: f32[8,128], index: 6, kind: output, shape index: {}]
  %s7 = sld [smem:[#allocation0]]
  $region34: #{dac_forward.7} parent=0
    _
  %s9 = ssub.s32 1, %s7
  %s10 = scalar_select 0, %s9, %s7
  // Predicated region
  $region2: #{dac_forward.7} parent=0 // pred_check
    _
  $region3: #{dac_forward.7} parent=0 // pred_check_branch
    %12 = sbr.rel (0) target = $region5
  $region4: #{dac_forward.7} parent=0 // pred_region
    _
  $region5: #{dac_forward.7} parent=0 // pred_fallthru
    _
  // Predicated region
  $region6: #{dac_forward.7} parent=0 // pred_check
    _
  $region7: #{dac_forward.7} parent=0 // pred_check_branch
    %14 = sbr.rel (0) target = $region9
  $region8: #{dac_forward.7} parent=0 // pred_region
    _
  $region9: #{dac_forward.7} parent=0 // pred_fallthru
    _
  // Predicated region
  $region10: #{dac_forward.7} parent=0 // pred_check
    _
  $region11: #{dac_forward.7} parent=0 // pred_check_branch
    %16 = sbr.rel (0) target = $region13
  $region12: #{dac_forward.7} parent=0 // pred_region
    _
  $region13: #{dac_forward.7} parent=0 // pred_fallthru
    _
  // Predicated region
  $region14: #{dac_forward.7} parent=0 // pred_check
    _
  $region15: #{dac_forward.7} parent=0 // pred_check_branch
    %18 = sbr.rel (0) target = $region17
  $region16: #{dac_forward.7} parent=0 // pred_region
    _
  $region17: #{dac_forward.7} parent=0 // pred_fallthru
    _
  // Predicated region
  $region18: #{dac_forward.7} parent=0 // pred_check
    _
  $region19: #{dac_forward.7} parent=0 // pred_check_branch
    %20 = sbr.rel (0) target = $region21
  $region20: #{dac_forward.7} parent=0 // pred_region
    _
  $region21: #{dac_forward.7} parent=0 // pred_fallthru
    _
  // Predicated region
  $region22: #{dac_forward.7} parent=0 // pred_check
    _
  $region23: #{dac_forward.7} parent=0 // pred_check_branch
    %22 = sbr.rel (0) target = $region25
  $region24: #{dac_forward.7} parent=0 // pred_region
    _
  $region25: #{dac_forward.7} parent=0 // pred_fallthru
    _
  %v23 = vld [vmem:[%s2] sm:$0xff]
  %v24 = vld [vmem:[%s2 + $0x8] sm:$0xff]
  %v25 = vld [vmem:[%s2 + $0x10] sm:$0xff]
  %v26 = vld [vmem:[%s2 + $0x18] sm:$0xff]
  %v27 = vld [vmem:[%s3] sm:$0x1]
  %v28 = vld [vmem:[%s1] sm:$0xff]
  %s29 = scalar_lea.vmem %s0, 56
  %v30 = vld [vmem:[%s29] sm:$0xff]
  %vm31 = vcmp.gt.s32.totalorder %v28, 7
  %v32 = vsel %vm31, 1, 0
  %v33 = vcvt.s32.f32 %v32
  %v35 = vlaneseq
  %v36 = vshrl.u32 %v35, 7
  %v37 = vsub.s32 0, %v36
  %v38 = vrot.slane %v27, %v37
  %vm40 = vcmask 261120
  %v42 = vsel %vm40, 0.0, 0
  %44 = vmatprep.subr.mxu0 0.0
  %45 = vmatpush1.msra.mxu0 %v23
  %46 = vmatprep.subr.mxu0 0.0
  %47 = vmatpush1.msra.mxu0 %v24
  %48 = vmatprep.subr.mxu0 0.0
  %49 = vmatpush1.msra.mxu0 %v25
  %50 = vmatprep.subr.mxu0 0.0
  %51 = vmatpush1.msra.mxu0 %v26
  %52 = vmatprep.subr.mxu0 0.0
  %53 = vmatpush1.msra.mxu0 0.0
  %54 = vmatprep.subr.mxu0 0.0
  %55 = vmatpush1.msra.mxu0 0.0
  %56 = vmatprep.subr.mxu0 0.0
  %57 = vmatpush1.msra.mxu0 0.0
  %58 = vmatprep.subr.mxu0 0.0
  %59 = vmatpush1.msra.mxu0 0.0
  %60 = vmatprep.subr.mxu0 0.0
  %61 = vmatpush1.msra.mxu0 0.0
  %62 = vmatprep.subr.mxu0 0.0
  %63 = vmatpush1.msra.mxu0 0.0
  %64 = vmatprep.subr.mxu0 0.0
  %65 = vmatpush1.msra.mxu0 0.0
  %66 = vmatprep.subr.mxu0 0.0
  %67 = vmatpush1.msra.mxu0 0.0
  %68 = vmatprep.subr.mxu0 0.0
  %69 = vmatpush1.msra.mxu0 0.0
  %70 = vmatprep.subr.mxu0 0.0
  %71 = vmatpush1.msra.mxu0 0.0
  %72 = vmatprep.subr.mxu0 0.0
  %73 = vmatpush1.msra.mxu0 0.0
  %74 = vmatprep.subr.mxu0 0.0
  %75 = vmatpush1.msra.mxu0 0.0
  %76 = vmatprep.subr.mxu0 0.0
  %77 = vmatpush1.msra.mxu0 0.0
  %78 = vmatprep.subr.mxu0 0.0
  %79 = vmatpush1.msra.mxu0 0.0
  %80 = vmatprep.subr.mxu0 0.0
  %81 = vmatpush1.msra.mxu0 0.0
  %82 = vmatprep.subr.mxu0 0.0
  %83 = vmatpush1.msra.mxu0 0.0
  %84 = vmatprep.subr.mxu0 0.0
  %85 = vmatpush1.msra.mxu0 0.0
  %86 = vmatprep.subr.mxu0 0.0
  %87 = vmatpush1.msra.mxu0 0.0
  %88 = vmatprep.subr.mxu0 0.0
  %89 = vmatpush1.msra.mxu0 0.0
  %90 = vmatprep.subr.mxu0 0.0
  %91 = vmatpush1.msra.mxu0 0.0
  %92 = vmatprep.subr.mxu0 0.0
  %93 = vmatpush1.msra.mxu0 0.0
  %94 = vmatprep.subr.mxu0 0.0
  %95 = vmatpush1.msra.mxu0 0.0
  %96 = vmatprep.subr.mxu0 0.0
  %97 = vmatpush1.msra.mxu0 0.0
  %98 = vmatprep.subr.mxu0 0.0
  %99 = vmatpush1.msra.mxu0 0.0
  %100 = vmatprep.subr.mxu0 0.0
  %101 = vmatpush1.msra.mxu0 0.0
  %102 = vmatprep.subr.mxu0 0.0
  %103 = vmatpush1.msra.mxu0 0.0
  %104 = vmatprep.subr.mxu0 0.0
  %105 = vmatpush1.msra.mxu0 0.0
  %106 = vmatprep.subr.mxu0 0.0
  %107 = vmatpush1.msra.mxu0 0.0
  %108 = vmatprep.mubr.f32.mxu0 0.0
  %109 = vmatmul.mubr.f32.gmra.mrb[0].mxu0 %v42
  %v110 = vpop.f32.mrb[0].mxu0
  %v111 = vadd.f32 %v38, %v110
  %v112 = vpop.f32.mrb[0].mxu0
  %113 = vdwg.mxu0
  %v114 = vadd.f32 %v30, %v111
  %v115 = vxor.u32 %v114, 2147483648
  %v116 = vmul.f32 %v115, 1.442695
  %v117 = vpow.pop %v116
  %v118 = vadd.f32 %v117, 1.0
  %v119 = vrcp.pop %v118
  %v120 = vmul.f32 1.0, %v119
  %122 = vrot.lane.b32.xlu0 %v111, 64
  %v123 = vpop.permute.xlu0 %122
  %v125 = vmul.f32 %v120, %v123
  %127 = vrot.lane.b32.xlu0 %v125, 64
  %v128 = vpop.permute.xlu0 %127
  %v130 = vadd.f32 %v30, %v128
  %v131 = vtanh.pop %v130
  %v132 = vsub.f32 1.0, %v120
  %134 = vrot.lane.b32.xlu0 %v131, 96
  %v135 = vpop.permute.xlu0 %134
  %v137 = vmul.f32 %v132, %v135
  %v138 = vmul.f32 %v120, 0.0
  %v139 = vadd.f32 %v137, %v138
  %141 = vset.pattern.permute.xlu0 0
  %142 = vperm.xlu0 %141, %v33
  %v143 = vpop.permute.xlu0 %142
  %v145 = vmul.f32 %v143, %v139
  %v146 = vsub.f32 1.0, %v33
  %148 = vset.pattern.permute.xlu0 0
  %149 = vperm.xlu0 %148, %v146
  %v150 = vpop.permute.xlu0 %149
  %v152 = vmul.f32 %v150, 0.0
  %v153 = vadd.f32 %v145, %v152
  %s154 = scalar_lea.vmem %s0, 48
  %v155 = vld [vmem:[%s154] sm:$0xff]
  %vm156 = vcmp.gt.s32.totalorder %v28, 6
  %v157 = vsel %vm156, 1, 0
  %v158 = vcvt.s32.f32 %v157
  %160 = vrot.lane.b32.xlu0 %v153, 96
  %v161 = vpop.permute.xlu0 %160
  %v162 = vsel %vm40, %v161, 0
  %164 = vmatprep.subr.mxu0 0.0
  %165 = vmatpush1.msra.mxu0 %v23
  %166 = vmatprep.subr.mxu0 0.0
  %167 = vmatpush1.msra.mxu0 %v24
  %168 = vmatprep.subr.mxu0 0.0
  %169 = vmatpush1.msra.mxu0 %v25
  %170 = vmatprep.subr.mxu0 0.0
  %171 = vmatpush1.msra.mxu0 %v26
  %172 = vmatprep.subr.mxu0 0.0
  %173 = vmatpush1.msra.mxu0 0.0
  %174 = vmatprep.subr.mxu0 0.0
  %175 = vmatpush1.msra.mxu0 0.0
  %176 = vmatprep.subr.mxu0 0.0
  %177 = vmatpush1.msra.mxu0 0.0
  %178 = vmatprep.subr.mxu0 0.0
  %179 = vmatpush1.msra.mxu0 0.0
  %180 = vmatprep.subr.mxu0 0.0
  %181 = vmatpush1.msra.mxu0 0.0
  %182 = vmatprep.subr.mxu0 0.0
  %183 = vmatpush1.msra.mxu0 0.0
  %184 = vmatprep.subr.mxu0 0.0
  %185 = vmatpush1.msra.mxu0 0.0
  %186 = vmatprep.subr.mxu0 0.0
  %187 = vmatpush1.msra.mxu0 0.0
  %188 = vmatprep.subr.mxu0 0.0
  %189 = vmatpush1.msra.mxu0 0.0
  %190 = vmatprep.subr.mxu0 0.0
  %191 = vmatpush1.msra.mxu0 0.0
  %192 = vmatprep.subr.mxu0 0.0
  %193 = vmatpush1.msra.mxu0 0.0
  %194 = vmatprep.subr.mxu0 0.0
  %195 = vmatpush1.msra.mxu0 0.0
  %196 = vmatprep.subr.mxu0 0.0
  %197 = vmatpush1.msra.mxu0 0.0
  %198 = vmatprep.subr.mxu0 0.0
  %199 = vmatpush1.msra.mxu0 0.0
  %200 = vmatprep.subr.mxu0 0.0
  %201 = vmatpush1.msra.mxu0 0.0
  %202 = vmatprep.subr.mxu0 0.0
  %203 = vmatpush1.msra.mxu0 0.0
  %204 = vmatprep.subr.mxu0 0.0
  %205 = vmatpush1.msra.mxu0 0.0
  %206 = vmatprep.subr.mxu0 0.0
  %207 = vmatpush1.msra.mxu0 0.0
  %208 = vmatprep.subr.mxu0 0.0
  %209 = vmatpush1.msra.mxu0 0.0
  %210 = vmatprep.subr.mxu0 0.0
  %211 = vmatpush1.msra.mxu0 0.0
  %212 = vmatprep.subr.mxu0 0.0
  %213 = vmatpush1.msra.mxu0 0.0
  %214 = vmatprep.subr.mxu0 0.0
  %215 = vmatpush1.msra.mxu0 0.0
  %216 = vmatprep.subr.mxu0 0.0
  %217 = vmatpush1.msra.mxu0 0.0
  %218 = vmatprep.subr.mxu0 0.0
  %219 = vmatpush1.msra.mxu0 0.0
  %220 = vmatprep.subr.mxu0 0.0
  %221 = vmatpush1.msra.mxu0 0.0
  %222 = vmatprep.subr.mxu0 0.0
  %223 = vmatpush1.msra.mxu0 0.0
  %224 = vmatprep.subr.mxu0 0.0
  %225 = vmatpush1.msra.mxu0 0.0
  %226 = vmatprep.subr.mxu0 0.0
  %227 = vmatpush1.msra.mxu0 0.0
  %228 = vmatprep.mubr.f32.mxu0 0.0
  %229 = vmatmul.mubr.f32.gmra.mrb[0].mxu0 %v162
  %v230 = vpop.f32.mrb[0].mxu0
  %v231 = vadd.f32 %v38, %v230
  %v232 = vpop.f32.mrb[0].mxu0
  %233 = vdwg.mxu0
  %v234 = vadd.f32 %v155, %v231
  %v235 = vxor.u32 %v234, 2147483648
  %v236 = vmul.f32 %v235, 1.442695
  %v237 = vpow.pop %v236
  %v238 = vadd.f32 %v237, 1.0
  %v239 = vrcp.pop %v238
  %v240 = vmul.f32 1.0, %v239
  %242 = vrot.lane.b32.xlu0 %v231, 64
  %v243 = vpop.permute.xlu0 %242
  %v245 = vmul.f32 %v240, %v243
  %247 = vrot.lane.b32.xlu0 %v245, 64
  %v248 = vpop.permute.xlu0 %247
  %v250 = vadd.f32 %v155, %v248
  %v251 = vtanh.pop %v250
  %v252 = vsub.f32 1.0, %v240
  %254 = vrot.lane.b32.xlu0 %v251, 96
  %v255 = vpop.permute.xlu0 %254
  %v257 = vmul.f32 %v252, %v255
  %v258 = vmul.f32 %v240, %v153
  %v259 = vadd.f32 %v257, %v258
  %261 = vset.pattern.permute.xlu0 0
  %262 = vperm.xlu0 %261, %v158
  %v263 = vpop.permute.xlu0 %262
  %v265 = vmul.f32 %v263, %v259
  %v266 = vsub.f32 1.0, %v158
  %268 = vset.pattern.permute.xlu0 0
  %269 = vperm.xlu0 %268, %v266
  %v270 = vpop.permute.xlu0 %269
  %v272 = vmul.f32 %v270, %v153
  %v273 = vadd.f32 %v265, %v272
  %s274 = scalar_lea.vmem %s0, 40
  %v275 = vld [vmem:[%s274] sm:$0xff]
  %vm276 = vcmp.gt.s32.totalorder %v28, 5
  %v277 = vsel %vm276, 1, 0
  %v278 = vcvt.s32.f32 %v277
  %280 = vrot.lane.b32.xlu0 %v273, 96
  %v281 = vpop.permute.xlu0 %280
  %v282 = vsel %vm40, %v281, 0
  %284 = vmatprep.subr.mxu0 0.0
  %285 = vmatpush1.msra.mxu0 %v23
  %286 = vmatprep.subr.mxu0 0.0
  %287 = vmatpush1.msra.mxu0 %v24
  %288 = vmatprep.subr.mxu0 0.0
  %289 = vmatpush1.msra.mxu0 %v25
  %290 = vmatprep.subr.mxu0 0.0
  %291 = vmatpush1.msra.mxu0 %v26
  %292 = vmatprep.subr.mxu0 0.0
  %293 = vmatpush1.msra.mxu0 0.0
  %294 = vmatprep.subr.mxu0 0.0
  %295 = vmatpush1.msra.mxu0 0.0
  %296 = vmatprep.subr.mxu0 0.0
  %297 = vmatpush1.msra.mxu0 0.0
  %298 = vmatprep.subr.mxu0 0.0
  %299 = vmatpush1.msra.mxu0 0.0
  %300 = vmatprep.subr.mxu0 0.0
  %301 = vmatpush1.msra.mxu0 0.0
  %302 = vmatprep.subr.mxu0 0.0
  %303 = vmatpush1.msra.mxu0 0.0
  %304 = vmatprep.subr.mxu0 0.0
  %305 = vmatpush1.msra.mxu0 0.0
  %306 = vmatprep.subr.mxu0 0.0
  %307 = vmatpush1.msra.mxu0 0.0
  %308 = vmatprep.subr.mxu0 0.0
  %309 = vmatpush1.msra.mxu0 0.0
  %310 = vmatprep.subr.mxu0 0.0
  %311 = vmatpush1.msra.mxu0 0.0
  %312 = vmatprep.subr.mxu0 0.0
  %313 = vmatpush1.msra.mxu0 0.0
  %314 = vmatprep.subr.mxu0 0.0
  %315 = vmatpush1.msra.mxu0 0.0
  %316 = vmatprep.subr.mxu0 0.0
  %317 = vmatpush1.msra.mxu0 0.0
  %318 = vmatprep.subr.mxu0 0.0
  %319 = vmatpush1.msra.mxu0 0.0
  %320 = vmatprep.subr.mxu0 0.0
  %321 = vmatpush1.msra.mxu0 0.0
  %322 = vmatprep.subr.mxu0 0.0
  %323 = vmatpush1.msra.mxu0 0.0
  %324 = vmatprep.subr.mxu0 0.0
  %325 = vmatpush1.msra.mxu0 0.0
  %326 = vmatprep.subr.mxu0 0.0
  %327 = vmatpush1.msra.mxu0 0.0
  %328 = vmatprep.subr.mxu0 0.0
  %329 = vmatpush1.msra.mxu0 0.0
  %330 = vmatprep.subr.mxu0 0.0
  %331 = vmatpush1.msra.mxu0 0.0
  %332 = vmatprep.subr.mxu0 0.0
  %333 = vmatpush1.msra.mxu0 0.0
  %334 = vmatprep.subr.mxu0 0.0
  %335 = vmatpush1.msra.mxu0 0.0
  %336 = vmatprep.subr.mxu0 0.0
  %337 = vmatpush1.msra.mxu0 0.0
  %338 = vmatprep.subr.mxu0 0.0
  %339 = vmatpush1.msra.mxu0 0.0
  %340 = vmatprep.subr.mxu0 0.0
  %341 = vmatpush1.msra.mxu0 0.0
  %342 = vmatprep.subr.mxu0 0.0
  %343 = vmatpush1.msra.mxu0 0.0
  %344 = vmatprep.subr.mxu0 0.0
  %345 = vmatpush1.msra.mxu0 0.0
  %346 = vmatprep.subr.mxu0 0.0
  %347 = vmatpush1.msra.mxu0 0.0
  %348 = vmatprep.mubr.f32.mxu0 0.0
  %349 = vmatmul.mubr.f32.gmra.mrb[0].mxu0 %v282
  %v350 = vpop.f32.mrb[0].mxu0
  %v351 = vadd.f32 %v38, %v350
  %v352 = vpop.f32.mrb[0].mxu0
  %353 = vdwg.mxu0
  %v354 = vadd.f32 %v275, %v351
  %v355 = vxor.u32 %v354, 2147483648
  %v356 = vmul.f32 %v355, 1.442695
  %v357 = vpow.pop %v356
  %v358 = vadd.f32 %v357, 1.0
  %v359 = vrcp.pop %v358
  %v360 = vmul.f32 1.0, %v359
  %362 = vrot.lane.b32.xlu0 %v351, 64
  %v363 = vpop.permute.xlu0 %362
  %v365 = vmul.f32 %v360, %v363
  %367 = vrot.lane.b32.xlu0 %v365, 64
  %v368 = vpop.permute.xlu0 %367
  %v370 = vadd.f32 %v275, %v368
  %v371 = vtanh.pop %v370
  %v372 = vsub.f32 1.0, %v360
  %374 = vrot.lane.b32.xlu0 %v371, 96
  %v375 = vpop.permute.xlu0 %374
  %v377 = vmul.f32 %v372, %v375
  %v378 = vmul.f32 %v360, %v273
  %v379 = vadd.f32 %v377, %v378
  %381 = vset.pattern.permute.xlu0 0
  %382 = vperm.xlu0 %381, %v278
  %v383 = vpop.permute.xlu0 %382
  %v385 = vmul.f32 %v383, %v379
  %v386 = vsub.f32 1.0, %v278
  %388 = vset.pattern.permute.xlu0 0
  %389 = vperm.xlu0 %388, %v386
  %v390 = vpop.permute.xlu0 %389
  %v392 = vmul.f32 %v390, %v273
  %v393 = vadd.f32 %v385, %v392
  %s394 = scalar_lea.vmem %s0, 32
  %v395 = vld [vmem:[%s394] sm:$0xff]
  %vm396 = vcmp.gt.s32.totalorder %v28, 4
  %v397 = vsel %vm396, 1, 0
  %v398 = vcvt.s32.f32 %v397
  %400 = vrot.lane.b32.xlu0 %v393, 96
  %v401 = vpop.permute.xlu0 %400
  %v402 = vsel %vm40, %v401, 0
  %404 = vmatprep.subr.mxu0 0.0
  %405 = vmatpush1.msra.mxu0 %v23
  %406 = vmatprep.subr.mxu0 0.0
  %407 = vmatpush1.msra.mxu0 %v24
  %408 = vmatprep.subr.mxu0 0.0
  %409 = vmatpush1.msra.mxu0 %v25
  %410 = vmatprep.subr.mxu0 0.0
  %411 = vmatpush1.msra.mxu0 %v26
  %412 = vmatprep.subr.mxu0 0.0
  %413 = vmatpush1.msra.mxu0 0.0
  %414 = vmatprep.subr.mxu0 0.0
  %415 = vmatpush1.msra.mxu0 0.0
  %416 = vmatprep.subr.mxu0 0.0
  %417 = vmatpush1.msra.mxu0 0.0
  %418 = vmatprep.subr.mxu0 0.0
  %419 = vmatpush1.msra.mxu0 0.0
  %420 = vmatprep.subr.mxu0 0.0
  %421 = vmatpush1.msra.mxu0 0.0
  %422 = vmatprep.subr.mxu0 0.0
  %423 = vmatpush1.msra.mxu0 0.0
  %424 = vmatprep.subr.mxu0 0.0
  %425 = vmatpush1.msra.mxu0 0.0
  %426 = vmatprep.subr.mxu0 0.0
  %427 = vmatpush1.msra.mxu0 0.0
  %428 = vmatprep.subr.mxu0 0.0
  %429 = vmatpush1.msra.mxu0 0.0
  %430 = vmatprep.subr.mxu0 0.0
  %431 = vmatpush1.msra.mxu0 0.0
  %432 = vmatprep.subr.mxu0 0.0
  %433 = vmatpush1.msra.mxu0 0.0
  %434 = vmatprep.subr.mxu0 0.0
  %435 = vmatpush1.msra.mxu0 0.0
  %436 = vmatprep.subr.mxu0 0.0
  %437 = vmatpush1.msra.mxu0 0.0
  %438 = vmatprep.subr.mxu0 0.0
  %439 = vmatpush1.msra.mxu0 0.0
  %440 = vmatprep.subr.mxu0 0.0
  %441 = vmatpush1.msra.mxu0 0.0
  %442 = vmatprep.subr.mxu0 0.0
  %443 = vmatpush1.msra.mxu0 0.0
  %444 = vmatprep.subr.mxu0 0.0
  %445 = vmatpush1.msra.mxu0 0.0
  %446 = vmatprep.subr.mxu0 0.0
  %447 = vmatpush1.msra.mxu0 0.0
  %448 = vmatprep.subr.mxu0 0.0
  %449 = vmatpush1.msra.mxu0 0.0
  %450 = vmatprep.subr.mxu0 0.0
  %451 = vmatpush1.msra.mxu0 0.0
  %452 = vmatprep.subr.mxu0 0.0
  %453 = vmatpush1.msra.mxu0 0.0
  %454 = vmatprep.subr.mxu0 0.0
  %455 = vmatpush1.msra.mxu0 0.0
  %456 = vmatprep.subr.mxu0 0.0
  %457 = vmatpush1.msra.mxu0 0.0
  %458 = vmatprep.subr.mxu0 0.0
  %459 = vmatpush1.msra.mxu0 0.0
  %460 = vmatprep.subr.mxu0 0.0
  %461 = vmatpush1.msra.mxu0 0.0
  %462 = vmatprep.subr.mxu0 0.0
  %463 = vmatpush1.msra.mxu0 0.0
  %464 = vmatprep.subr.mxu0 0.0
  %465 = vmatpush1.msra.mxu0 0.0
  %466 = vmatprep.subr.mxu0 0.0
  %467 = vmatpush1.msra.mxu0 0.0
  %468 = vmatprep.mubr.f32.mxu0 0.0
  %469 = vmatmul.mubr.f32.gmra.mrb[0].mxu0 %v402
  %v470 = vpop.f32.mrb[0].mxu0
  %v471 = vadd.f32 %v38, %v470
  %v472 = vpop.f32.mrb[0].mxu0
  %473 = vdwg.mxu0
  %v474 = vadd.f32 %v395, %v471
  %v475 = vxor.u32 %v474, 2147483648
  %v476 = vmul.f32 %v475, 1.442695
  %v477 = vpow.pop %v476
  %v478 = vadd.f32 %v477, 1.0
  %v479 = vrcp.pop %v478
  %v480 = vmul.f32 1.0, %v479
  %482 = vrot.lane.b32.xlu0 %v471, 64
  %v483 = vpop.permute.xlu0 %482
  %v485 = vmul.f32 %v480, %v483
  %487 = vrot.lane.b32.xlu0 %v485, 64
  %v488 = vpop.permute.xlu0 %487
  %v490 = vadd.f32 %v395, %v488
  %v491 = vtanh.pop %v490
  %v492 = vsub.f32 1.0, %v480
  %494 = vrot.lane.b32.xlu0 %v491, 96
  %v495 = vpop.permute.xlu0 %494
  %v497 = vmul.f32 %v492, %v495
  %v498 = vmul.f32 %v480, %v393
  %v499 = vadd.f32 %v497, %v498
  %501 = vset.pattern.permute.xlu0 0
  %502 = vperm.xlu0 %501, %v398
  %v503 = vpop.permute.xlu0 %502
  %v505 = vmul.f32 %v503, %v499
  %v506 = vsub.f32 1.0, %v398
  %508 = vset.pattern.permute.xlu0 0
  %509 = vperm.xlu0 %508, %v506
  %v510 = vpop.permute.xlu0 %509
  %v512 = vmul.f32 %v510, %v393
  %v513 = vadd.f32 %v505, %v512
  %s514 = scalar_lea.vmem %s0, 24
  %v515 = vld [vmem:[%s514] sm:$0xff]
  %vm516 = vcmp.gt.s32.totalorder %v28, 3
  %v517 = vsel %vm516, 1, 0
  %v518 = vcvt.s32.f32 %v517
  %520 = vrot.lane.b32.xlu0 %v513, 96
  %v521 = vpop.permute.xlu0 %520
  %v522 = vsel %vm40, %v521, 0
  %524 = vmatprep.subr.mxu0 0.0
  %525 = vmatpush1.msra.mxu0 %v23
  %526 = vmatprep.subr.mxu0 0.0
  %527 = vmatpush1.msra.mxu0 %v24
  %528 = vmatprep.subr.mxu0 0.0
  %529 = vmatpush1.msra.mxu0 %v25
  %530 = vmatprep.subr.mxu0 0.0
  %531 = vmatpush1.msra.mxu0 %v26
  %532 = vmatprep.subr.mxu0 0.0
  %533 = vmatpush1.msra.mxu0 0.0
  %534 = vmatprep.subr.mxu0 0.0
  %535 = vmatpush1.msra.mxu0 0.0
  %536 = vmatprep.subr.mxu0 0.0
  %537 = vmatpush1.msra.mxu0 0.0
  %538 = vmatprep.subr.mxu0 0.0
  %539 = vmatpush1.msra.mxu0 0.0
  %540 = vmatprep.subr.mxu0 0.0
  %541 = vmatpush1.msra.mxu0 0.0
  %542 = vmatprep.subr.mxu0 0.0
  %543 = vmatpush1.msra.mxu0 0.0
  %544 = vmatprep.subr.mxu0 0.0
  %545 = vmatpush1.msra.mxu0 0.0
  %546 = vmatprep.subr.mxu0 0.0
  %547 = vmatpush1.msra.mxu0 0.0
  %548 = vmatprep.subr.mxu0 0.0
  %549 = vmatpush1.msra.mxu0 0.0
  %550 = vmatprep.subr.mxu0 0.0
  %551 = vmatpush1.msra.mxu0 0.0
  %552 = vmatprep.subr.mxu0 0.0
  %553 = vmatpush1.msra.mxu0 0.0
  %554 = vmatprep.subr.mxu0 0.0
  %555 = vmatpush1.msra.mxu0 0.0
  %556 = vmatprep.subr.mxu0 0.0
  %557 = vmatpush1.msra.mxu0 0.0
  %558 = vmatprep.subr.mxu0 0.0
  %559 = vmatpush1.msra.mxu0 0.0
  %560 = vmatprep.subr.mxu0 0.0
  %561 = vmatpush1.msra.mxu0 0.0
  %562 = vmatprep.subr.mxu0 0.0
  %563 = vmatpush1.msra.mxu0 0.0
  %564 = vmatprep.subr.mxu0 0.0
  %565 = vmatpush1.msra.mxu0 0.0
  %566 = vmatprep.subr.mxu0 0.0
  %567 = vmatpush1.msra.mxu0 0.0
  %568 = vmatprep.subr.mxu0 0.0
  %569 = vmatpush1.msra.mxu0 0.0
  %570 = vmatprep.subr.mxu0 0.0
  %571 = vmatpush1.msra.mxu0 0.0
  %572 = vmatprep.subr.mxu0 0.0
  %573 = vmatpush1.msra.mxu0 0.0
  %574 = vmatprep.subr.mxu0 0.0
  %575 = vmatpush1.msra.mxu0 0.0
  %576 = vmatprep.subr.mxu0 0.0
  %577 = vmatpush1.msra.mxu0 0.0
  %578 = vmatprep.subr.mxu0 0.0
  %579 = vmatpush1.msra.mxu0 0.0
  %580 = vmatprep.subr.mxu0 0.0
  %581 = vmatpush1.msra.mxu0 0.0
  %582 = vmatprep.subr.mxu0 0.0
  %583 = vmatpush1.msra.mxu0 0.0
  %584 = vmatprep.subr.mxu0 0.0
  %585 = vmatpush1.msra.mxu0 0.0
  %586 = vmatprep.subr.mxu0 0.0
  %587 = vmatpush1.msra.mxu0 0.0
  %588 = vmatprep.mubr.f32.mxu0 0.0
  %589 = vmatmul.mubr.f32.gmra.mrb[0].mxu0 %v522
  %v590 = vpop.f32.mrb[0].mxu0
  %v591 = vadd.f32 %v38, %v590
  %v592 = vpop.f32.mrb[0].mxu0
  %593 = vdwg.mxu0
  %v594 = vadd.f32 %v515, %v591
  %v595 = vxor.u32 %v594, 2147483648
  %v596 = vmul.f32 %v595, 1.442695
  %v597 = vpow.pop %v596
  %v598 = vadd.f32 %v597, 1.0
  %v599 = vrcp.pop %v598
  %v600 = vmul.f32 1.0, %v599
  %602 = vrot.lane.b32.xlu0 %v591, 64
  %v603 = vpop.permute.xlu0 %602
  %v605 = vmul.f32 %v600, %v603
  %607 = vrot.lane.b32.xlu0 %v605, 64
  %v608 = vpop.permute.xlu0 %607
  %v610 = vadd.f32 %v515, %v608
  %v611 = vtanh.pop %v610
  %v612 = vsub.f32 1.0, %v600
  %614 = vrot.lane.b32.xlu0 %v611, 96
  %v615 = vpop.permute.xlu0 %614
  %v617 = vmul.f32 %v612, %v615
  %v618 = vmul.f32 %v600, %v513
  %v619 = vadd.f32 %v617, %v618
  %621 = vset.pattern.permute.xlu0 0
  %622 = vperm.xlu0 %621, %v518
  %v623 = vpop.permute.xlu0 %622
  %v625 = vmul.f32 %v623, %v619
  %v626 = vsub.f32 1.0, %v518
  %628 = vset.pattern.permute.xlu0 0
  %629 = vperm.xlu0 %628, %v626
  %v630 = vpop.permute.xlu0 %629
  %v632 = vmul.f32 %v630, %v513
  %v633 = vadd.f32 %v625, %v632
  %s634 = scalar_lea.vmem %s0, 16
  %v635 = vld [vmem:[%s634] sm:$0xff]
  %vm636 = vcmp.gt.s32.totalorder %v28, 2
  %v637 = vsel %vm636, 1, 0
  %v638 = vcvt.s32.f32 %v637
  %640 = vrot.lane.b32.xlu0 %v633, 96
  %v641 = vpop.permute.xlu0 %640
  %v642 = vsel %vm40, %v641, 0
  %644 = vmatprep.subr.mxu0 0.0
  %645 = vmatpush1.msra.mxu0 %v23
  %646 = vmatprep.subr.mxu0 0.0
  %647 = vmatpush1.msra.mxu0 %v24
  %648 = vmatprep.subr.mxu0 0.0
  %649 = vmatpush1.msra.mxu0 %v25
  %650 = vmatprep.subr.mxu0 0.0
  %651 = vmatpush1.msra.mxu0 %v26
  %652 = vmatprep.subr.mxu0 0.0
  %653 = vmatpush1.msra.mxu0 0.0
  %654 = vmatprep.subr.mxu0 0.0
  %655 = vmatpush1.msra.mxu0 0.0
  %656 = vmatprep.subr.mxu0 0.0
  %657 = vmatpush1.msra.mxu0 0.0
  %658 = vmatprep.subr.mxu0 0.0
  %659 = vmatpush1.msra.mxu0 0.0
  %660 = vmatprep.subr.mxu0 0.0
  %661 = vmatpush1.msra.mxu0 0.0
  %662 = vmatprep.subr.mxu0 0.0
  %663 = vmatpush1.msra.mxu0 0.0
  %664 = vmatprep.subr.mxu0 0.0
  %665 = vmatpush1.msra.mxu0 0.0
  %666 = vmatprep.subr.mxu0 0.0
  %667 = vmatpush1.msra.mxu0 0.0
  %668 = vmatprep.subr.mxu0 0.0
  %669 = vmatpush1.msra.mxu0 0.0
  %670 = vmatprep.subr.mxu0 0.0
  %671 = vmatpush1.msra.mxu0 0.0
  %672 = vmatprep.subr.mxu0 0.0
  %673 = vmatpush1.msra.mxu0 0.0
  %674 = vmatprep.subr.mxu0 0.0
  %675 = vmatpush1.msra.mxu0 0.0
  %676 = vmatprep.subr.mxu0 0.0
  %677 = vmatpush1.msra.mxu0 0.0
  %678 = vmatprep.subr.mxu0 0.0
  %679 = vmatpush1.msra.mxu0 0.0
  %680 = vmatprep.subr.mxu0 0.0
  %681 = vmatpush1.msra.mxu0 0.0
  %682 = vmatprep.subr.mxu0 0.0
  %683 = vmatpush1.msra.mxu0 0.0
  %684 = vmatprep.subr.mxu0 0.0
  %685 = vmatpush1.msra.mxu0 0.0
  %686 = vmatprep.subr.mxu0 0.0
  %687 = vmatpush1.msra.mxu0 0.0
  %688 = vmatprep.subr.mxu0 0.0
  %689 = vmatpush1.msra.mxu0 0.0
  %690 = vmatprep.subr.mxu0 0.0
  %691 = vmatpush1.msra.mxu0 0.0
  %692 = vmatprep.subr.mxu0 0.0
  %693 = vmatpush1.msra.mxu0 0.0
  %694 = vmatprep.subr.mxu0 0.0
  %695 = vmatpush1.msra.mxu0 0.0
  %696 = vmatprep.subr.mxu0 0.0
  %697 = vmatpush1.msra.mxu0 0.0
  %698 = vmatprep.subr.mxu0 0.0
  %699 = vmatpush1.msra.mxu0 0.0
  %700 = vmatprep.subr.mxu0 0.0
  %701 = vmatpush1.msra.mxu0 0.0
  %702 = vmatprep.subr.mxu0 0.0
  %703 = vmatpush1.msra.mxu0 0.0
  %704 = vmatprep.subr.mxu0 0.0
  %705 = vmatpush1.msra.mxu0 0.0
  %706 = vmatprep.subr.mxu0 0.0
  %707 = vmatpush1.msra.mxu0 0.0
  %708 = vmatprep.mubr.f32.mxu0 0.0
  %709 = vmatmul.mubr.f32.gmra.mrb[0].mxu0 %v642
  %v710 = vpop.f32.mrb[0].mxu0
  %v711 = vadd.f32 %v38, %v710
  %v712 = vpop.f32.mrb[0].mxu0
  %713 = vdwg.mxu0
  %v714 = vadd.f32 %v635, %v711
  %v715 = vxor.u32 %v714, 2147483648
  %v716 = vmul.f32 %v715, 1.442695
  %v717 = vpow.pop %v716
  %v718 = vadd.f32 %v717, 1.0
  %v719 = vrcp.pop %v718
  %v720 = vmul.f32 1.0, %v719
  %722 = vrot.lane.b32.xlu0 %v711, 64
  %v723 = vpop.permute.xlu0 %722
  %v725 = vmul.f32 %v720, %v723
  %727 = vrot.lane.b32.xlu0 %v725, 64
  %v728 = vpop.permute.xlu0 %727
  %v730 = vadd.f32 %v635, %v728
  %v731 = vtanh.pop %v730
  %v732 = vsub.f32 1.0, %v720
  %734 = vrot.lane.b32.xlu0 %v731, 96
  %v735 = vpop.permute.xlu0 %734
  %v737 = vmul.f32 %v732, %v735
  %v738 = vmul.f32 %v720, %v633
  %v739 = vadd.f32 %v737, %v738
  %741 = vset.pattern.permute.xlu0 0
  %742 = vperm.xlu0 %741, %v638
  %v743 = vpop.permute.xlu0 %742
  %v745 = vmul.f32 %v743, %v739
  %v746 = vsub.f32 1.0, %v638
  %748 = vset.pattern.permute.xlu0 0
  %749 = vperm.xlu0 %748, %v746
  %v750 = vpop.permute.xlu0 %749
  %v752 = vmul.f32 %v750, %v633
  %v753 = vadd.f32 %v745, %v752
  %s754 = scalar_lea.vmem %s0, 8
  %v755 = vld [vmem:[%s754] sm:$0xff]
  %vm756 = vcmp.gt.s32.totalorder %v28, 1
  %v757 = vsel %vm756, 1, 0
  %v758 = vcvt.s32.f32 %v757
  %760 = vrot.lane.b32.xlu0 %v753, 96
  %v761 = vpop.permute.xlu0 %760
  %v762 = vsel %vm40, %v761, 0
  %764 = vmatprep.subr.mxu0 0.0
  %765 = vmatpush1.msra.mxu0 %v23
  %766 = vmatprep.subr.mxu0 0.0
  %767 = vmatpush1.msra.mxu0 %v24
  %768 = vmatprep.subr.mxu0 0.0
  %769 = vmatpush1.msra.mxu0 %v25
  %770 = vmatprep.subr.mxu0 0.0
  %771 = vmatpush1.msra.mxu0 %v26
  %772 = vmatprep.subr.mxu0 0.0
  %773 = vmatpush1.msra.mxu0 0.0
  %774 = vmatprep.subr.mxu0 0.0
  %775 = vmatpush1.msra.mxu0 0.0
  %776 = vmatprep.subr.mxu0 0.0
  %777 = vmatpush1.msra.mxu0 0.0
  %778 = vmatprep.subr.mxu0 0.0
  %779 = vmatpush1.msra.mxu0 0.0
  %780 = vmatprep.subr.mxu0 0.0
  %781 = vmatpush1.msra.mxu0 0.0
  %782 = vmatprep.subr.mxu0 0.0
  %783 = vmatpush1.msra.mxu0 0.0
  %784 = vmatprep.subr.mxu0 0.0
  %785 = vmatpush1.msra.mxu0 0.0
  %786 = vmatprep.subr.mxu0 0.0
  %787 = vmatpush1.msra.mxu0 0.0
  %788 = vmatprep.subr.mxu0 0.0
  %789 = vmatpush1.msra.mxu0 0.0
  %790 = vmatprep.subr.mxu0 0.0
  %791 = vmatpush1.msra.mxu0 0.0
  %792 = vmatprep.subr.mxu0 0.0
  %793 = vmatpush1.msra.mxu0 0.0
  %794 = vmatprep.subr.mxu0 0.0
  %795 = vmatpush1.msra.mxu0 0.0
  %796 = vmatprep.subr.mxu0 0.0
  %797 = vmatpush1.msra.mxu0 0.0
  %798 = vmatprep.subr.mxu0 0.0
  %799 = vmatpush1.msra.mxu0 0.0
  %800 = vmatprep.subr.mxu0 0.0
  %801 = vmatpush1.msra.mxu0 0.0
  %802 = vmatprep.subr.mxu0 0.0
  %803 = vmatpush1.msra.mxu0 0.0
  %804 = vmatprep.subr.mxu0 0.0
  %805 = vmatpush1.msra.mxu0 0.0
  %806 = vmatprep.subr.mxu0 0.0
  %807 = vmatpush1.msra.mxu0 0.0
  %808 = vmatprep.subr.mxu0 0.0
  %809 = vmatpush1.msra.mxu0 0.0
  %810 = vmatprep.subr.mxu0 0.0
  %811 = vmatpush1.msra.mxu0 0.0
  %812 = vmatprep.subr.mxu0 0.0
  %813 = vmatpush1.msra.mxu0 0.0
  %814 = vmatprep.subr.mxu0 0.0
  %815 = vmatpush1.msra.mxu0 0.0
  %816 = vmatprep.subr.mxu0 0.0
  %817 = vmatpush1.msra.mxu0 0.0
  %818 = vmatprep.subr.mxu0 0.0
  %819 = vmatpush1.msra.mxu0 0.0
  %820 = vmatprep.subr.mxu0 0.0
  %821 = vmatpush1.msra.mxu0 0.0
  %822 = vmatprep.subr.mxu0 0.0
  %823 = vmatpush1.msra.mxu0 0.0
  %824 = vmatprep.subr.mxu0 0.0
  %825 = vmatpush1.msra.mxu0 0.0
  %826 = vmatprep.subr.mxu0 0.0
  %827 = vmatpush1.msra.mxu0 0.0
  %828 = vmatprep.mubr.f32.mxu0 0.0
  %829 = vmatmul.mubr.f32.gmra.mrb[0].mxu0 %v762
  %v830 = vpop.f32.mrb[0].mxu0
  %v831 = vadd.f32 %v38, %v830
  %v832 = vpop.f32.mrb[0].mxu0
  %833 = vdwg.mxu0
  %v834 = vadd.f32 %v755, %v831
  %v835 = vxor.u32 %v834, 2147483648
  %v836 = vmul.f32 %v835, 1.442695
  %v837 = vpow.pop %v836
  %v838 = vadd.f32 %v837, 1.0
  %v839 = vrcp.pop %v838
  %v840 = vmul.f32 1.0, %v839
  %842 = vrot.lane.b32.xlu0 %v831, 64
  %v843 = vpop.permute.xlu0 %842
  %v845 = vmul.f32 %v840, %v843
  %847 = vrot.lane.b32.xlu0 %v845, 64
  %v848 = vpop.permute.xlu0 %847
  %v850 = vadd.f32 %v755, %v848
  %v851 = vtanh.pop %v850
  %v852 = vsub.f32 1.0, %v840
  %854 = vrot.lane.b32.xlu0 %v851, 96
  %v855 = vpop.permute.xlu0 %854
  %v857 = vmul.f32 %v852, %v855
  %v858 = vmul.f32 %v840, %v753
  %v859 = vadd.f32 %v857, %v858
  %861 = vset.pattern.permute.xlu0 0
  %862 = vperm.xlu0 %861, %v758
  %v863 = vpop.permute.xlu0 %862
  %v865 = vmul.f32 %v863, %v859
  %v866 = vsub.f32 1.0, %v758
  %868 = vset.pattern.permute.xlu0 0
  %869 = vperm.xlu0 %868, %v866
  %v870 = vpop.permute.xlu0 %869
  %v872 = vmul.f32 %v870, %v753
  %v873 = vadd.f32 %v865, %v872
  %v874 = vld [vmem:[%s0] sm:$0xff]
  %vm875 = vcmp.gt.s32.totalorder %v28, 0
  %v876 = vsel %vm875, 1, 0
  %v877 = vcvt.s32.f32 %v876
  %879 = vrot.lane.b32.xlu0 %v873, 96
  %v880 = vpop.permute.xlu0 %879
  %v881 = vsel %vm40, %v880, 0
  %883 = vmatprep.subr.mxu0 0.0
  %884 = vmatpush1.msra.mxu0 %v23
  %885 = vmatprep.subr.mxu0 0.0
  %886 = vmatpush1.msra.mxu0 %v24
  %887 = vmatprep.subr.mxu0 0.0
  %888 = vmatpush1.msra.mxu0 %v25
  %889 = vmatprep.subr.mxu0 0.0
  %890 = vmatpush1.msra.mxu0 %v26
  %891 = vmatprep.subr.mxu0 0.0
  %892 = vmatpush1.msra.mxu0 0.0
  %893 = vmatprep.subr.mxu0 0.0
  %894 = vmatpush1.msra.mxu0 0.0
  %895 = vmatprep.subr.mxu0 0.0
  %896 = vmatpush1.msra.mxu0 0.0
  %897 = vmatprep.subr.mxu0 0.0
  %898 = vmatpush1.msra.mxu0 0.0
  %899 = vmatprep.subr.mxu0 0.0
  %900 = vmatpush1.msra.mxu0 0.0
  %901 = vmatprep.subr.mxu0 0.0
  %902 = vmatpush1.msra.mxu0 0.0
  %903 = vmatprep.subr.mxu0 0.0
  %904 = vmatpush1.msra.mxu0 0.0
  %905 = vmatprep.subr.mxu0 0.0
  %906 = vmatpush1.msra.mxu0 0.0
  %907 = vmatprep.subr.mxu0 0.0
  %908 = vmatpush1.msra.mxu0 0.0
  %909 = vmatprep.subr.mxu0 0.0
  %910 = vmatpush1.msra.mxu0 0.0
  %911 = vmatprep.subr.mxu0 0.0
  %912 = vmatpush1.msra.mxu0 0.0
  %913 = vmatprep.subr.mxu0 0.0
  %914 = vmatpush1.msra.mxu0 0.0
  %915 = vmatprep.subr.mxu0 0.0
  %916 = vmatpush1.msra.mxu0 0.0
  %917 = vmatprep.subr.mxu0 0.0
  %918 = vmatpush1.msra.mxu0 0.0
  %919 = vmatprep.subr.mxu0 0.0
  %920 = vmatpush1.msra.mxu0 0.0
  %921 = vmatprep.subr.mxu0 0.0
  %922 = vmatpush1.msra.mxu0 0.0
  %923 = vmatprep.subr.mxu0 0.0
  %924 = vmatpush1.msra.mxu0 0.0
  %925 = vmatprep.subr.mxu0 0.0
  %926 = vmatpush1.msra.mxu0 0.0
  %927 = vmatprep.subr.mxu0 0.0
  %928 = vmatpush1.msra.mxu0 0.0
  %929 = vmatprep.subr.mxu0 0.0
  %930 = vmatpush1.msra.mxu0 0.0
  %931 = vmatprep.subr.mxu0 0.0
  %932 = vmatpush1.msra.mxu0 0.0
  %933 = vmatprep.subr.mxu0 0.0
  %934 = vmatpush1.msra.mxu0 0.0
  %935 = vmatprep.subr.mxu0 0.0
  %936 = vmatpush1.msra.mxu0 0.0
  %937 = vmatprep.subr.mxu0 0.0
  %938 = vmatpush1.msra.mxu0 0.0
  %939 = vmatprep.subr.mxu0 0.0
  %940 = vmatpush1.msra.mxu0 0.0
  %941 = vmatprep.subr.mxu0 0.0
  %942 = vmatpush1.msra.mxu0 0.0
  %943 = vmatprep.subr.mxu0 0.0
  %944 = vmatpush1.msra.mxu0 0.0
  %945 = vmatprep.subr.mxu0 0.0
  %946 = vmatpush1.msra.mxu0 0.0
  %947 = vmatprep.mubr.f32.mxu0 0.0
  %948 = vmatmul.mubr.f32.gmra.mrb[0].mxu0 %v881
  %v949 = vpop.f32.mrb[0].mxu0
  %v950 = vadd.f32 %v38, %v949
  %v951 = vpop.f32.mrb[0].mxu0
  %952 = vdwg.mxu0
  %v953 = vadd.f32 %v874, %v950
  %v954 = vxor.u32 %v953, 2147483648
  %v955 = vmul.f32 %v954, 1.442695
  %v956 = vpow.pop %v955
  %v957 = vadd.f32 %v956, 1.0
  %v958 = vrcp.pop %v957
  %v959 = vmul.f32 1.0, %v958
  %961 = vrot.lane.b32.xlu0 %v950, 64
  %v962 = vpop.permute.xlu0 %961
  %v964 = vmul.f32 %v959, %v962
  %966 = vrot.lane.b32.xlu0 %v964, 64
  %v967 = vpop.permute.xlu0 %966
  %v969 = vadd.f32 %v874, %v967
  %v970 = vtanh.pop %v969
  %v971 = vsub.f32 1.0, %v959
  %973 = vrot.lane.b32.xlu0 %v970, 96
  %v974 = vpop.permute.xlu0 %973
  %v976 = vmul.f32 %v971, %v974
  %v977 = vmul.f32 %v959, %v873
  %v978 = vadd.f32 %v976, %v977
  %980 = vset.pattern.permute.xlu0 0
  %981 = vperm.xlu0 %980, %v877
  %v982 = vpop.permute.xlu0 %981
  %v984 = vmul.f32 %v982, %v978
  %v985 = vsub.f32 1.0, %v877
  %987 = vset.pattern.permute.xlu0 0
  %988 = vperm.xlu0 %987, %v985
  %v989 = vpop.permute.xlu0 %988
  %v991 = vmul.f32 %v989, %v873
  %v992 = vadd.f32 %v984, %v991
  %v993 = vld [vmem:[%s4] sm:$0xff]
  %v994 = vld [vmem:[%s4 + $0x8] sm:$0xff]
  %v995 = vld [vmem:[%s4 + $0x10] sm:$0xff]
  %v996 = vld [vmem:[%s4 + $0x18] sm:$0xff]
  %v997 = vld [vmem:[%s5] sm:$0x1]
  %v999 = vlaneseq
  %v1000 = vshrl.u32 %v999, 7
  %v1001 = vsub.s32 0, %v1000
  %v1002 = vrot.slane %v997, %v1001
  %1005 = vrot.lane.b32.xlu0 %v992, 96
  %v1006 = vpop.permute.xlu0 %1005
  %v1007 = vsel %vm40, %v1006, 0
  %1009 = vmatprep.subr.mxu0 0.0
  %1010 = vmatpush1.msra.mxu0 %v993
  %1011 = vmatprep.subr.mxu0 0.0
  %1012 = vmatpush1.msra.mxu0 %v994
  %1013 = vmatprep.subr.mxu0 0.0
  %1014 = vmatpush1.msra.mxu0 %v995
  %1015 = vmatprep.subr.mxu0 0.0
  %1016 = vmatpush1.msra.mxu0 %v996
  %1017 = vmatprep.subr.mxu0 0.0
  %1018 = vmatpush1.msra.mxu0 0.0
  %1019 = vmatprep.subr.mxu0 0.0
  %1020 = vmatpush1.msra.mxu0 0.0
  %1021 = vmatprep.subr.mxu0 0.0
  %1022 = vmatpush1.msra.mxu0 0.0
  %1023 = vmatprep.subr.mxu0 0.0
  %1024 = vmatpush1.msra.mxu0 0.0
  %1025 = vmatprep.subr.mxu0 0.0
  %1026 = vmatpush1.msra.mxu0 0.0
  %1027 = vmatprep.subr.mxu0 0.0
  %1028 = vmatpush1.msra.mxu0 0.0
  %1029 = vmatprep.subr.mxu0 0.0
  %1030 = vmatpush1.msra.mxu0 0.0
  %1031 = vmatprep.subr.mxu0 0.0
  %1032 = vmatpush1.msra.mxu0 0.0
  %1033 = vmatprep.subr.mxu0 0.0
  %1034 = vmatpush1.msra.mxu0 0.0
  %1035 = vmatprep.subr.mxu0 0.0
  %1036 = vmatpush1.msra.mxu0 0.0
  %1037 = vmatprep.subr.mxu0 0.0
  %1038 = vmatpush1.msra.mxu0 0.0
  %1039 = vmatprep.subr.mxu0 0.0
  %1040 = vmatpush1.msra.mxu0 0.0
  %1041 = vmatprep.subr.mxu0 0.0
  %1042 = vmatpush1.msra.mxu0 0.0
  %1043 = vmatprep.subr.mxu0 0.0
  %1044 = vmatpush1.msra.mxu0 0.0
  %1045 = vmatprep.subr.mxu0 0.0
  %1046 = vmatpush1.msra.mxu0 0.0
  %1047 = vmatprep.subr.mxu0 0.0
  %1048 = vmatpush1.msra.mxu0 0.0
  %1049 = vmatprep.subr.mxu0 0.0
  %1050 = vmatpush1.msra.mxu0 0.0
  %1051 = vmatprep.subr.mxu0 0.0
  %1052 = vmatpush1.msra.mxu0 0.0
  %1053 = vmatprep.subr.mxu0 0.0
  %1054 = vmatpush1.msra.mxu0 0.0
  %1055 = vmatprep.subr.mxu0 0.0
  %1056 = vmatpush1.msra.mxu0 0.0
  %1057 = vmatprep.subr.mxu0 0.0
  %1058 = vmatpush1.msra.mxu0 0.0
  %1059 = vmatprep.subr.mxu0 0.0
  %1060 = vmatpush1.msra.mxu0 0.0
  %1061 = vmatprep.subr.mxu0 0.0
  %1062 = vmatpush1.msra.mxu0 0.0
  %1063 = vmatprep.subr.mxu0 0.0
  %1064 = vmatpush1.msra.mxu0 0.0
  %1065 = vmatprep.subr.mxu0 0.0
  %1066 = vmatpush1.msra.mxu0 0.0
  %1067 = vmatprep.subr.mxu0 0.0
  %1068 = vmatpush1.msra.mxu0 0.0
  %1069 = vmatprep.subr.mxu0 0.0
  %1070 = vmatpush1.msra.mxu0 0.0
  %1071 = vmatprep.subr.mxu0 0.0
  %1072 = vmatpush1.msra.mxu0 0.0
  %1073 = vmatprep.mubr.f32.mxu0 0.0
  %1074 = vmatmul.mubr.f32.gmra.mrb[0].mxu0 %v1007
  %v1075 = vpop.f32.mrb[0].mxu0
  %v1076 = vadd.f32 %v1002, %v1075
  %v1077 = vpop.f32.mrb[0].mxu0
  %1078 = vdwg.mxu0
  %1079 = vst [vmem:[%s6] sm:$0xff] %v1076
  // Predicated region
  $region26: #{dac_forward.7} parent=0 // pred_check
    _
  $region27: #{dac_forward.7} parent=0 // pred_check_branch
    %1081 = sbr.rel (0) target = $region29
  $region28: #{dac_forward.7} parent=0 // pred_region
    _
  $region29: #{dac_forward.7} parent=0 // pred_fallthru
    _
  // Predicated region
  $region30: #{dac_forward.7} parent=0 // pred_check
    _
  $region31: #{dac_forward.7} parent=0 // pred_check_branch
    %1083 = sbr.rel (0) target = $region33
  $region32: #{dac_forward.7} parent=0 // pred_region
    _
  $region33: #{dac_forward.7} parent=0 // pred_fallthru
    _

// kernel: dac_forward.5
$region0: #{dac_forward.5}
  #allocation0 [shape = 'u32[]', space=smem, size = 0x4, offset = 0x4, fixed_abs, tag = 'smem constant byte address 0x4 - core index']
  #allocation1 [shape = 'u32[144,128]{1,0:T(1,128)}', space=vmem, size = 0x12000, scoped, tag = 'internal scratch']
  %s0 = inlined_call_operand.vmem [shape: f32[8,8,192], index: 0, kind: input, shape index: {}]
  %s1 = inlined_call_operand.vmem [shape: s32[8,1], index: 1, kind: input, shape index: {}]
  %s2 = inlined_call_operand.vmem [shape: f32[32,96], index: 2, kind: input, shape index: {}]
  %s3 = inlined_call_operand.vmem [shape: f32[32,96], index: 3, kind: input, shape index: {}]
  %s4 = inlined_call_operand.vmem [shape: f32[1,96], index: 4, kind: input, shape index: {}]
  %s5 = inlined_call_operand.vmem [shape: f32[1,96], index: 5, kind: input, shape index: {}]
  %s6 = inlined_call_operand.vmem [shape: f32[8,8,32], index: 6, kind: output, shape index: {0}]
  %s7 = inlined_call_operand.vmem [shape: f32[8,8,32], index: 7, kind: output, shape index: {1}]
  %8 = xla_tuple %s6, %s7
  %s9 = sld [smem:[#allocation0]]
  $region42: #{dac_forward.5} parent=0
    _
  %s11 = ssub.s32 1, %s9
  %s12 = scalar_select 0, %s11, %s9
  // Predicated region
  $region2: #{dac_forward.5} parent=0 // pred_check
    _
  $region3: #{dac_forward.5} parent=0 // pred_check_branch
    %14 = sbr.rel (0) target = $region5
  $region4: #{dac_forward.5} parent=0 // pred_region
    _
  $region5: #{dac_forward.5} parent=0 // pred_fallthru
    _
  // Predicated region
  $region6: #{dac_forward.5} parent=0 // pred_check
    _
  $region7: #{dac_forward.5} parent=0 // pred_check_branch
    %16 = sbr.rel (0) target = $region9
  $region8: #{dac_forward.5} parent=0 // pred_region
    _
  $region9: #{dac_forward.5} parent=0 // pred_fallthru
    _
  // Predicated region
  $region10: #{dac_forward.5} parent=0 // pred_check
    _
  $region11: #{dac_forward.5} parent=0 // pred_check_branch
    %18 = sbr.rel (0) target = $region13
  $region12: #{dac_forward.5} parent=0 // pred_region
    _
  $region13: #{dac_forward.5} parent=0 // pred_fallthru
    _
  // Predicated region
  $region14: #{dac_forward.5} parent=0 // pred_check
    _
  $region15: #{dac_forward.5} parent=0 // pred_check_branch
    %20 = sbr.rel (0) target = $region17
  $region16: #{dac_forward.5} parent=0 // pred_region
    _
  $region17: #{dac_forward.5} parent=0 // pred_fallthru
    _
  // Predicated region
  $region18: #{dac_forward.5} parent=0 // pred_check
    _
  $region19: #{dac_forward.5} parent=0 // pred_check_branch
    %22 = sbr.rel (0) target = $region21
  $region20: #{dac_forward.5} parent=0 // pred_region
    _
  $region21: #{dac_forward.5} parent=0 // pred_fallthru
    _
  // Predicated region
  $region22: #{dac_forward.5} parent=0 // pred_check
    _
  $region23: #{dac_forward.5} parent=0 // pred_check_branch
    %24 = sbr.rel (0) target = $region25
  $region24: #{dac_forward.5} parent=0 // pred_region
    _
  $region25: #{dac_forward.5} parent=0 // pred_fallthru
    _
  %v25 = vld [vmem:[%s2] sm:$0xff]
  %v26 = vld [vmem:[%s2 + $0x8] sm:$0xff]
  %v27 = vld [vmem:[%s2 + $0x10] sm:$0xff]
  %v28 = vld [vmem:[%s2 + $0x18] sm:$0xff]
  %v29 = vld [vmem:[%s3] sm:$0xff]
  %v30 = vld [vmem:[%s3 + $0x8] sm:$0xff]
  %v31 = vld [vmem:[%s3 + $0x10] sm:$0xff]
  %v32 = vld [vmem:[%s3 + $0x18] sm:$0xff]
  %v33 = vld [vmem:[%s4] sm:$0x1]
  %v34 = vld [vmem:[%s5] sm:$0x1]
  %v35 = vld [vmem:[%s1] sm:$0xff]
  %v36 = vld [vmem:[%s0] sm:$0xff]
  %s37 = scalar_lea.vmem %s0, 112
  %v38 = vld [vmem:[%s37] sm:$0xff]
  %v39 = vld [vmem:[%s37 + $0x8] sm:$0xff]
  %vm40 = vcmp.gt.s32.totalorder %v35, 0
  %v41 = vsel %vm40, 1, 0
  %v42 = vcvt.s32.f32 %v41
  %vm43 = vcmp.gt.s32.totalorder %v35, 7
  %v44 = vsel %vm43, 1, 0
  %v45 = vcvt.s32.f32 %v44
  %v47 = vlaneseq
  %v48 = vshrl.u32 %v47, 7
  %v49 = vsub.s32 0, %v48
  %v50 = vrot.slane %v33, %v49
  %vm52 = vcmask 261120
  %v54 = vsel %vm52, 0.0, 0
  %56 = vmatprep.subr.mxu0 0.0
  %57 = vmatpush1.msra.mxu0 %v25
  %58 = vmatprep.subr.mxu0 0.0
  %59 = vmatpush1.msra.mxu0 %v26
  %60 = vmatprep.subr.mxu0 0.0
  %61 = vmatpush1.msra.mxu0 %v27
  %62 = vmatprep.subr.mxu0 0.0
  %63 = vmatpush1.msra.mxu0 %v28
  %64 = vmatprep.subr.mxu0 0.0
  %65 = vmatpush1.msra.mxu0 0.0
  %66 = vmatprep.subr.mxu0 0.0
  %67 = vmatpush1.msra.mxu0 0.0
  %68 = vmatprep.subr.mxu0 0.0
  %69 = vmatpush1.msra.mxu0 0.0
  %70 = vmatprep.subr.mxu0 0.0
  %71 = vmatpush1.msra.mxu0 0.0
  %72 = vmatprep.subr.mxu0 0.0
  %73 = vmatpush1.msra.mxu0 0.0
  %74 = vmatprep.subr.mxu0 0.0
  %75 = vmatpush1.msra.mxu0 0.0
  %76 = vmatprep.subr.mxu0 0.0
  %77 = vmatpush1.msra.mxu0 0.0
  %78 = vmatprep.subr.mxu0 0.0
  %79 = vmatpush1.msra.mxu0 0.0
  %80 = vmatprep.subr.mxu0 0.0
  %81 = vmatpush1.msra.mxu0 0.0
  %82 = vmatprep.subr.mxu0 0.0
  %83 = vmatpush1.msra.mxu0 0.0
  %84 = vmatprep.subr.mxu0 0.0
  %85 = vmatpush1.msra.mxu0 0.0
  %86 = vmatprep.subr.mxu0 0.0
  %87 = vmatpush1.msra.mxu0 0.0
  %88 = vmatprep.subr.mxu0 0.0
  %89 = vmatpush1.msra.mxu0 0.0
  %90 = vmatprep.subr.mxu0 0.0
  %91 = vmatpush1.msra.mxu0 0.0
  %92 = vmatprep.subr.mxu0 0.0
  %93 = vmatpush1.msra.mxu0 0.0
  %94 = vmatprep.subr.mxu0 0.0
  %95 = vmatpush1.msra.mxu0 0.0
  %96 = vmatprep.subr.mxu0 0.0
  %97 = vmatpush1.msra.mxu0 0.0
  %98 = vmatprep.subr.mxu0 0.0
  %99 = vmatpush1.msra.mxu0 0.0
  %100 = vmatprep.subr.mxu0 0.0
  %101 = vmatpush1.msra.mxu0 0.0
  %102 = vmatprep.subr.mxu0 0.0
  %103 = vmatpush1.msra.mxu0 0.0
  %104 = vmatprep.subr.mxu0 0.0
  %105 = vmatpush1.msra.mxu0 0.0
  %106 = vmatprep.subr.mxu0 0.0
  %107 = vmatpush1.msra.mxu0 0.0
  %108 = vmatprep.subr.mxu0 0.0
  %109 = vmatpush1.msra.mxu0 0.0
  %110 = vmatprep.subr.mxu0 0.0
  %111 = vmatpush1.msra.mxu0 0.0
  %112 = vmatprep.subr.mxu0 0.0
  %113 = vmatpush1.msra.mxu0 0.0
  %114 = vmatprep.subr.mxu0 0.0
  %115 = vmatpush1.msra.mxu0 0.0
  %116 = vmatprep.subr.mxu0 0.0
  %117 = vmatpush1.msra.mxu0 0.0
  %118 = vmatprep.subr.mxu0 0.0
  %119 = vmatpush1.msra.mxu0 0.0
  %120 = vmatprep.mubr.f32.mxu0 0.0
  %121 = vmatmul.mubr.f32.gmra.mrb[0].mxu0 %v54
  %v122 = vpop.f32.mrb[0].mxu0
  %v123 = vadd.f32 %v50, %v122
  %v124 = vpop.f32.mrb[0].mxu0
  %125 = vdwg.mxu0
  %v126 = vadd.f32 %v36, %v123
  %v127 = vxor.u32 %v126, 2147483648
  %v128 = vmul.f32 %v127, 1.442695
  %v129 = vpow.pop %v128
  %v130 = vadd.f32 %v129, 1.0
  %v131 = vrcp.pop %v130
  %v132 = vmul.f32 1.0, %v131
  %134 = vrot.lane.b32.xlu0 %v123, 64
  %v135 = vpop.permute.xlu0 %134
  %v137 = vmul.f32 %v132, %v135
  %139 = vrot.lane.b32.xlu0 %v137, 64
  %v140 = vpop.permute.xlu0 %139
  %v142 = vadd.f32 %v36, %v140
  %v143 = vtanh.pop %v142
  %v144 = vsub.f32 1.0, %v132
  %146 = vrot.lane.b32.xlu0 %v143, 96
  %v147 = vpop.permute.xlu0 %146
  %v149 = vmul.f32 %v144, %v147
  %v150 = vmul.f32 %v132, 0.0
  %v151 = vadd.f32 %v149, %v150
  %153 = vset.pattern.permute.xlu0 0
  %154 = vperm.xlu0 %153, %v42
  %v155 = vpop.permute.xlu0 %154
  %v157 = vmul.f32 %v155, %v151
  %v158 = vsub.f32 1.0, %v42
  %160 = vset.pattern.permute.xlu0 0
  %161 = vperm.xlu0 %160, %v158
  %v162 = vpop.permute.xlu0 %161
  %v164 = vmul.f32 %v162, 0.0
  %v165 = vadd.f32 %v157, %v164
  %v167 = vlaneseq
  %v168 = vshrl.u32 %v167, 7
  %v169 = vsub.s32 0, %v168
  %v170 = vrot.slane %v34, %v169
  %172 = vmatprep.subr.mxu0 0.0
  %173 = vmatpush1.msra.mxu0 %v29
  %174 = vmatprep.subr.mxu0 0.0
  %175 = vmatpush1.msra.mxu0 %v30
  %176 = vmatprep.subr.mxu0 0.0
  %177 = vmatpush1.msra.mxu0 %v31
  %178 = vmatprep.subr.mxu0 0.0
  %179 = vmatpush1.msra.mxu0 %v32
  %180 = vmatprep.subr.mxu0 0.0
  %181 = vmatpush1.msra.mxu0 0.0
  %182 = vmatprep.subr.mxu0 0.0
  %183 = vmatpush1.msra.mxu0 0.0
  %184 = vmatprep.subr.mxu0 0.0
  %185 = vmatpush1.msra.mxu0 0.0
  %186 = vmatprep.subr.mxu0 0.0
  %187 = vmatpush1.msra.mxu0 0.0
  %188 = vmatprep.subr.mxu0 0.0
  %189 = vmatpush1.msra.mxu0 0.0
  %190 = vmatprep.subr.mxu0 0.0
  %191 = vmatpush1.msra.mxu0 0.0
  %192 = vmatprep.subr.mxu0 0.0
  %193 = vmatpush1.msra.mxu0 0.0
  %194 = vmatprep.subr.mxu0 0.0
  %195 = vmatpush1.msra.mxu0 0.0
  %196 = vmatprep.subr.mxu0 0.0
  %197 = vmatpush1.msra.mxu0 0.0
  %198 = vmatprep.subr.mxu0 0.0
  %199 = vmatpush1.msra.mxu0 0.0
  %200 = vmatprep.subr.mxu0 0.0
  %201 = vmatpush1.msra.mxu0 0.0
  %202 = vmatprep.subr.mxu0 0.0
  %203 = vmatpush1.msra.mxu0 0.0
  %204 = vmatprep.subr.mxu0 0.0
  %205 = vmatpush1.msra.mxu0 0.0
  %206 = vmatprep.subr.mxu0 0.0
  %207 = vmatpush1.msra.mxu0 0.0
  %208 = vmatprep.subr.mxu0 0.0
  %209 = vmatpush1.msra.mxu0 0.0
  %210 = vmatprep.subr.mxu0 0.0
  %211 = vmatpush1.msra.mxu0 0.0
  %212 = vmatprep.subr.mxu0 0.0
  %213 = vmatpush1.msra.mxu0 0.0
  %214 = vmatprep.subr.mxu0 0.0
  %215 = vmatpush1.msra.mxu0 0.0
  %216 = vmatprep.subr.mxu0 0.0
  %217 = vmatpush1.msra.mxu0 0.0
  %218 = vmatprep.subr.mxu0 0.0
  %219 = vmatpush1.msra.mxu0 0.0
  %220 = vmatprep.subr.mxu0 0.0
  %221 = vmatpush1.msra.mxu0 0.0
  %222 = vmatprep.subr.mxu0 0.0
  %223 = vmatpush1.msra.mxu0 0.0
  %224 = vmatprep.subr.mxu0 0.0
  %225 = vmatpush1.msra.mxu0 0.0
  %226 = vmatprep.subr.mxu0 0.0
  %227 = vmatpush1.msra.mxu0 0.0
  %228 = vmatprep.subr.mxu0 0.0
  %229 = vmatpush1.msra.mxu0 0.0
  %230 = vmatprep.subr.mxu0 0.0
  %231 = vmatpush1.msra.mxu0 0.0
  %232 = vmatprep.subr.mxu0 0.0
  %233 = vmatpush1.msra.mxu0 0.0
  %234 = vmatprep.subr.mxu0 0.0
  %235 = vmatpush1.msra.mxu0 0.0
  %236 = vmatprep.mubr.f32.mxu0 0.0
  %237 = vmatmul.mubr.f32.gmra.mrb[0].mxu0 %v54
  %v238 = vpop.f32.mrb[0].mxu0
  %v239 = vadd.f32 %v170, %v238
  %v240 = vpop.f32.mrb[0].mxu0
  %241 = vdwg.mxu0
  %243 = vrot.lane.b32.xlu0 %v239, 96
  %v244 = vpop.permute.xlu0 %243
  %v246 = vadd.f32 %v38, %v244
  %v247 = vxor.u32 %v246, 2147483648
  %v248 = vmul.f32 %v247, 1.442695
  %v249 = vpow.pop %v248
  %v250 = vadd.f32 %v249, 1.0
  %v251 = vrcp.pop %v250
  %v252 = vmul.f32 1.0, %v251
  %v253 = vadd.f32 %v39, %v244
  %v254 = vxor.u32 %v253, 2147483648
  %v255 = vmul.f32 %v254, 1.442695
  %v256 = vpow.pop %v255
  %v257 = vadd.f32 %v256, 1.0
  %v258 = vrcp.pop %v257
  %v259 = vmul.f32 1.0, %v258
  %260 = vrot.lane.b32.xlu0 %v239, 32
  %v261 = vpop.permute.xlu0 %260
  %v263 = vmul.f32 %v252, %v261
  %265 = vrot.lane.b32.xlu0 %v263, 64
  %v266 = vpop.permute.xlu0 %265
  %v268 = vadd.f32 %v39, %v266
  %v269 = vtanh.pop %v268
  %v270 = vsub.f32 1.0, %v259
  %272 = vrot.lane.b32.xlu0 %v269, 96
  %v273 = vpop.permute.xlu0 %272
  %v275 = vmul.f32 %v270, %v273
  %v276 = vmul.f32 %v259, 0.0
  %v277 = vadd.f32 %v275, %v276
  %279 = vset.pattern.permute.xlu0 0
  %280 = vperm.xlu0 %279, %v45
  %v281 = vpop.permute.xlu0 %280
  %v283 = vmul.f32 %v281, %v277
  %v284 = vsub.f32 1.0, %v45
  %286 = vset.pattern.permute.xlu0 0
  %287 = vperm.xlu0 %286, %v284
  %v288 = vpop.permute.xlu0 %287
  %v290 = vmul.f32 %v288, 0.0
  %v291 = vadd.f32 %v283, %v290
  %293 = vrot.lane.b32.xlu0 %v165, 96
  %v294 = vpop.permute.xlu0 %293
  %296 = vst.msk [vmem:[%s6] sm:$0xff] %vm52, %v294
  %s297 = scalar_lea.vmem %s7, 56
  %298 = vst.msk [vmem:[%s297] sm:$0xff] %vm52, %v291
  %s299 = scalar_lea.vmem %s0, 16
  %v300 = vld [vmem:[%s299] sm:$0xff]
  %s301 = scalar_lea.vmem %s0, 96
  %v302 = vld [vmem:[%s301] sm:$0xff]
  %v303 = vld [vmem:[%s301 + $0x8] sm:$0xff]
  %vm304 = vcmp.gt.s32.totalorder %v35, 1
  %v305 = vsel %vm304, 1, 0
  %v306 = vcvt.s32.f32 %v305
  %vm307 = vcmp.gt.s32.totalorder %v35, 6
  %v308 = vsel %vm307, 1, 0
  %v309 = vcvt.s32.f32 %v308
  %v310 = vsel %vm52, %v294, 0
  %312 = vmatprep.subr.mxu0 0.0
  %313 = vmatpush1.msra.mxu0 %v25
  %314 = vmatprep.subr.mxu0 0.0
  %315 = vmatpush1.msra.mxu0 %v26
  %316 = vmatprep.subr.mxu0 0.0
  %317 = vmatpush1.msra.mxu0 %v27
  %318 = vmatprep.subr.mxu0 0.0
  %319 = vmatpush1.msra.mxu0 %v28
  %320 = vmatprep.subr.mxu0 0.0
  %321 = vmatpush1.msra.mxu0 0.0
  %322 = vmatprep.subr.mxu0 0.0
  %323 = vmatpush1.msra.mxu0 0.0
  %324 = vmatprep.subr.mxu0 0.0
  %325 = vmatpush1.msra.mxu0 0.0
  %326 = vmatprep.subr.mxu0 0.0
  %327 = vmatpush1.msra.mxu0 0.0
  %328 = vmatprep.subr.mxu0 0.0
  %329 = vmatpush1.msra.mxu0 0.0
  %330 = vmatprep.subr.mxu0 0.0
  %331 = vmatpush1.msra.mxu0 0.0
  %332 = vmatprep.subr.mxu0 0.0
  %333 = vmatpush1.msra.mxu0 0.0
  %334 = vmatprep.subr.mxu0 0.0
  %335 = vmatpush1.msra.mxu0 0.0
  %336 = vmatprep.subr.mxu0 0.0
  %337 = vmatpush1.msra.mxu0 0.0
  %338 = vmatprep.subr.mxu0 0.0
  %339 = vmatpush1.msra.mxu0 0.0
  %340 = vmatprep.subr.mxu0 0.0
  %341 = vmatpush1.msra.mxu0 0.0
  %342 = vmatprep.subr.mxu0 0.0
  %343 = vmatpush1.msra.mxu0 0.0
  %344 = vmatprep.subr.mxu0 0.0
  %345 = vmatpush1.msra.mxu0 0.0
  %346 = vmatprep.subr.mxu0 0.0
  %347 = vmatpush1.msra.mxu0 0.0
  %348 = vmatprep.subr.mxu0 0.0
  %349 = vmatpush1.msra.mxu0 0.0
  %350 = vmatprep.subr.mxu0 0.0
  %351 = vmatpush1.msra.mxu0 0.0
  %352 = vmatprep.subr.mxu0 0.0
  %353 = vmatpush1.msra.mxu0 0.0
  %354 = vmatprep.subr.mxu0 0.0
  %355 = vmatpush1.msra.mxu0 0.0
  %356 = vmatprep.subr.mxu0 0.0
  %357 = vmatpush1.msra.mxu0 0.0
  %358 = vmatprep.subr.mxu0 0.0
  %359 = vmatpush1.msra.mxu0 0.0
  %360 = vmatprep.subr.mxu0 0.0
  %361 = vmatpush1.msra.mxu0 0.0
  %362 = vmatprep.subr.mxu0 0.0
  %363 = vmatpush1.msra.mxu0 0.0
  %364 = vmatprep.subr.mxu0 0.0
  %365 = vmatpush1.msra.mxu0 0.0
  %366 = vmatprep.subr.mxu0 0.0
  %367 = vmatpush1.msra.mxu0 0.0
  %368 = vmatprep.subr.mxu0 0.0
  %369 = vmatpush1.msra.mxu0 0.0
  %370 = vmatprep.subr.mxu0 0.0
  %371 = vmatpush1.msra.mxu0 0.0
  %372 = vmatprep.subr.mxu0 0.0
  %373 = vmatpush1.msra.mxu0 0.0
  %374 = vmatprep.subr.mxu0 0.0
  %375 = vmatpush1.msra.mxu0 0.0
  %376 = vmatprep.mubr.f32.mxu0 0.0
  %377 = vmatmul.mubr.f32.gmra.mrb[0].mxu0 %v310
  %v378 = vpop.f32.mrb[0].mxu0
  %v379 = vadd.f32 %v50, %v378
  %v380 = vpop.f32.mrb[0].mxu0
  %381 = vdwg.mxu0
  %v382 = vadd.f32 %v300, %v379
  %v383 = vxor.u32 %v382, 2147483648
  %v384 = vmul.f32 %v383, 1.442695
  %v385 = vpow.pop %v384
  %v386 = vadd.f32 %v385, 1.0
  %v387 = vrcp.pop %v386
  %v388 = vmul.f32 1.0, %v387
  %390 = vrot.lane.b32.xlu0 %v379, 64
  %v391 = vpop.permute.xlu0 %390
  %v393 = vmul.f32 %v388, %v391
  %395 = vrot.lane.b32.xlu0 %v393, 64
  %v396 = vpop.permute.xlu0 %395
  %v398 = vadd.f32 %v300, %v396
  %v399 = vtanh.pop %v398
  %v400 = vsub.f32 1.0, %v388
  %402 = vrot.lane.b32.xlu0 %v399, 96
  %v403 = vpop.permute.xlu0 %402
  %v405 = vmul.f32 %v400, %v403
  %v406 = vmul.f32 %v388, %v165
  %v407 = vadd.f32 %v405, %v406
  %409 = vset.pattern.permute.xlu0 0
  %410 = vperm.xlu0 %409, %v306
  %v411 = vpop.permute.xlu0 %410
  %v413 = vmul.f32 %v411, %v407
  %v414 = vsub.f32 1.0, %v306
  %416 = vset.pattern.permute.xlu0 0
  %417 = vperm.xlu0 %416, %v414
  %v418 = vpop.permute.xlu0 %417
  %v420 = vmul.f32 %v418, %v165
  %v421 = vadd.f32 %v413, %v420
  %v423 = vsel %vm52, %v291, 0
  %425 = vmatprep.subr.mxu0 0.0
  %426 = vmatpush1.msra.mxu0 %v29
  %427 = vmatprep.subr.mxu0 0.0
  %428 = vmatpush1.msra.mxu0 %v30
  %429 = vmatprep.subr.mxu0 0.0
  %430 = vmatpush1.msra.mxu0 %v31
  %431 = vmatprep.subr.mxu0 0.0
  %432 = vmatpush1.msra.mxu0 %v32
  %433 = vmatprep.subr.mxu0 0.0
  %434 = vmatpush1.msra.mxu0 0.0
  %435 = vmatprep.subr.mxu0 0.0
  %436 = vmatpush1.msra.mxu0 0.0
  %437 = vmatprep.subr.mxu0 0.0
  %438 = vmatpush1.msra.mxu0 0.0
  %439 = vmatprep.subr.mxu0 0.0
  %440 = vmatpush1.msra.mxu0 0.0
  %441 = vmatprep.subr.mxu0 0.0
  %442 = vmatpush1.msra.mxu0 0.0
  %443 = vmatprep.subr.mxu0 0.0
  %444 = vmatpush1.msra.mxu0 0.0
  %445 = vmatprep.subr.mxu0 0.0
  %446 = vmatpush1.msra.mxu0 0.0
  %447 = vmatprep.subr.mxu0 0.0
  %448 = vmatpush1.msra.mxu0 0.0
  %449 = vmatprep.subr.mxu0 0.0
  %450 = vmatpush1.msra.mxu0 0.0
  %451 = vmatprep.subr.mxu0 0.0
  %452 = vmatpush1.msra.mxu0 0.0
  %453 = vmatprep.subr.mxu0 0.0
  %454 = vmatpush1.msra.mxu0 0.0
  %455 = vmatprep.subr.mxu0 0.0
  %456 = vmatpush1.msra.mxu0 0.0
  %457 = vmatprep.subr.mxu0 0.0
  %458 = vmatpush1.msra.mxu0 0.0
  %459 = vmatprep.subr.mxu0 0.0
  %460 = vmatpush1.msra.mxu0 0.0
  %461 = vmatprep.subr.mxu0 0.0
  %462 = vmatpush1.msra.mxu0 0.0
  %463 = vmatprep.subr.mxu0 0.0
  %464 = vmatpush1.msra.mxu0 0.0
  %465 = vmatprep.subr.mxu0 0.0
  %466 = vmatpush1.msra.mxu0 0.0
  %467 = vmatprep.subr.mxu0 0.0
  %468 = vmatpush1.msra.mxu0 0.0
  %469 = vmatprep.subr.mxu0 0.0
  %470 = vmatpush1.msra.mxu0 0.0
  %471 = vmatprep.subr.mxu0 0.0
  %472 = vmatpush1.msra.mxu0 0.0
  %473 = vmatprep.subr.mxu0 0.0
  %474 = vmatpush1.msra.mxu0 0.0
  %475 = vmatprep.subr.mxu0 0.0
  %476 = vmatpush1.msra.mxu0 0.0
  %477 = vmatprep.subr.mxu0 0.0
  %478 = vmatpush1.msra.mxu0 0.0
  %479 = vmatprep.subr.mxu0 0.0
  %480 = vmatpush1.msra.mxu0 0.0
  %481 = vmatprep.subr.mxu0 0.0
  %482 = vmatpush1.msra.mxu0 0.0
  %483 = vmatprep.subr.mxu0 0.0
  %484 = vmatpush1.msra.mxu0 0.0
  %485 = vmatprep.subr.mxu0 0.0
  %486 = vmatpush1.msra.mxu0 0.0
  %487 = vmatprep.subr.mxu0 0.0
  %488 = vmatpush1.msra.mxu0 0.0
  %489 = vmatprep.mubr.f32.mxu0 0.0
  %490 = vmatmul.mubr.f32.gmra.mrb[0].mxu0 %v423
  %v491 = vpop.f32.mrb[0].mxu0
  %v492 = vadd.f32 %v170, %v491
  %v493 = vpop.f32.mrb[0].mxu0
  %494 = vdwg.mxu0
  %496 = vrot.lane.b32.xlu0 %v492, 96
  %v497 = vpop.permute.xlu0 %496
  %v499 = vadd.f32 %v302, %v497
  %v500 = vxor.u32 %v499, 2147483648
  %v501 = vmul.f32 %v500, 1.442695
  %v502 = vpow.pop %v501
  %v503 = vadd.f32 %v502, 1.0
  %v504 = vrcp.pop %v503
  %v505 = vmul.f32 1.0, %v504
  %v506 = vadd.f32 %v303, %v497
  %v507 = vxor.u32 %v506, 2147483648
  %v508 = vmul.f32 %v507, 1.442695
  %v509 = vpow.pop %v508
  %v510 = vadd.f32 %v509, 1.0
  %v511 = vrcp.pop %v510
  %v512 = vmul.f32 1.0, %v511
  %513 = vrot.lane.b32.xlu0 %v492, 32
  %v514 = vpop.permute.xlu0 %513
  %v516 = vmul.f32 %v505, %v514
  %518 = vrot.lane.b32.xlu0 %v516, 64
  %v519 = vpop.permute.xlu0 %518
  %v521 = vadd.f32 %v303, %v519
  %v522 = vtanh.pop %v521
  %v523 = vsub.f32 1.0, %v512
  %525 = vrot.lane.b32.xlu0 %v522, 96
  %v526 = vpop.permute.xlu0 %525
  %v528 = vmul.f32 %v523, %v526
  %v529 = vmul.f32 %v512, %v291
  %v530 = vadd.f32 %v528, %v529
  %532 = vset.pattern.permute.xlu0 0
  %533 = vperm.xlu0 %532, %v309
  %v534 = vpop.permute.xlu0 %533
  %v536 = vmul.f32 %v534, %v530
  %v537 = vsub.f32 1.0, %v309
  %539 = vset.pattern.permute.xlu0 0
  %540 = vperm.xlu0 %539, %v537
  %v541 = vpop.permute.xlu0 %540
  %v543 = vmul.f32 %v541, %v291
  %v544 = vadd.f32 %v536, %v543
  %546 = vrot.lane.b32.xlu0 %v421, 96
  %v547 = vpop.permute.xlu0 %546
  %s549 = scalar_lea.vmem %s6, 8
  %550 = vst.msk [vmem:[%s549] sm:$0xff] %vm52, %v547
  %s551 = scalar_lea.vmem %s7, 48
  %552 = vst.msk [vmem:[%s551] sm:$0xff] %vm52, %v544
  %s553 = scalar_lea.vmem %s0, 32
  %v554 = vld [vmem:[%s553] sm:$0xff]
  %s555 = scalar_lea.vmem %s0, 80
  %v556 = vld [vmem:[%s555] sm:$0xff]
  %v557 = vld [vmem:[%s555 + $0x8] sm:$0xff]
  %vm558 = vcmp.gt.s32.totalorder %v35, 2
  %v559 = vsel %vm558, 1, 0
  %v560 = vcvt.s32.f32 %v559
  %vm561 = vcmp.gt.s32.totalorder %v35, 5
  %v562 = vsel %vm561, 1, 0
  %v563 = vcvt.s32.f32 %v562
  %v564 = vsel %vm52, %v547, 0
  %566 = vmatprep.subr.mxu0 0.0
  %567 = vmatpush1.msra.mxu0 %v25
  %568 = vmatprep.subr.mxu0 0.0
  %569 = vmatpush1.msra.mxu0 %v26
  %570 = vmatprep.subr.mxu0 0.0
  %571 = vmatpush1.msra.mxu0 %v27
  %572 = vmatprep.subr.mxu0 0.0
  %573 = vmatpush1.msra.mxu0 %v28
  %574 = vmatprep.subr.mxu0 0.0
  %575 = vmatpush1.msra.mxu0 0.0
  %576 = vmatprep.subr.mxu0 0.0
  %577 = vmatpush1.msra.mxu0 0.0
  %578 = vmatprep.subr.mxu0 0.0
  %579 = vmatpush1.msra.mxu0 0.0
  %580 = vmatprep.subr.mxu0 0.0
  %581 = vmatpush1.msra.mxu0 0.0
  %582 = vmatprep.subr.mxu0 0.0
  %583 = vmatpush1.msra.mxu0 0.0
  %584 = vmatprep.subr.mxu0 0.0
  %585 = vmatpush1.msra.mxu0 0.0
  %586 = vmatprep.subr.mxu0 0.0
  %587 = vmatpush1.msra.mxu0 0.0
  %588 = vmatprep.subr.mxu0 0.0
  %589 = vmatpush1.msra.mxu0 0.0
  %590 = vmatprep.subr.mxu0 0.0
  %591 = vmatpush1.msra.mxu0 0.0
  %592 = vmatprep.subr.mxu0 0.0
  %593 = vmatpush1.msra.mxu0 0.0
  %594 = vmatprep.subr.mxu0 0.0
  %595 = vmatpush1.msra.mxu0 0.0
  %596 = vmatprep.subr.mxu0 0.0
  %597 = vmatpush1.msra.mxu0 0.0
  %598 = vmatprep.subr.mxu0 0.0
  %599 = vmatpush1.msra.mxu0 0.0
  %600 = vmatprep.subr.mxu0 0.0
  %601 = vmatpush1.msra.mxu0 0.0
  %602 = vmatprep.subr.mxu0 0.0
  %603 = vmatpush1.msra.mxu0 0.0
  %604 = vmatprep.subr.mxu0 0.0
  %605 = vmatpush1.msra.mxu0 0.0
  %606 = vmatprep.subr.mxu0 0.0
  %607 = vmatpush1.msra.mxu0 0.0
  %608 = vmatprep.subr.mxu0 0.0
  %609 = vmatpush1.msra.mxu0 0.0
  %610 = vmatprep.subr.mxu0 0.0
  %611 = vmatpush1.msra.mxu0 0.0
  %612 = vmatprep.subr.mxu0 0.0
  %613 = vmatpush1.msra.mxu0 0.0
  %614 = vmatprep.subr.mxu0 0.0
  %615 = vmatpush1.msra.mxu0 0.0
  %616 = vmatprep.subr.mxu0 0.0
  %617 = vmatpush1.msra.mxu0 0.0
  %618 = vmatprep.subr.mxu0 0.0
  %619 = vmatpush1.msra.mxu0 0.0
  %620 = vmatprep.subr.mxu0 0.0
  %621 = vmatpush1.msra.mxu0 0.0
  %622 = vmatprep.subr.mxu0 0.0
  %623 = vmatpush1.msra.mxu0 0.0
  %624 = vmatprep.subr.mxu0 0.0
  %625 = vmatpush1.msra.mxu0 0.0
  %626 = vmatprep.subr.mxu0 0.0
  %627 = vmatpush1.msra.mxu0 0.0
  %628 = vmatprep.subr.mxu0 0.0
  %629 = vmatpush1.msra.mxu0 0.0
  %630 = vmatprep.mubr.f32.mxu0 0.0
  %631 = vmatmul.mubr.f32.gmra.mrb[0].mxu0 %v564
  %v632 = vpop.f32.mrb[0].mxu0
  %v633 = vadd.f32 %v50, %v632
  %v634 = vpop.f32.mrb[0].mxu0
  %635 = vdwg.mxu0
  %v636 = vadd.f32 %v554, %v633
  %v637 = vxor.u32 %v636, 2147483648
  %v638 = vmul.f32 %v637, 1.442695
  %v639 = vpow.pop %v638
  %v640 = vadd.f32 %v639, 1.0
  %v641 = vrcp.pop %v640
  %v642 = vmul.f32 1.0, %v641
  %644 = vrot.lane.b32.xlu0 %v633, 64
  %v645 = vpop.permute.xlu0 %644
  %v647 = vmul.f32 %v642, %v645
  %649 = vrot.lane.b32.xlu0 %v647, 64
  %v650 = vpop.permute.xlu0 %649
  %v652 = vadd.f32 %v554, %v650
  %v653 = vtanh.pop %v652
  %v654 = vsub.f32 1.0, %v642
  %656 = vrot.lane.b32.xlu0 %v653, 96
  %v657 = vpop.permute.xlu0 %656
  %v659 = vmul.f32 %v654, %v657
  %v660 = vmul.f32 %v642, %v421
  %v661 = vadd.f32 %v659, %v660
  %663 = vset.pattern.permute.xlu0 0
  %664 = vperm.xlu0 %663, %v560
  %v665 = vpop.permute.xlu0 %664
  %v667 = vmul.f32 %v665, %v661
  %v668 = vsub.f32 1.0, %v560
  %670 = vset.pattern.permute.xlu0 0
  %671 = vperm.xlu0 %670, %v668
  %v672 = vpop.permute.xlu0 %671
  %v674 = vmul.f32 %v672, %v421
  %v675 = vadd.f32 %v667, %v674
  %v677 = vsel %vm52, %v544, 0
  %679 = vmatprep.subr.mxu0 0.0
  %680 = vmatpush1.msra.mxu0 %v29
  %681 = vmatprep.subr.mxu0 0.0
  %682 = vmatpush1.msra.mxu0 %v30
  %683 = vmatprep.subr.mxu0 0.0
  %684 = vmatpush1.msra.mxu0 %v31
  %685 = vmatprep.subr.mxu0 0.0
  %686 = vmatpush1.msra.mxu0 %v32
  %687 = vmatprep.subr.mxu0 0.0
  %688 = vmatpush1.msra.mxu0 0.0
  %689 = vmatprep.subr.mxu0 0.0
  %690 = vmatpush1.msra.mxu0 0.0
  %691 = vmatprep.subr.mxu0 0.0
  %692 = vmatpush1.msra.mxu0 0.0
  %693 = vmatprep.subr.mxu0 0.0
  %694 = vmatpush1.msra.mxu0 0.0
  %695 = vmatprep.subr.mxu0 0.0
  %696 = vmatpush1.msra.mxu0 0.0
  %697 = vmatprep.subr.mxu0 0.0
  %698 = vmatpush1.msra.mxu0 0.0
  %699 = vmatprep.subr.mxu0 0.0
  %700 = vmatpush1.msra.mxu0 0.0
  %701 = vmatprep.subr.mxu0 0.0
  %702 = vmatpush1.msra.mxu0 0.0
  %703 = vmatprep.subr.mxu0 0.0
  %704 = vmatpush1.msra.mxu0 0.0
  %705 = vmatprep.subr.mxu0 0.0
  %706 = vmatpush1.msra.mxu0 0.0
  %707 = vmatprep.subr.mxu0 0.0
  %708 = vmatpush1.msra.mxu0 0.0
  %709 = vmatprep.subr.mxu0 0.0
  %710 = vmatpush1.msra.mxu0 0.0
  %711 = vmatprep.subr.mxu0 0.0
  %712 = vmatpush1.msra.mxu0 0.0
  %713 = vmatprep.subr.mxu0 0.0
  %714 = vmatpush1.msra.mxu0 0.0
  %715 = vmatprep.subr.mxu0 0.0
  %716 = vmatpush1.msra.mxu0 0.0
  %717 = vmatprep.subr.mxu0 0.0
  %718 = vmatpush1.msra.mxu0 0.0
  %719 = vmatprep.subr.mxu0 0.0
  %720 = vmatpush1.msra.mxu0 0.0
  %721 = vmatprep.subr.mxu0 0.0
  %722 = vmatpush1.msra.mxu0 0.0
  %723 = vmatprep.subr.mxu0 0.0
  %724 = vmatpush1.msra.mxu0 0.0
  %725 = vmatprep.subr.mxu0 0.0
  %726 = vmatpush1.msra.mxu0 0.0
  %727 = vmatprep.subr.mxu0 0.0
  %728 = vmatpush1.msra.mxu0 0.0
  %729 = vmatprep.subr.mxu0 0.0
  %730 = vmatpush1.msra.mxu0 0.0
  %731 = vmatprep.subr.mxu0 0.0
  %732 = vmatpush1.msra.mxu0 0.0
  %733 = vmatprep.subr.mxu0 0.0
  %734 = vmatpush1.msra.mxu0 0.0
  %735 = vmatprep.subr.mxu0 0.0
  %736 = vmatpush1.msra.mxu0 0.0
  %737 = vmatprep.subr.mxu0 0.0
  %738 = vmatpush1.msra.mxu0 0.0
  %739 = vmatprep.subr.mxu0 0.0
  %740 = vmatpush1.msra.mxu0 0.0
  %741 = vmatprep.subr.mxu0 0.0
  %742 = vmatpush1.msra.mxu0 0.0
  %743 = vmatprep.mubr.f32.mxu0 0.0
  %744 = vmatmul.mubr.f32.gmra.mrb[0].mxu0 %v677
  %v745 = vpop.f32.mrb[0].mxu0
  %v746 = vadd.f32 %v170, %v745
  %v747 = vpop.f32.mrb[0].mxu0
  %748 = vdwg.mxu0
  %750 = vrot.lane.b32.xlu0 %v746, 96
  %v751 = vpop.permute.xlu0 %750
  %v753 = vadd.f32 %v556, %v751
  %v754 = vxor.u32 %v753, 2147483648
  %v755 = vmul.f32 %v754, 1.442695
  %v756 = vpow.pop %v755
  %v757 = vadd.f32 %v756, 1.0
  %v758 = vrcp.pop %v757
  %v759 = vmul.f32 1.0, %v758
  %v760 = vadd.f32 %v557, %v751
  %v761 = vxor.u32 %v760, 2147483648
  %v762 = vmul.f32 %v761, 1.442695
  %v763 = vpow.pop %v762
  %v764 = vadd.f32 %v763, 1.0
  %v765 = vrcp.pop %v764
  %v766 = vmul.f32 1.0, %v765
  %767 = vrot.lane.b32.xlu0 %v746, 32
  %v768 = vpop.permute.xlu0 %767
  %v770 = vmul.f32 %v759, %v768
  %772 = vrot.lane.b32.xlu0 %v770, 64
  %v773 = vpop.permute.xlu0 %772
  %v775 = vadd.f32 %v557, %v773
  %v776 = vtanh.pop %v775
  %v777 = vsub.f32 1.0, %v766
  %779 = vrot.lane.b32.xlu0 %v776, 96
  %v780 = vpop.permute.xlu0 %779
  %v782 = vmul.f32 %v777, %v780
  %v783 = vmul.f32 %v766, %v544
  %v784 = vadd.f32 %v782, %v783
  %786 = vset.pattern.permute.xlu0 0
  %787 = vperm.xlu0 %786, %v563
  %v788 = vpop.permute.xlu0 %787
  %v790 = vmul.f32 %v788, %v784
  %v791 = vsub.f32 1.0, %v563
  %793 = vset.pattern.permute.xlu0 0
  %794 = vperm.xlu0 %793, %v791
  %v795 = vpop.permute.xlu0 %794
  %v797 = vmul.f32 %v795, %v544
  %v798 = vadd.f32 %v790, %v797
  %800 = vrot.lane.b32.xlu0 %v675, 96
  %v801 = vpop.permute.xlu0 %800
  %s803 = scalar_lea.vmem %s6, 16
  %804 = vst.msk [vmem:[%s803] sm:$0xff] %vm52, %v801
  %s805 = scalar_lea.vmem %s7, 40
  %806 = vst.msk [vmem:[%s805] sm:$0xff] %vm52, %v798
  %s807 = scalar_lea.vmem %s0, 48
  %v808 = vld [vmem:[%s807] sm:$0xff]
  %s809 = scalar_lea.vmem %s0, 64
  %v810 = vld [vmem:[%s809] sm:$0xff]
  %v811 = vld [vmem:[%s809 + $0x8] sm:$0xff]
  %vm812 = vcmp.gt.s32.totalorder %v35, 3
  %v813 = vsel %vm812, 1, 0
  %v814 = vcvt.s32.f32 %v813
  %vm815 = vcmp.gt.s32.totalorder %v35, 4
  %v816 = vsel %vm815, 1, 0
  %v817 = vcvt.s32.f32 %v816
  %v818 = vsel %vm52, %v801, 0
  %820 = vmatprep.subr.mxu0 0.0
  %821 = vmatpush1.msra.mxu0 %v25
  %822 = vmatprep.subr.mxu0 0.0
  %823 = vmatpush1.msra.mxu0 %v26
  %824 = vmatprep.subr.mxu0 0.0
  %825 = vmatpush1.msra.mxu0 %v27
  %826 = vmatprep.subr.mxu0 0.0
  %827 = vmatpush1.msra.mxu0 %v28
  %828 = vmatprep.subr.mxu0 0.0
  %829 = vmatpush1.msra.mxu0 0.0
  %830 = vmatprep.subr.mxu0 0.0
  %831 = vmatpush1.msra.mxu0 0.0
  %832 = vmatprep.subr.mxu0 0.0
  %833 = vmatpush1.msra.mxu0 0.0
  %834 = vmatprep.subr.mxu0 0.0
  %835 = vmatpush1.msra.mxu0 0.0
  %836 = vmatprep.subr.mxu0 0.0
  %837 = vmatpush1.msra.mxu0 0.0
  %838 = vmatprep.subr.mxu0 0.0
  %839 = vmatpush1.msra.mxu0 0.0
  %840 = vmatprep.subr.mxu0 0.0
  %841 = vmatpush1.msra.mxu0 0.0
  %842 = vmatprep.subr.mxu0 0.0
  %843 = vmatpush1.msra.mxu0 0.0
  %844 = vmatprep.subr.mxu0 0.0
  %845 = vmatpush1.msra.mxu0 0.0
  %846 = vmatprep.subr.mxu0 0.0
  %847 = vmatpush1.msra.mxu0 0.0
  %848 = vmatprep.subr.mxu0 0.0
  %849 = vmatpush1.msra.mxu0 0.0
  %850 = vmatprep.subr.mxu0 0.0
  %851 = vmatpush1.msra.mxu0 0.0
  %852 = vmatprep.subr.mxu0 0.0
  %853 = vmatpush1.msra.mxu0 0.0
  %854 = vmatprep.subr.mxu0 0.0
  %855 = vmatpush1.msra.mxu0 0.0
  %856 = vmatprep.subr.mxu0 0.0
  %857 = vmatpush1.msra.mxu0 0.0
  %858 = vmatprep.subr.mxu0 0.0
  %859 = vmatpush1.msra.mxu0 0.0
  %860 = vmatprep.subr.mxu0 0.0
  %861 = vmatpush1.msra.mxu0 0.0
  %862 = vmatprep.subr.mxu0 0.0
  %863 = vmatpush1.msra.mxu0 0.0
  %864 = vmatprep.subr.mxu0 0.0
  %865 = vmatpush1.msra.mxu0 0.0
  %866 = vmatprep.subr.mxu0 0.0
  %867 = vmatpush1.msra.mxu0 0.0
  %868 = vmatprep.subr.mxu0 0.0
  %869 = vmatpush1.msra.mxu0 0.0
  %870 = vmatprep.subr.mxu0 0.0
  %871 = vmatpush1.msra.mxu0 0.0
  %872 = vmatprep.subr.mxu0 0.0
  %873 = vmatpush1.msra.mxu0 0.0
  %874 = vmatprep.subr.mxu0 0.0
  %875 = vmatpush1.msra.mxu0 0.0
  %876 = vmatprep.subr.mxu0 0.0
  %877 = vmatpush1.msra.mxu0 0.0
  %878 = vmatprep.subr.mxu0 0.0
  %879 = vmatpush1.msra.mxu0 0.0
  %880 = vmatprep.subr.mxu0 0.0
  %881 = vmatpush1.msra.mxu0 0.0
  %882 = vmatprep.subr.mxu0 0.0
  %883 = vmatpush1.msra.mxu0 0.0
  %884 = vmatprep.mubr.f32.mxu0 0.0
  %885 = vmatmul.mubr.f32.gmra.mrb[0].mxu0 %v818
  %v886 = vpop.f32.mrb[0].mxu0
  %v887 = vadd.f32 %v50, %v886
  %v888 = vpop.f32.mrb[0].mxu0
  %889 = vdwg.mxu0
  %v890 = vadd.f32 %v808, %v887
  %v891 = vxor.u32 %v890, 2147483648
  %v892 = vmul.f32 %v891, 1.442695
  %v893 = vpow.pop %v892
  %v894 = vadd.f32 %v893, 1.0
  %v895 = vrcp.pop %v894
  %v896 = vmul.f32 1.0, %v895
  %898 = vrot.lane.b32.xlu0 %v887, 64
  %v899 = vpop.permute.xlu0 %898
  %v901 = vmul.f32 %v896, %v899
  %903 = vrot.lane.b32.xlu0 %v901, 64
  %v904 = vpop.permute.xlu0 %903
  %v906 = vadd.f32 %v808, %v904
  %v907 = vtanh.pop %v906
  %v908 = vsub.f32 1.0, %v896
  %910 = vrot.lane.b32.xlu0 %v907, 96
  %v911 = vpop.permute.xlu0 %910
  %v913 = vmul.f32 %v908, %v911
  %v914 = vmul.f32 %v896, %v675
  %v915 = vadd.f32 %v913, %v914
  %917 = vset.pattern.permute.xlu0 0
  %918 = vperm.xlu0 %917, %v814
  %v919 = vpop.permute.xlu0 %918
  %v921 = vmul.f32 %v919, %v915
  %v922 = vsub.f32 1.0, %v814
  %924 = vset.pattern.permute.xlu0 0
  %925 = vperm.xlu0 %924, %v922
  %v926 = vpop.permute.xlu0 %925
  %v928 = vmul.f32 %v926, %v675
  %v929 = vadd.f32 %v921, %v928
  %v931 = vsel %vm52, %v798, 0
  %933 = vmatprep.subr.mxu0 0.0
  %934 = vmatpush1.msra.mxu0 %v29
  %935 = vmatprep.subr.mxu0 0.0
  %936 = vmatpush1.msra.mxu0 %v30
  %937 = vmatprep.subr.mxu0 0.0
  %938 = vmatpush1.msra.mxu0 %v31
  %939 = vmatprep.subr.mxu0 0.0
  %940 = vmatpush1.msra.mxu0 %v32
  %941 = vmatprep.subr.mxu0 0.0
  %942 = vmatpush1.msra.mxu0 0.0
  %943 = vmatprep.subr.mxu0 0.0
  %944 = vmatpush1.msra.mxu0 0.0
  %945 = vmatprep.subr.mxu0 0.0
  %946 = vmatpush1.msra.mxu0 0.0
  %947 = vmatprep.subr.mxu0 0.0
  %948 = vmatpush1.msra.mxu0 0.0
  %949 = vmatprep.subr.mxu0 0.0
  %950 = vmatpush1.msra.mxu0 0.0
  %951 = vmatprep.subr.mxu0 0.0
  %952 = vmatpush1.msra.mxu0 0.0
  %953 = vmatprep.subr.mxu0 0.0
  %954 = vmatpush1.msra.mxu0 0.0
  %955 = vmatprep.subr.mxu0 0.0
  %956 = vmatpush1.msra.mxu0 0.0
  %957 = vmatprep.subr.mxu0 0.0
  %958 = vmatpush1.msra.mxu0 0.0
  %959 = vmatprep.subr.mxu0 0.0
  %960 = vmatpush1.msra.mxu0 0.0
  %961 = vmatprep.subr.mxu0 0.0
  %962 = vmatpush1.msra.mxu0 0.0
  %963 = vmatprep.subr.mxu0 0.0
  %964 = vmatpush1.msra.mxu0 0.0
  %965 = vmatprep.subr.mxu0 0.0
  %966 = vmatpush1.msra.mxu0 0.0
  %967 = vmatprep.subr.mxu0 0.0
  %968 = vmatpush1.msra.mxu0 0.0
  %969 = vmatprep.subr.mxu0 0.0
  %970 = vmatpush1.msra.mxu0 0.0
  %971 = vmatprep.subr.mxu0 0.0
  %972 = vmatpush1.msra.mxu0 0.0
  %973 = vmatprep.subr.mxu0 0.0
  %974 = vmatpush1.msra.mxu0 0.0
  %975 = vmatprep.subr.mxu0 0.0
  %976 = vmatpush1.msra.mxu0 0.0
  %977 = vmatprep.subr.mxu0 0.0
  %978 = vmatpush1.msra.mxu0 0.0
  %979 = vmatprep.subr.mxu0 0.0
  %980 = vmatpush1.msra.mxu0 0.0
  %981 = vmatprep.subr.mxu0 0.0
  %982 = vmatpush1.msra.mxu0 0.0
  %983 = vmatprep.subr.mxu0 0.0
  %984 = vmatpush1.msra.mxu0 0.0
  %985 = vmatprep.subr.mxu0 0.0
  %986 = vmatpush1.msra.mxu0 0.0
  %987 = vmatprep.subr.mxu0 0.0
  %988 = vmatpush1.msra.mxu0 0.0
  %989 = vmatprep.subr.mxu0 0.0
  %990 = vmatpush1.msra.mxu0 0.0
  %991 = vmatprep.subr.mxu0 0.0
  %992 = vmatpush1.msra.mxu0 0.0
  %993 = vmatprep.subr.mxu0 0.0
  %994 = vmatpush1.msra.mxu0 0.0
  %995 = vmatprep.subr.mxu0 0.0
  %996 = vmatpush1.msra.mxu0 0.0
  %997 = vmatprep.mubr.f32.mxu0 0.0
  %998 = vmatmul.mubr.f32.gmra.mrb[0].mxu0 %v931
  %v999 = vpop.f32.mrb[0].mxu0
  %v1000 = vadd.f32 %v170, %v999
  %v1001 = vpop.f32.mrb[0].mxu0
  %1002 = vdwg.mxu0
  %1004 = vrot.lane.b32.xlu0 %v1000, 96
  %v1005 = vpop.permute.xlu0 %1004
  %v1007 = vadd.f32 %v810, %v1005
  %v1008 = vxor.u32 %v1007, 2147483648
  %v1009 = vmul.f32 %v1008, 1.442695
  %v1010 = vpow.pop %v1009
  %v1011 = vadd.f32 %v1010, 1.0
  %v1012 = vrcp.pop %v1011
  %v1013 = vmul.f32 1.0, %v1012
  %v1014 = vadd.f32 %v811, %v1005
  %v1015 = vxor.u32 %v1014, 2147483648
  %v1016 = vmul.f32 %v1015, 1.442695
  %v1017 = vpow.pop %v1016
  %v1018 = vadd.f32 %v1017, 1.0
  %v1019 = vrcp.pop %v1018
  %v1020 = vmul.f32 1.0, %v1019
  %1021 = vrot.lane.b32.xlu0 %v1000, 32
  %v1022 = vpop.permute.xlu0 %1021
  %v1024 = vmul.f32 %v1013, %v1022
  %1026 = vrot.lane.b32.xlu0 %v1024, 64
  %v1027 = vpop.permute.xlu0 %1026
  %v1029 = vadd.f32 %v811, %v1027
  %v1030 = vtanh.pop %v1029
  %v1031 = vsub.f32 1.0, %v1020
  %1033 = vrot.lane.b32.xlu0 %v1030, 96
  %v1034 = vpop.permute.xlu0 %1033
  %v1036 = vmul.f32 %v1031, %v1034
  %v1037 = vmul.f32 %v1020, %v798
  %v1038 = vadd.f32 %v1036, %v1037
  %1040 = vset.pattern.permute.xlu0 0
  %1041 = vperm.xlu0 %1040, %v817
  %v1042 = vpop.permute.xlu0 %1041
  %v1044 = vmul.f32 %v1042, %v1038
  %v1045 = vsub.f32 1.0, %v817
  %1047 = vset.pattern.permute.xlu0 0
  %1048 = vperm.xlu0 %1047, %v1045
  %v1049 = vpop.permute.xlu0 %1048
  %v1051 = vmul.f32 %v1049, %v798
  %v1052 = vadd.f32 %v1044, %v1051
  %1054 = vrot.lane.b32.xlu0 %v929, 96
  %v1055 = vpop.permute.xlu0 %1054
  %s1057 = scalar_lea.vmem %s6, 24
  %1058 = vst.msk [vmem:[%s1057] sm:$0xff] %vm52, %v1055
  %s1059 = scalar_lea.vmem %s7, 32
  %1060 = vst.msk [vmem:[%s1059] sm:$0xff] %vm52, %v1052
  %v1061 = vld [vmem:[%s809] sm:$0xff]
  %v1062 = vld [vmem:[%s807] sm:$0xff]
  %v1063 = vld [vmem:[%s807 + $0x8] sm:$0xff]
  %v1064 = vsel %vm52, %v1055, 0
  %1066 = vmatprep.subr.mxu0 0.0
  %1067 = vmatpush1.msra.mxu0 %v25
  %1068 = vmatprep.subr.mxu0 0.0
  %1069 = vmatpush1.msra.mxu0 %v26
  %1070 = vmatprep.subr.mxu0 0.0
  %1071 = vmatpush1.msra.mxu0 %v27
  %1072 = vmatprep.subr.mxu0 0.0
  %1073 = vmatpush1.msra.mxu0 %v28
  %1074 = vmatprep.subr.mxu0 0.0
  %1075 = vmatpush1.msra.mxu0 0.0
  %1076 = vmatprep.subr.mxu0 0.0
  %1077 = vmatpush1.msra.mxu0 0.0
  %1078 = vmatprep.subr.mxu0 0.0
  %1079 = vmatpush1.msra.mxu0 0.0
  %1080 = vmatprep.subr.mxu0 0.0
  %1081 = vmatpush1.msra.mxu0 0.0
  %1082 = vmatprep.subr.mxu0 0.0
  %1083 = vmatpush1.msra.mxu0 0.0
  %1084 = vmatprep.subr.mxu0 0.0
  %1085 = vmatpush1.msra.mxu0 0.0
  %1086 = vmatprep.subr.mxu0 0.0
  %1087 = vmatpush1.msra.mxu0 0.0
  %1088 = vmatprep.subr.mxu0 0.0
  %1089 = vmatpush1.msra.mxu0 0.0
  %1090 = vmatprep.subr.mxu0 0.0
  %1091 = vmatpush1.msra.mxu0 0.0
  %1092 = vmatprep.subr.mxu0 0.0
  %1093 = vmatpush1.msra.mxu0 0.0
  %1094 = vmatprep.subr.mxu0 0.0
  %1095 = vmatpush1.msra.mxu0 0.0
  %1096 = vmatprep.subr.mxu0 0.0
  %1097 = vmatpush1.msra.mxu0 0.0
  %1098 = vmatprep.subr.mxu0 0.0
  %1099 = vmatpush1.msra.mxu0 0.0
  %1100 = vmatprep.subr.mxu0 0.0
  %1101 = vmatpush1.msra.mxu0 0.0
  %1102 = vmatprep.subr.mxu0 0.0
  %1103 = vmatpush1.msra.mxu0 0.0
  %1104 = vmatprep.subr.mxu0 0.0
  %1105 = vmatpush1.msra.mxu0 0.0
  %1106 = vmatprep.subr.mxu0 0.0
  %1107 = vmatpush1.msra.mxu0 0.0
  %1108 = vmatprep.subr.mxu0 0.0
  %1109 = vmatpush1.msra.mxu0 0.0
  %1110 = vmatprep.subr.mxu0 0.0
  %1111 = vmatpush1.msra.mxu0 0.0
  %1112 = vmatprep.subr.mxu0 0.0
  %1113 = vmatpush1.msra.mxu0 0.0
  %1114 = vmatprep.subr.mxu0 0.0
  %1115 = vmatpush1.msra.mxu0 0.0
  %1116 = vmatprep.subr.mxu0 0.0
  %1117 = vmatpush1.msra.mxu0 0.0
  %1118 = vmatprep.subr.mxu0 0.0
  %1119 = vmatpush1.msra.mxu0 0.0
  %1120 = vmatprep.subr.mxu0 0.0
  %1121 = vmatpush1.msra.mxu0 0.0
  %1122 = vmatprep.subr.mxu0 0.0
  %1123 = vmatpush1.msra.mxu0 0.0
  %1124 = vmatprep.subr.mxu0 0.0
  %1125 = vmatpush1.msra.mxu0 0.0
  %1126 = vmatprep.subr.mxu0 0.0
  %1127 = vmatpush1.msra.mxu0 0.0
  %1128 = vmatprep.subr.mxu0 0.0
  %1129 = vmatpush1.msra.mxu0 0.0
  %1130 = vmatprep.mubr.f32.mxu0 0.0
  %1131 = vmatmul.mubr.f32.gmra.mrb[0].mxu0 %v1064
  %v1132 = vpop.f32.mrb[0].mxu0
  %v1133 = vadd.f32 %v50, %v1132
  %v1134 = vpop.f32.mrb[0].mxu0
  %1135 = vdwg.mxu0
  %v1136 = vadd.f32 %v1061, %v1133
  %v1137 = vxor.u32 %v1136, 2147483648
  %v1138 = vmul.f32 %v1137, 1.442695
  %v1139 = vpow.pop %v1138
  %v1140 = vadd.f32 %v1139, 1.0
  %v1141 = vrcp.pop %v1140
  %v1142 = vmul.f32 1.0, %v1141
  %1144 = vrot.lane.b32.xlu0 %v1133, 64
  %v1145 = vpop.permute.xlu0 %1144
  %v1147 = vmul.f32 %v1142, %v1145
  %1149 = vrot.lane.b32.xlu0 %v1147, 64
  %v1150 = vpop.permute.xlu0 %1149
  %v1152 = vadd.f32 %v1061, %v1150
  %v1153 = vtanh.pop %v1152
  %v1154 = vsub.f32 1.0, %v1142
  %1156 = vrot.lane.b32.xlu0 %v1153, 96
  %v1157 = vpop.permute.xlu0 %1156
  %v1159 = vmul.f32 %v1154, %v1157
  %v1160 = vmul.f32 %v1142, %v929
  %v1161 = vadd.f32 %v1159, %v1160
  %v1162 = vmul.f32 %v1042, %v1161
  %v1163 = vmul.f32 %v1049, %v929
  %v1164 = vadd.f32 %v1162, %v1163
  %v1166 = vsel %vm52, %v1052, 0
  %1168 = vmatprep.subr.mxu0 0.0
  %1169 = vmatpush1.msra.mxu0 %v29
  %1170 = vmatprep.subr.mxu0 0.0
  %1171 = vmatpush1.msra.mxu0 %v30
  %1172 = vmatprep.subr.mxu0 0.0
  %1173 = vmatpush1.msra.mxu0 %v31
  %1174 = vmatprep.subr.mxu0 0.0
  %1175 = vmatpush1.msra.mxu0 %v32
  %1176 = vmatprep.subr.mxu0 0.0
  %1177 = vmatpush1.msra.mxu0 0.0
  %1178 = vmatprep.subr.mxu0 0.0
  %1179 = vmatpush1.msra.mxu0 0.0
  %1180 = vmatprep.subr.mxu0 0.0
  %1181 = vmatpush1.msra.mxu0 0.0
  %1182 = vmatprep.subr.mxu0 0.0
  %1183 = vmatpush1.msra.mxu0 0.0
  %1184 = vmatprep.subr.mxu0 0.0
  %1185 = vmatpush1.msra.mxu0 0.0
  %1186 = vmatprep.subr.mxu0 0.0
  %1187 = vmatpush1.msra.mxu0 0.0
  %1188 = vmatprep.subr.mxu0 0.0
  %1189 = vmatpush1.msra.mxu0 0.0
  %1190 = vmatprep.subr.mxu0 0.0
  %1191 = vmatpush1.msra.mxu0 0.0
  %1192 = vmatprep.subr.mxu0 0.0
  %1193 = vmatpush1.msra.mxu0 0.0
  %1194 = vmatprep.subr.mxu0 0.0
  %1195 = vmatpush1.msra.mxu0 0.0
  %1196 = vmatprep.subr.mxu0 0.0
  %1197 = vmatpush1.msra.mxu0 0.0
  %1198 = vmatprep.subr.mxu0 0.0
  %1199 = vmatpush1.msra.mxu0 0.0
  %1200 = vmatprep.subr.mxu0 0.0
  %1201 = vmatpush1.msra.mxu0 0.0
  %1202 = vmatprep.subr.mxu0 0.0
  %1203 = vmatpush1.msra.mxu0 0.0
  %1204 = vmatprep.subr.mxu0 0.0
  %1205 = vmatpush1.msra.mxu0 0.0
  %1206 = vmatprep.subr.mxu0 0.0
  %1207 = vmatpush1.msra.mxu0 0.0
  %1208 = vmatprep.subr.mxu0 0.0
  %1209 = vmatpush1.msra.mxu0 0.0
  %1210 = vmatprep.subr.mxu0 0.0
  %1211 = vmatpush1.msra.mxu0 0.0
  %1212 = vmatprep.subr.mxu0 0.0
  %1213 = vmatpush1.msra.mxu0 0.0
  %1214 = vmatprep.subr.mxu0 0.0
  %1215 = vmatpush1.msra.mxu0 0.0
  %1216 = vmatprep.subr.mxu0 0.0
  %1217 = vmatpush1.msra.mxu0 0.0
  %1218 = vmatprep.subr.mxu0 0.0
  %1219 = vmatpush1.msra.mxu0 0.0
  %1220 = vmatprep.subr.mxu0 0.0
  %1221 = vmatpush1.msra.mxu0 0.0
  %1222 = vmatprep.subr.mxu0 0.0
  %1223 = vmatpush1.msra.mxu0 0.0
  %1224 = vmatprep.subr.mxu0 0.0
  %1225 = vmatpush1.msra.mxu0 0.0
  %1226 = vmatprep.subr.mxu0 0.0
  %1227 = vmatpush1.msra.mxu0 0.0
  %1228 = vmatprep.subr.mxu0 0.0
  %1229 = vmatpush1.msra.mxu0 0.0
  %1230 = vmatprep.subr.mxu0 0.0
  %1231 = vmatpush1.msra.mxu0 0.0
  %1232 = vmatprep.mubr.f32.mxu0 0.0
  %1233 = vmatmul.mubr.f32.gmra.mrb[0].mxu0 %v1166
  %v1234 = vpop.f32.mrb[0].mxu0
  %v1235 = vadd.f32 %v170, %v1234
  %v1236 = vpop.f32.mrb[0].mxu0
  %1237 = vdwg.mxu0
  %1239 = vrot.lane.b32.xlu0 %v1235, 96
  %v1240 = vpop.permute.xlu0 %1239
  %v1242 = vadd.f32 %v1062, %v1240
  %v1243 = vxor.u32 %v1242, 2147483648
  %v1244 = vmul.f32 %v1243, 1.442695
  %v1245 = vpow.pop %v1244
  %v1246 = vadd.f32 %v1245, 1.0
  %v1247 = vrcp.pop %v1246
  %v1248 = vmul.f32 1.0, %v1247
  %v1249 = vadd.f32 %v1063, %v1240
  %v1250 = vxor.u32 %v1249, 2147483648
  %v1251 = vmul.f32 %v1250, 1.442695
  %v1252 = vpow.pop %v1251
  %v1253 = vadd.f32 %v1252, 1.0
  %v1254 = vrcp.pop %v1253
  %v1255 = vmul.f32 1.0, %v1254
  %1256 = vrot.lane.b32.xlu0 %v1235, 32
  %v1257 = vpop.permute.xlu0 %1256
  %v1259 = vmul.f32 %v1248, %v1257
  %1261 = vrot.lane.b32.xlu0 %v1259, 64
  %v1262 = vpop.permute.xlu0 %1261
  %v1264 = vadd.f32 %v1063, %v1262
  %v1265 = vtanh.pop %v1264
  %v1266 = vsub.f32 1.0, %v1255
  %1268 = vrot.lane.b32.xlu0 %v1265, 96
  %v1269 = vpop.permute.xlu0 %1268
  %v1271 = vmul.f32 %v1266, %v1269
  %v1272 = vmul.f32 %v1255, %v1052
  %v1273 = vadd.f32 %v1271, %v1272
  %v1274 = vmul.f32 %v919, %v1273
  %v1275 = vmul.f32 %v926, %v1052
  %v1276 = vadd.f32 %v1274, %v1275
  %1278 = vrot.lane.b32.xlu0 %v1164, 96
  %v1279 = vpop.permute.xlu0 %1278
  %s1281 = scalar_lea.vmem %s6, 32
  %1282 = vst.msk [vmem:[%s1281] sm:$0xff] %vm52, %v1279
  %s1283 = scalar_lea.vmem %s7, 24
  %1284 = vst.msk [vmem:[%s1283] sm:$0xff] %vm52, %v1276
  %v1285 = vld [vmem:[%s555] sm:$0xff]
  %v1286 = vld [vmem:[%s553] sm:$0xff]
  %v1287 = vld [vmem:[%s553 + $0x8] sm:$0xff]
  %v1288 = vsel %vm52, %v1279, 0
  %1290 = vmatprep.subr.mxu0 0.0
  %1291 = vmatpush1.msra.mxu0 %v25
  %1292 = vmatprep.subr.mxu0 0.0
  %1293 = vmatpush1.msra.mxu0 %v26
  %1294 = vmatprep.subr.mxu0 0.0
  %1295 = vmatpush1.msra.mxu0 %v27
  %1296 = vmatprep.subr.mxu0 0.0
  %1297 = vmatpush1.msra.mxu0 %v28
  %1298 = vmatprep.subr.mxu0 0.0
  %1299 = vmatpush1.msra.mxu0 0.0
  %1300 = vmatprep.subr.mxu0 0.0
  %1301 = vmatpush1.msra.mxu0 0.0
  %1302 = vmatprep.subr.mxu0 0.0
  %1303 = vmatpush1.msra.mxu0 0.0
  %1304 = vmatprep.subr.mxu0 0.0
  %1305 = vmatpush1.msra.mxu0 0.0
  %1306 = vmatprep.subr.mxu0 0.0
  %1307 = vmatpush1.msra.mxu0 0.0
  %1308 = vmatprep.subr.mxu0 0.0
  %1309 = vmatpush1.msra.mxu0 0.0
  %1310 = vmatprep.subr.mxu0 0.0
  %1311 = vmatpush1.msra.mxu0 0.0
  %1312 = vmatprep.subr.mxu0 0.0
  %1313 = vmatpush1.msra.mxu0 0.0
  %1314 = vmatprep.subr.mxu0 0.0
  %1315 = vmatpush1.msra.mxu0 0.0
  %1316 = vmatprep.subr.mxu0 0.0
  %1317 = vmatpush1.msra.mxu0 0.0
  %1318 = vmatprep.subr.mxu0 0.0
  %1319 = vmatpush1.msra.mxu0 0.0
  %1320 = vmatprep.subr.mxu0 0.0
  %1321 = vmatpush1.msra.mxu0 0.0
  %1322 = vmatprep.subr.mxu0 0.0
  %1323 = vmatpush1.msra.mxu0 0.0
  %1324 = vmatprep.subr.mxu0 0.0
  %1325 = vmatpush1.msra.mxu0 0.0
  %1326 = vmatprep.subr.mxu0 0.0
  %1327 = vmatpush1.msra.mxu0 0.0
  %1328 = vmatprep.subr.mxu0 0.0
  %1329 = vmatpush1.msra.mxu0 0.0
  %1330 = vmatprep.subr.mxu0 0.0
  %1331 = vmatpush1.msra.mxu0 0.0
  %1332 = vmatprep.subr.mxu0 0.0
  %1333 = vmatpush1.msra.mxu0 0.0
  %1334 = vmatprep.subr.mxu0 0.0
  %1335 = vmatpush1.msra.mxu0 0.0
  %1336 = vmatprep.subr.mxu0 0.0
  %1337 = vmatpush1.msra.mxu0 0.0
  %1338 = vmatprep.subr.mxu0 0.0
  %1339 = vmatpush1.msra.mxu0 0.0
  %1340 = vmatprep.subr.mxu0 0.0
  %1341 = vmatpush1.msra.mxu0 0.0
  %1342 = vmatprep.subr.mxu0 0.0
  %1343 = vmatpush1.msra.mxu0 0.0
  %1344 = vmatprep.subr.mxu0 0.0
  %1345 = vmatpush1.msra.mxu0 0.0
  %1346 = vmatprep.subr.mxu0 0.0
  %1347 = vmatpush1.msra.mxu0 0.0
  %1348 = vmatprep.subr.mxu0 0.0
  %1349 = vmatpush1.msra.mxu0 0.0
  %1350 = vmatprep.subr.mxu0 0.0
  %1351 = vmatpush1.msra.mxu0 0.0
  %1352 = vmatprep.subr.mxu0 0.0
  %1353 = vmatpush1.msra.mxu0 0.0
  %1354 = vmatprep.mubr.f32.mxu0 0.0
  %1355 = vmatmul.mubr.f32.gmra.mrb[0].mxu0 %v1288
  %v1356 = vpop.f32.mrb[0].mxu0
  %v1357 = vadd.f32 %v50, %v1356
  %v1358 = vpop.f32.mrb[0].mxu0
  %1359 = vdwg.mxu0
  %v1360 = vadd.f32 %v1285, %v1357
  %v1361 = vxor.u32 %v1360, 2147483648
  %v1362 = vmul.f32 %v1361, 1.442695
  %v1363 = vpow.pop %v1362
  %v1364 = vadd.f32 %v1363, 1.0
  %v1365 = vrcp.pop %v1364
  %v1366 = vmul.f32 1.0, %v1365
  %1368 = vrot.lane.b32.xlu0 %v1357, 64
  %v1369 = vpop.permute.xlu0 %1368
  %v1371 = vmul.f32 %v1366, %v1369
  %1373 = vrot.lane.b32.xlu0 %v1371, 64
  %v1374 = vpop.permute.xlu0 %1373
  %v1376 = vadd.f32 %v1285, %v1374
  %v1377 = vtanh.pop %v1376
  %v1378 = vsub.f32 1.0, %v1366
  %1380 = vrot.lane.b32.xlu0 %v1377, 96
  %v1381 = vpop.permute.xlu0 %1380
  %v1383 = vmul.f32 %v1378, %v1381
  %v1384 = vmul.f32 %v1366, %v1164
  %v1385 = vadd.f32 %v1383, %v1384
  %v1386 = vmul.f32 %v788, %v1385
  %v1387 = vmul.f32 %v795, %v1164
  %v1388 = vadd.f32 %v1386, %v1387
  %v1390 = vsel %vm52, %v1276, 0
  %1392 = vmatprep.subr.mxu0 0.0
  %1393 = vmatpush1.msra.mxu0 %v29
  %1394 = vmatprep.subr.mxu0 0.0
  %1395 = vmatpush1.msra.mxu0 %v30
  %1396 = vmatprep.subr.mxu0 0.0
  %1397 = vmatpush1.msra.mxu0 %v31
  %1398 = vmatprep.subr.mxu0 0.0
  %1399 = vmatpush1.msra.mxu0 %v32
  %1400 = vmatprep.subr.mxu0 0.0
  %1401 = vmatpush1.msra.mxu0 0.0
  %1402 = vmatprep.subr.mxu0 0.0
  %1403 = vmatpush1.msra.mxu0 0.0
  %1404 = vmatprep.subr.mxu0 0.0
  %1405 = vmatpush1.msra.mxu0 0.0
  %1406 = vmatprep.subr.mxu0 0.0
  %1407 = vmatpush1.msra.mxu0 0.0
  %1408 = vmatprep.subr.mxu0 0.0
  %1409 = vmatpush1.msra.mxu0 0.0
  %1410 = vmatprep.subr.mxu0 0.0
  %1411 = vmatpush1.msra.mxu0 0.0
  %1412 = vmatprep.subr.mxu0 0.0
  %1413 = vmatpush1.msra.mxu0 0.0
  %1414 = vmatprep.subr.mxu0 0.0
  %1415 = vmatpush1.msra.mxu0 0.0
  %1416 = vmatprep.subr.mxu0 0.0
  %1417 = vmatpush1.msra.mxu0 0.0
  %1418 = vmatprep.subr.mxu0 0.0
  %1419 = vmatpush1.msra.mxu0 0.0
  %1420 = vmatprep.subr.mxu0 0.0
  %1421 = vmatpush1.msra.mxu0 0.0
  %1422 = vmatprep.subr.mxu0 0.0
  %1423 = vmatpush1.msra.mxu0 0.0
  %1424 = vmatprep.subr.mxu0 0.0
  %1425 = vmatpush1.msra.mxu0 0.0
  %1426 = vmatprep.subr.mxu0 0.0
  %1427 = vmatpush1.msra.mxu0 0.0
  %1428 = vmatprep.subr.mxu0 0.0
  %1429 = vmatpush1.msra.mxu0 0.0
  %1430 = vmatprep.subr.mxu0 0.0
  %1431 = vmatpush1.msra.mxu0 0.0
  %1432 = vmatprep.subr.mxu0 0.0
  %1433 = vmatpush1.msra.mxu0 0.0
  %1434 = vmatprep.subr.mxu0 0.0
  %1435 = vmatpush1.msra.mxu0 0.0
  %1436 = vmatprep.subr.mxu0 0.0
  %1437 = vmatpush1.msra.mxu0 0.0
  %1438 = vmatprep.subr.mxu0 0.0
  %1439 = vmatpush1.msra.mxu0 0.0
  %1440 = vmatprep.subr.mxu0 0.0
  %1441 = vmatpush1.msra.mxu0 0.0
  %1442 = vmatprep.subr.mxu0 0.0
  %1443 = vmatpush1.msra.mxu0 0.0
  %1444 = vmatprep.subr.mxu0 0.0
  %1445 = vmatpush1.msra.mxu0 0.0
  %1446 = vmatprep.subr.mxu0 0.0
  %1447 = vmatpush1.msra.mxu0 0.0
  %1448 = vmatprep.subr.mxu0 0.0
  %1449 = vmatpush1.msra.mxu0 0.0
  %1450 = vmatprep.subr.mxu0 0.0
  %1451 = vmatpush1.msra.mxu0 0.0
  %1452 = vmatprep.subr.mxu0 0.0
  %1453 = vmatpush1.msra.mxu0 0.0
  %1454 = vmatprep.subr.mxu0 0.0
  %1455 = vmatpush1.msra.mxu0 0.0
  %1456 = vmatprep.mubr.f32.mxu0 0.0
  %1457 = vmatmul.mubr.f32.gmra.mrb[0].mxu0 %v1390
  %v1458 = vpop.f32.mrb[0].mxu0
  %v1459 = vadd.f32 %v170, %v1458
  %v1460 = vpop.f32.mrb[0].mxu0
  %1461 = vdwg.mxu0
  %1463 = vrot.lane.b32.xlu0 %v1459, 96
  %v1464 = vpop.permute.xlu0 %1463
  %v1466 = vadd.f32 %v1286, %v1464
  %v1467 = vxor.u32 %v1466, 2147483648
  %v1468 = vmul.f32 %v1467, 1.442695
  %v1469 = vpow.pop %v1468
  %v1470 = vadd.f32 %v1469, 1.0
  %v1471 = vrcp.pop %v1470
  %v1472 = vmul.f32 1.0, %v1471
  %v1473 = vadd.f32 %v1287, %v1464
  %v1474 = vxor.u32 %v1473, 2147483648
  %v1475 = vmul.f32 %v1474, 1.442695
  %v1476 = vpow.pop %v1475
  %v1477 = vadd.f32 %v1476, 1.0
  %v1478 = vrcp.pop %v1477
  %v1479 = vmul.f32 1.0, %v1478
  %1480 = vrot.lane.b32.xlu0 %v1459, 32
  %v1481 = vpop.permute.xlu0 %1480
  %v1483 = vmul.f32 %v1472, %v1481
  %1485 = vrot.lane.b32.xlu0 %v1483, 64
  %v1486 = vpop.permute.xlu0 %1485
  %v1488 = vadd.f32 %v1287, %v1486
  %v1489 = vtanh.pop %v1488
  %v1490 = vsub.f32 1.0, %v1479
  %1492 = vrot.lane.b32.xlu0 %v1489, 96
  %v1493 = vpop.permute.xlu0 %1492
  %v1495 = vmul.f32 %v1490, %v1493
  %v1496 = vmul.f32 %v1479, %v1276
  %v1497 = vadd.f32 %v1495, %v1496
  %v1498 = vmul.f32 %v665, %v1497
  %v1499 = vmul.f32 %v672, %v1276
  %v1500 = vadd.f32 %v1498, %v1499
  %1502 = vrot.lane.b32.xlu0 %v1388, 96
  %v1503 = vpop.permute.xlu0 %1502
  %s1505 = scalar_lea.vmem %s6, 40
  %1506 = vst.msk [vmem:[%s1505] sm:$0xff] %vm52, %v1503
  %s1507 = scalar_lea.vmem %s7, 16
  %1508 = vst.msk [vmem:[%s1507] sm:$0xff] %vm52, %v1500
  %v1509 = vld [vmem:[%s301] sm:$0xff]
  %v1510 = vld [vmem:[%s299] sm:$0xff]
  %v1511 = vld [vmem:[%s299 + $0x8] sm:$0xff]
  %v1512 = vsel %vm52, %v1503, 0
  %1514 = vmatprep.subr.mxu0 0.0
  %1515 = vmatpush1.msra.mxu0 %v25
  %1516 = vmatprep.subr.mxu0 0.0
  %1517 = vmatpush1.msra.mxu0 %v26
  %1518 = vmatprep.subr.mxu0 0.0
  %1519 = vmatpush1.msra.mxu0 %v27
  %1520 = vmatprep.subr.mxu0 0.0
  %1521 = vmatpush1.msra.mxu0 %v28
  %1522 = vmatprep.subr.mxu0 0.0
  %1523 = vmatpush1.msra.mxu0 0.0
  %1524 = vmatprep.subr.mxu0 0.0
  %1525 = vmatpush1.msra.mxu0 0.0
  %1526 = vmatprep.subr.mxu0 0.0
  %1527 = vmatpush1.msra.mxu0 0.0
  %1528 = vmatprep.subr.mxu0 0.0
  %1529 = vmatpush1.msra.mxu0 0.0
  %1530 = vmatprep.subr.mxu0 0.0
  %1531 = vmatpush1.msra.mxu0 0.0
  %1532 = vmatprep.subr.mxu0 0.0
  %1533 = vmatpush1.msra.mxu0 0.0
  %1534 = vmatprep.subr.mxu0 0.0
  %1535 = vmatpush1.msra.mxu0 0.0
  %1536 = vmatprep.subr.mxu0 0.0
  %1537 = vmatpush1.msra.mxu0 0.0
  %1538 = vmatprep.subr.mxu0 0.0
  %1539 = vmatpush1.msra.mxu0 0.0
  %1540 = vmatprep.subr.mxu0 0.0
  %1541 = vmatpush1.msra.mxu0 0.0
  %1542 = vmatprep.subr.mxu0 0.0
  %1543 = vmatpush1.msra.mxu0 0.0
  %1544 = vmatprep.subr.mxu0 0.0
  %1545 = vmatpush1.msra.mxu0 0.0
  %1546 = vmatprep.subr.mxu0 0.0
  %1547 = vmatpush1.msra.mxu0 0.0
  %1548 = vmatprep.subr.mxu0 0.0
  %1549 = vmatpush1.msra.mxu0 0.0
  %1550 = vmatprep.subr.mxu0 0.0
  %1551 = vmatpush1.msra.mxu0 0.0
  %1552 = vmatprep.subr.mxu0 0.0
  %1553 = vmatpush1.msra.mxu0 0.0
  %1554 = vmatprep.subr.mxu0 0.0
  %1555 = vmatpush1.msra.mxu0 0.0
  %1556 = vmatprep.subr.mxu0 0.0
  %1557 = vmatpush1.msra.mxu0 0.0
  %1558 = vmatprep.subr.mxu0 0.0
  %1559 = vmatpush1.msra.mxu0 0.0
  %1560 = vmatprep.subr.mxu0 0.0
  %1561 = vmatpush1.msra.mxu0 0.0
  %1562 = vmatprep.subr.mxu0 0.0
  %1563 = vmatpush1.msra.mxu0 0.0
  %1564 = vmatprep.subr.mxu0 0.0
  %1565 = vmatpush1.msra.mxu0 0.0
  %1566 = vmatprep.subr.mxu0 0.0
  %1567 = vmatpush1.msra.mxu0 0.0
  %1568 = vmatprep.subr.mxu0 0.0
  %1569 = vmatpush1.msra.mxu0 0.0
  %1570 = vmatprep.subr.mxu0 0.0
  %1571 = vmatpush1.msra.mxu0 0.0
  %1572 = vmatprep.subr.mxu0 0.0
  %1573 = vmatpush1.msra.mxu0 0.0
  %1574 = vmatprep.subr.mxu0 0.0
  %1575 = vmatpush1.msra.mxu0 0.0
  %1576 = vmatprep.subr.mxu0 0.0
  %1577 = vmatpush1.msra.mxu0 0.0
  %1578 = vmatprep.mubr.f32.mxu0 0.0
  %1579 = vmatmul.mubr.f32.gmra.mrb[0].mxu0 %v1512
  %v1580 = vpop.f32.mrb[0].mxu0
  %v1581 = vadd.f32 %v50, %v1580
  %v1582 = vpop.f32.mrb[0].mxu0
  %1583 = vdwg.mxu0
  %v1584 = vadd.f32 %v1509, %v1581
  %v1585 = vxor.u32 %v1584, 2147483648
  %v1586 = vmul.f32 %v1585, 1.442695
  %v1587 = vpow.pop %v1586
  %v1588 = vadd.f32 %v1587, 1.0
  %v1589 = vrcp.pop %v1588
  %v1590 = vmul.f32 1.0, %v1589
  %1592 = vrot.lane.b32.xlu0 %v1581, 64
  %v1593 = vpop.permute.xlu0 %1592
  %v1595 = vmul.f32 %v1590, %v1593
  %1597 = vrot.lane.b32.xlu0 %v1595, 64
  %v1598 = vpop.permute.xlu0 %1597
  %v1600 = vadd.f32 %v1509, %v1598
  %v1601 = vtanh.pop %v1600
  %v1602 = vsub.f32 1.0, %v1590
  %1604 = vrot.lane.b32.xlu0 %v1601, 96
  %v1605 = vpop.permute.xlu0 %1604
  %v1607 = vmul.f32 %v1602, %v1605
  %v1608 = vmul.f32 %v1590, %v1388
  %v1609 = vadd.f32 %v1607, %v1608
  %v1610 = vmul.f32 %v534, %v1609
  %v1611 = vmul.f32 %v541, %v1388
  %v1612 = vadd.f32 %v1610, %v1611
  %v1614 = vsel %vm52, %v1500, 0
  %1616 = vmatprep.subr.mxu0 0.0
  %1617 = vmatpush1.msra.mxu0 %v29
  %1618 = vmatprep.subr.mxu0 0.0
  %1619 = vmatpush1.msra.mxu0 %v30
  %1620 = vmatprep.subr.mxu0 0.0
  %1621 = vmatpush1.msra.mxu0 %v31
  %1622 = vmatprep.subr.mxu0 0.0
  %1623 = vmatpush1.msra.mxu0 %v32
  %1624 = vmatprep.subr.mxu0 0.0
  %1625 = vmatpush1.msra.mxu0 0.0
  %1626 = vmatprep.subr.mxu0 0.0
  %1627 = vmatpush1.msra.mxu0 0.0
  %1628 = vmatprep.subr.mxu0 0.0
  %1629 = vmatpush1.msra.mxu0 0.0
  %1630 = vmatprep.subr.mxu0 0.0
  %1631 = vmatpush1.msra.mxu0 0.0
  %1632 = vmatprep.subr.mxu0 0.0
  %1633 = vmatpush1.msra.mxu0 0.0
  %1634 = vmatprep.subr.mxu0 0.0
  %1635 = vmatpush1.msra.mxu0 0.0
  %1636 = vmatprep.subr.mxu0 0.0
  %1637 = vmatpush1.msra.mxu0 0.0
  %1638 = vmatprep.subr.mxu0 0.0
  %1639 = vmatpush1.msra.mxu0 0.0
  %1640 = vmatprep.subr.mxu0 0.0
  %1641 = vmatpush1.msra.mxu0 0.0
  %1642 = vmatprep.subr.mxu0 0.0
  %1643 = vmatpush1.msra.mxu0 0.0
  %1644 = vmatprep.subr.mxu0 0.0
  %1645 = vmatpush1.msra.mxu0 0.0
  %1646 = vmatprep.subr.mxu0 0.0
  %1647 = vmatpush1.msra.mxu0 0.0
  %1648 = vmatprep.subr.mxu0 0.0
  %1649 = vmatpush1.msra.mxu0 0.0
  %1650 = vmatprep.subr.mxu0 0.0
  %1651 = vmatpush1.msra.mxu0 0.0
  %1652 = vmatprep.subr.mxu0 0.0
  %1653 = vmatpush1.msra.mxu0 0.0
  %1654 = vmatprep.subr.mxu0 0.0
  %1655 = vmatpush1.msra.mxu0 0.0
  %1656 = vmatprep.subr.mxu0 0.0
  %1657 = vmatpush1.msra.mxu0 0.0
  %1658 = vmatprep.subr.mxu0 0.0
  %1659 = vmatpush1.msra.mxu0 0.0
  %1660 = vmatprep.subr.mxu0 0.0
  %1661 = vmatpush1.msra.mxu0 0.0
  %1662 = vmatprep.subr.mxu0 0.0
  %1663 = vmatpush1.msra.mxu0 0.0
  %1664 = vmatprep.subr.mxu0 0.0
  %1665 = vmatpush1.msra.mxu0 0.0
  %1666 = vmatprep.subr.mxu0 0.0
  %1667 = vmatpush1.msra.mxu0 0.0
  %1668 = vmatprep.subr.mxu0 0.0
  %1669 = vmatpush1.msra.mxu0 0.0
  %1670 = vmatprep.subr.mxu0 0.0
  %1671 = vmatpush1.msra.mxu0 0.0
  %1672 = vmatprep.subr.mxu0 0.0
  %1673 = vmatpush1.msra.mxu0 0.0
  %1674 = vmatprep.subr.mxu0 0.0
  %1675 = vmatpush1.msra.mxu0 0.0
  %1676 = vmatprep.subr.mxu0 0.0
  %1677 = vmatpush1.msra.mxu0 0.0
  %1678 = vmatprep.subr.mxu0 0.0
  %1679 = vmatpush1.msra.mxu0 0.0
  %1680 = vmatprep.mubr.f32.mxu0 0.0
  %1681 = vmatmul.mubr.f32.gmra.mrb[0].mxu0 %v1614
  %v1682 = vpop.f32.mrb[0].mxu0
  %v1683 = vadd.f32 %v170, %v1682
  %v1684 = vpop.f32.mrb[0].mxu0
  %1685 = vdwg.mxu0
  %1687 = vrot.lane.b32.xlu0 %v1683, 96
  %v1688 = vpop.permute.xlu0 %1687
  %v1690 = vadd.f32 %v1510, %v1688
  %v1691 = vxor.u32 %v1690, 2147483648
  %v1692 = vmul.f32 %v1691, 1.442695
  %v1693 = vpow.pop %v1692
  %v1694 = vadd.f32 %v1693, 1.0
  %v1695 = vrcp.pop %v1694
  %v1696 = vmul.f32 1.0, %v1695
  %v1697 = vadd.f32 %v1511, %v1688
  %v1698 = vxor.u32 %v1697, 2147483648
  %v1699 = vmul.f32 %v1698, 1.442695
  %v1700 = vpow.pop %v1699
  %v1701 = vadd.f32 %v1700, 1.0
  %v1702 = vrcp.pop %v1701
  %v1703 = vmul.f32 1.0, %v1702
  %1704 = vrot.lane.b32.xlu0 %v1683, 32
  %v1705 = vpop.permute.xlu0 %1704
  %v1707 = vmul.f32 %v1696, %v1705
  %1709 = vrot.lane.b32.xlu0 %v1707, 64
  %v1710 = vpop.permute.xlu0 %1709
  %v1712 = vadd.f32 %v1511, %v1710
  %v1713 = vtanh.pop %v1712
  %v1714 = vsub.f32 1.0, %v1703
  %1716 = vrot.lane.b32.xlu0 %v1713, 96
  %v1717 = vpop.permute.xlu0 %1716
  %v1719 = vmul.f32 %v1714, %v1717
  %v1720 = vmul.f32 %v1703, %v1500
  %v1721 = vadd.f32 %v1719, %v1720
  %v1722 = vmul.f32 %v411, %v1721
  %v1723 = vmul.f32 %v418, %v1500
  %v1724 = vadd.f32 %v1722, %v1723
  %1726 = vrot.lane.b32.xlu0 %v1612, 96
  %v1727 = vpop.permute.xlu0 %1726
  %s1729 = scalar_lea.vmem %s6, 48
  %1730 = vst.msk [vmem:[%s1729] sm:$0xff] %vm52, %v1727
  %s1731 = scalar_lea.vmem %s7, 8
  %1732 = vst.msk [vmem:[%s1731] sm:$0xff] %vm52, %v1724
  %v1733 = vld [vmem:[%s37] sm:$0xff]
  %v1734 = vld [vmem:[%s0] sm:$0xff]
  %v1735 = vld [vmem:[%s0 + $0x8] sm:$0xff]
  %v1736 = vsel %vm52, %v1727, 0
  %1738 = vmatprep.subr.mxu0 0.0
  %1739 = vmatpush1.msra.mxu0 %v25
  %1740 = vmatprep.subr.mxu0 0.0
  %1741 = vmatpush1.msra.mxu0 %v26
  %1742 = vmatprep.subr.mxu0 0.0
  %1743 = vmatpush1.msra.mxu0 %v27
  %1744 = vmatprep.subr.mxu0 0.0
  %1745 = vmatpush1.msra.mxu0 %v28
  %1746 = vmatprep.subr.mxu0 0.0
  %1747 = vmatpush1.msra.mxu0 0.0
  %1748 = vmatprep.subr.mxu0 0.0
  %1749 = vmatpush1.msra.mxu0 0.0
  %1750 = vmatprep.subr.mxu0 0.0
  %1751 = vmatpush1.msra.mxu0 0.0
  %1752 = vmatprep.subr.mxu0 0.0
  %1753 = vmatpush1.msra.mxu0 0.0
  %1754 = vmatprep.subr.mxu0 0.0
  %1755 = vmatpush1.msra.mxu0 0.0
  %1756 = vmatprep.subr.mxu0 0.0
  %1757 = vmatpush1.msra.mxu0 0.0
  %1758 = vmatprep.subr.mxu0 0.0
  %1759 = vmatpush1.msra.mxu0 0.0
  %1760 = vmatprep.subr.mxu0 0.0
  %1761 = vmatpush1.msra.mxu0 0.0
  %1762 = vmatprep.subr.mxu0 0.0
  %1763 = vmatpush1.msra.mxu0 0.0
  %1764 = vmatprep.subr.mxu0 0.0
  %1765 = vmatpush1.msra.mxu0 0.0
  %1766 = vmatprep.subr.mxu0 0.0
  %1767 = vmatpush1.msra.mxu0 0.0
  %1768 = vmatprep.subr.mxu0 0.0
  %1769 = vmatpush1.msra.mxu0 0.0
  %1770 = vmatprep.subr.mxu0 0.0
  %1771 = vmatpush1.msra.mxu0 0.0
  %1772 = vmatprep.subr.mxu0 0.0
  %1773 = vmatpush1.msra.mxu0 0.0
  %1774 = vmatprep.subr.mxu0 0.0
  %1775 = vmatpush1.msra.mxu0 0.0
  %1776 = vmatprep.subr.mxu0 0.0
  %1777 = vmatpush1.msra.mxu0 0.0
  %1778 = vmatprep.subr.mxu0 0.0
  %1779 = vmatpush1.msra.mxu0 0.0
  %1780 = vmatprep.subr.mxu0 0.0
  %1781 = vmatpush1.msra.mxu0 0.0
  %1782 = vmatprep.subr.mxu0 0.0
  %1783 = vmatpush1.msra.mxu0 0.0
  %1784 = vmatprep.subr.mxu0 0.0
  %1785 = vmatpush1.msra.mxu0 0.0
  %1786 = vmatprep.subr.mxu0 0.0
  %1787 = vmatpush1.msra.mxu0 0.0
  %1788 = vmatprep.subr.mxu0 0.0
  %1789 = vmatpush1.msra.mxu0 0.0
  %1790 = vmatprep.subr.mxu0 0.0
  %1791 = vmatpush1.msra.mxu0 0.0
  %1792 = vmatprep.subr.mxu0 0.0
  %1793 = vmatpush1.msra.mxu0 0.0
  %1794 = vmatprep.subr.mxu0 0.0
  %1795 = vmatpush1.msra.mxu0 0.0
  %1796 = vmatprep.subr.mxu0 0.0
  %1797 = vmatpush1.msra.mxu0 0.0
  %1798 = vmatprep.subr.mxu0 0.0
  %1799 = vmatpush1.msra.mxu0 0.0
  %1800 = vmatprep.subr.mxu0 0.0
  %1801 = vmatpush1.msra.mxu0 0.0
  %1802 = vmatprep.mubr.f32.mxu0 0.0
  %1803 = vmatmul.mubr.f32.gmra.mrb[0].mxu0 %v1736
  %v1804 = vpop.f32.mrb[0].mxu0
  %v1805 = vadd.f32 %v50, %v1804
  %v1806 = vpop.f32.mrb[0].mxu0
  %1807 = vdwg.mxu0
  %v1808 = vadd.f32 %v1733, %v1805
  %v1809 = vxor.u32 %v1808, 2147483648
  %v1810 = vmul.f32 %v1809, 1.442695
  %v1811 = vpow.pop %v1810
  %v1812 = vadd.f32 %v1811, 1.0
  %v1813 = vrcp.pop %v1812
  %v1814 = vmul.f32 1.0, %v1813
  %1816 = vrot.lane.b32.xlu0 %v1805, 64
  %v1817 = vpop.permute.xlu0 %1816
  %v1819 = vmul.f32 %v1814, %v1817
  %1821 = vrot.lane.b32.xlu0 %v1819, 64
  %v1822 = vpop.permute.xlu0 %1821
  %v1824 = vadd.f32 %v1733, %v1822
  %v1825 = vtanh.pop %v1824
  %v1826 = vsub.f32 1.0, %v1814
  %1828 = vrot.lane.b32.xlu0 %v1825, 96
  %v1829 = vpop.permute.xlu0 %1828
  %v1831 = vmul.f32 %v1826, %v1829
  %v1832 = vmul.f32 %v1814, %v1612
  %v1833 = vadd.f32 %v1831, %v1832
  %v1834 = vmul.f32 %v281, %v1833
  %v1835 = vmul.f32 %v288, %v1612
  %v1836 = vadd.f32 %v1834, %v1835
  %v1838 = vsel %vm52, %v1724, 0
  %1840 = vmatprep.subr.mxu0 0.0
  %1841 = vmatpush1.msra.mxu0 %v29
  %1842 = vmatprep.subr.mxu0 0.0
  %1843 = vmatpush1.msra.mxu0 %v30
  %1844 = vmatprep.subr.mxu0 0.0
  %1845 = vmatpush1.msra.mxu0 %v31
  %1846 = vmatprep.subr.mxu0 0.0
  %1847 = vmatpush1.msra.mxu0 %v32
  %1848 = vmatprep.subr.mxu0 0.0
  %1849 = vmatpush1.msra.mxu0 0.0
  %1850 = vmatprep.subr.mxu0 0.0
  %1851 = vmatpush1.msra.mxu0 0.0
  %1852 = vmatprep.subr.mxu0 0.0
  %1853 = vmatpush1.msra.mxu0 0.0
  %1854 = vmatprep.subr.mxu0 0.0
  %1855 = vmatpush1.msra.mxu0 0.0
  %1856 = vmatprep.subr.mxu0 0.0
  %1857 = vmatpush1.msra.mxu0 0.0
  %1858 = vmatprep.subr.mxu0 0.0
  %1859 = vmatpush1.msra.mxu0 0.0
  %1860 = vmatprep.subr.mxu0 0.0
  %1861 = vmatpush1.msra.mxu0 0.0
  %1862 = vmatprep.subr.mxu0 0.0
  %1863 = vmatpush1.msra.mxu0 0.0
  %1864 = vmatprep.subr.mxu0 0.0
  %1865 = vmatpush1.msra.mxu0 0.0
  %1866 = vmatprep.subr.mxu0 0.0
  %1867 = vmatpush1.msra.mxu0 0.0
  %1868 = vmatprep.subr.mxu0 0.0
  %1869 = vmatpush1.msra.mxu0 0.0
  %1870 = vmatprep.subr.mxu0 0.0
  %1871 = vmatpush1.msra.mxu0 0.0
  %1872 = vmatprep.subr.mxu0 0.0
  %1873 = vmatpush1.msra.mxu0 0.0
  %1874 = vmatprep.subr.mxu0 0.0
  %1875 = vmatpush1.msra.mxu0 0.0
  %1876 = vmatprep.subr.mxu0 0.0
  %1877 = vmatpush1.msra.mxu0 0.0
  %1878 = vmatprep.subr.mxu0 0.0
  %1879 = vmatpush1.msra.mxu0 0.0
  %1880 = vmatprep.subr.mxu0 0.0
  %1881 = vmatpush1.msra.mxu0 0.0
  %1882 = vmatprep.subr.mxu0 0.0
  %1883 = vmatpush1.msra.mxu0 0.0
  %1884 = vmatprep.subr.mxu0 0.0
  %1885 = vmatpush1.msra.mxu0 0.0
  %1886 = vmatprep.subr.mxu0 0.0
  %1887 = vmatpush1.msra.mxu0 0.0
  %1888 = vmatprep.subr.mxu0 0.0
  %1889 = vmatpush1.msra.mxu0 0.0
  %1890 = vmatprep.subr.mxu0 0.0
  %1891 = vmatpush1.msra.mxu0 0.0
  %1892 = vmatprep.subr.mxu0 0.0
  %1893 = vmatpush1.msra.mxu0 0.0
  %1894 = vmatprep.subr.mxu0 0.0
  %1895 = vmatpush1.msra.mxu0 0.0
  %1896 = vmatprep.subr.mxu0 0.0
  %1897 = vmatpush1.msra.mxu0 0.0
  %1898 = vmatprep.subr.mxu0 0.0
  %1899 = vmatpush1.msra.mxu0 0.0
  %1900 = vmatprep.subr.mxu0 0.0
  %1901 = vmatpush1.msra.mxu0 0.0
  %1902 = vmatprep.subr.mxu0 0.0
  %1903 = vmatpush1.msra.mxu0 0.0
  %1904 = vmatprep.mubr.f32.mxu0 0.0
  %1905 = vmatmul.mubr.f32.gmra.mrb[0].mxu0 %v1838
  %v1906 = vpop.f32.mrb[0].mxu0
  %v1907 = vadd.f32 %v170, %v1906
  %v1908 = vpop.f32.mrb[0].mxu0
  %1909 = vdwg.mxu0
  %1911 = vrot.lane.b32.xlu0 %v1907, 96
  %v1912 = vpop.permute.xlu0 %1911
  %v1914 = vadd.f32 %v1734, %v1912
  %v1915 = vxor.u32 %v1914, 2147483648
  %v1916 = vmul.f32 %v1915, 1.442695
  %v1917 = vpow.pop %v1916
  %v1918 = vadd.f32 %v1917, 1.0
  %v1919 = vrcp.pop %v1918
  %v1920 = vmul.f32 1.0, %v1919
  %v1921 = vadd.f32 %v1735, %v1912
  %v1922 = vxor.u32 %v1921, 2147483648
  %v1923 = vmul.f32 %v1922, 1.442695
  %v1924 = vpow.pop %v1923
  %v1925 = vadd.f32 %v1924, 1.0
  %v1926 = vrcp.pop %v1925
  %v1927 = vmul.f32 1.0, %v1926
  %1928 = vrot.lane.b32.xlu0 %v1907, 32
  %v1929 = vpop.permute.xlu0 %1928
  %v1931 = vmul.f32 %v1920, %v1929
  %1933 = vrot.lane.b32.xlu0 %v1931, 64
  %v1934 = vpop.permute.xlu0 %1933
  %v1936 = vadd.f32 %v1735, %v1934
  %v1937 = vtanh.pop %v1936
  %v1938 = vsub.f32 1.0, %v1927
  %1940 = vrot.lane.b32.xlu0 %v1937, 96
  %v1941 = vpop.permute.xlu0 %1940
  %v1943 = vmul.f32 %v1938, %v1941
  %v1944 = vmul.f32 %v1927, %v1724
  %v1945 = vadd.f32 %v1943, %v1944
  %v1946 = vmul.f32 %v155, %v1945
  %v1947 = vmul.f32 %v162, %v1724
  %v1948 = vadd.f32 %v1946, %v1947
  %1950 = vrot.lane.b32.xlu0 %v1836, 96
  %v1951 = vpop.permute.xlu0 %1950
  %s1953 = scalar_lea.vmem %s6, 56
  %1954 = vst.msk [vmem:[%s1953] sm:$0xff] %vm52, %v1951
  %1955 = vst.msk [vmem:[%s7] sm:$0xff] %vm52, %v1948
  // Predicated region
  $region26: #{dac_forward.5} parent=0 // pred_check
    _
  $region27: #{dac_forward.5} parent=0 // pred_check_branch
    %1957 = sbr.rel (0) target = $region29
  $region28: #{dac_forward.5} parent=0 // pred_region
    _
  $region29: #{dac_forward.5} parent=0 // pred_fallthru
    _
  // Predicated region
  $region30: #{dac_forward.5} parent=0 // pred_check
    _
  $region31: #{dac_forward.5} parent=0 // pred_check_branch
    %1959 = sbr.rel (0) target = $region33
  $region32: #{dac_forward.5} parent=0 // pred_region
    _
  $region33: #{dac_forward.5} parent=0 // pred_fallthru
    _
  // Predicated region
  $region34: #{dac_forward.5} parent=0 // pred_check
    _
  $region35: #{dac_forward.5} parent=0 // pred_check_branch
    %1961 = sbr.rel (0) target = $region37
  $region36: #{dac_forward.5} parent=0 // pred_region
    _
  $region37: #{dac_forward.5} parent=0 // pred_fallthru
    _
  // Predicated region
  $region38: #{dac_forward.5} parent=0 // pred_check
    _
  $region39: #{dac_forward.5} parent=0 // pred_check_branch
    %1963 = sbr.rel (0) target = $region41
  $region40: #{dac_forward.5} parent=0 // pred_region
    _
  $region41: #{dac_forward.5} parent=0 // pred_fallthru
    _

</llo_original>
